<compile_context>
chip_gen: v5e
topology: v5e:2x2
jax: 0.10.0
libtpu: 0.0.40
codegen_flags: <defaults>
</compile_context>

<pallas_src>
import functools
import math

import jax
import jax.numpy as jnp
from jax.experimental import pallas as pl
from jax.experimental.pallas import tpu as pltpu

NEG_SLOPE = 0.01          # nn.LeakyReLU default negative_slope
NUM_CLASSES = 10
BN_EPS = 1e-5


# ---------------------------------------------------------------------------
# Fused whole-network kernel (one image per grid step)
# ---------------------------------------------------------------------------
def _cnn_fused_kernel(x_ref, w1_ref, b1_ref, w2_ref, b2_ref,
                      wf1_ref, bf1_ref, bns_ref, bnt_ref, wf2_ref, bf2_ref,
                      o_ref, *, D1, H1, half1, S2, half2):
    """One image per grid step.

    x_ref  : (1, D1, H1, W1*Cin)      f32   (width & channels folded into lanes)
    w1_ref : (9*W1*Cin, 2*half1)      bf16  conv1, (kd,kh,kw) folded into K,
                                            columns [even ow | odd ow], width-padded
    b1_ref : (1, half1)               f32   conv1 bias tiled over (padded) pooled width
    w2_ref : (9*half1, 2*half2)       bf16  conv2 (analogous)
    b2_ref : (1, half2)               f32
    wf1_ref: (Dp2*Hp2, half2, 128)    bf16  fc1 weight, rows permuted to (d,h,w,c)
    bf1_ref, bns_ref, bnt_ref         f32   fc1 bias, folded BN scale/shift (1,128)
    wf2_ref: (128, 128)               bf16  fc2 weight, N padded 10->128
    bf2_ref: (1, 128)                 f32
    o_ref  : (1, 1, 128)              f32   padded logits row
    """
    Do1, Ho1 = D1 - 2, H1 - 2
    Do2 = Ho2 = S2 - 2

    def lrelu(v):
        return jnp.where(v >= 0.0, v, NEG_SLOPE * v)

    def conv_pool(lhs_f32, w_ref, bias, Do, Ho, half):
        """One matmul + fused MaxPool3d(2,2,2) + bias + LeakyReLU.

        lhs_f32: (Do*Ho, K) f32, rows od-major / oh-minor.
        Returns (Dp*Hp, half) f32, rows dp-major / hp-minor, lanes = wp*Cout+cout.
        """
        r = jnp.dot(lhs_f32.astype(jnp.bfloat16), w_ref[...],
                    preferred_element_type=jnp.float32)            # (Do*Ho, 2*half)
        r = jnp.maximum(r[:, :half], r[:, half:])                   # width pool
        Dp, Hp = Do // 2, Ho // 2
        rows = []
        for dp in range(Dp):                                        # depth pool
            m = jnp.maximum(r[(2 * dp) * Ho:(2 * dp + 1) * Ho, :],
                            r[(2 * dp + 1) * Ho:(2 * dp + 2) * Ho, :])
            for hp in range(Hp):                                    # height pool
                rows.append(jnp.maximum(m[2 * hp:2 * hp + 1, :],
                                        m[2 * hp + 1:2 * hp + 2, :]))
        p = jnp.concatenate(rows, axis=0)                           # (Dp*Hp, half)
        return lrelu(p + bias)                                      # bias & LeakyReLU commute with max

    # ---- conv1 + LeakyReLU + MaxPool -------------------------------------
    # kh-folded planes: planes[d][oh, kh*WC + l] = x[d, oh+kh, l]
    planes = [
        jnp.concatenate([x_ref[0, d, kh:kh + Ho1, :] for kh in range(3)], axis=1)
        for d in range(D1)
    ]
    # LHS rows (od, oh); columns (kd, kh, w, cin)  -> single MXU matmul
    lhs1 = jnp.concatenate(
        [jnp.concatenate([planes[od + kd] for kd in range(3)], axis=1)
         for od in range(Do1)], axis=0)                             # (Do1*Ho1, 9*W*Cin)
    p1 = conv_pool(lhs1, w1_ref, b1_ref[...], Do1, Ho1, half1)      # (S2*S2, half1)

    # ---- conv2 + LeakyReLU + MaxPool -------------------------------------
    # p1 row = d2*S2 + h2 ; lane = w2(padded)*Cout1 + c1
    blocks = []
    for od in range(Do2):
        pieces = []
        for kd in range(3):
            base = (od + kd) * S2
            for kh in range(3):
                pieces.append(p1[base + kh:base + kh + Ho2, :])     # (Ho2, half1)
        blocks.append(jnp.concatenate(pieces, axis=1))              # (Ho2, 9*half1)
    lhs2 = jnp.concatenate(blocks, axis=0)                          # (Do2*Ho2, 9*half1)
    p2 = conv_pool(lhs2, w2_ref, b2_ref[...], Do2, Ho2, half2)      # (Dp2*Hp2, half2)

    # ---- fc1 + LeakyReLU + BatchNorm1d(eval) + Dropout(identity) + fc2 ----
    h = bf1_ref[...]                                                # (1, 128) f32
    for r in range(p2.shape[0]):                                    # block-wise flatten @ fc1
        h = h + jnp.dot(p2[r:r + 1, :].astype(jnp.bfloat16), wf1_ref[r],
                        preferred_element_type=jnp.float32)
    h = lrelu(h)
    h = h * bns_ref[...] + bnt_ref[...]                             # BatchNorm1d (eval, folded)
    # TODO(synk): Dropout(p=0.15) and batch-statistics BatchNorm are training-mode
    # ops; this kernel implements eval-mode (identity / running-stats) semantics.
    o = jnp.dot(h.astype(jnp.bfloat16), wf2_ref[...],
                preferred_element_type=jnp.float32) + bf2_ref[...]
    o_ref[0] = o.astype(o_ref.dtype)


def _cnn_fused_call(x, prep):
    """x: (B, D, H, W*Cin) f32 -> (B, 1, 128) f32 (padded logits)."""
    B, D, H, WC = x.shape
    w1c, b1c = prep["conv1_w"], prep["conv1_b"]
    w2c, b2c = prep["conv2_w"], prep["conv2_b"]
    wf1, bf1 = prep["fc1_w"], prep["fc1_b"]
    bns, bnt = prep["bn_scale"], prep["bn_shift"]
    wf2, bf2 = prep["fc2_w"], prep["fc2_b"]
    half1, half2 = b1c.shape[1], b2c.shape[1]
    S2 = (D - 2) // 2
    NOUT = wf2.shape[1]

    kernel = functools.partial(_cnn_fused_kernel, D1=D, H1=H, half1=half1,
                               S2=S2, half2=half2)

    flops = B * (2 * (D - 2) * (H - 2) * w1c.shape[0] * w1c.shape[1]
                 + 2 * (S2 - 2) * (S2 - 2) * w2c.shape[0] * w2c.shape[1]
                 + 2 * wf1.shape[0] * wf1.shape[1] * wf1.shape[2]
                 + 2 * wf2.shape[0] * wf2.shape[1])
    bytes_accessed = (x.size * x.dtype.itemsize
                      + sum(a.size * a.dtype.itemsize for a in
                            (w1c, b1c, w2c, b2c, wf1, bf1, bns, bnt, wf2, bf2))
                      + B * NOUT * 4)

    def full(a):      # whole-array block, loaded once (constant index_map)
        return pl.BlockSpec(a.shape, lambda b, _n=a.ndim: (0,) * _n)

    return pl.pallas_call(
        kernel,
        out_shape=jax.ShapeDtypeStruct((B, 1, NOUT), jnp.float32),
        grid=(B,),
        in_specs=[
            pl.BlockSpec((1, D, H, WC), lambda b: (b, 0, 0, 0)),
            full(w1c), full(b1c), full(w2c), full(b2c),
            full(wf1), full(bf1), full(bns), full(bnt), full(wf2), full(bf2),
        ],
        out_specs=pl.BlockSpec((1, 1, NOUT), lambda b: (b, 0, 0)),
        compiler_params=pltpu.CompilerParams(dimension_semantics=("parallel",)),
        cost_estimate=pl.CostEstimate(flops=flops, transcendentals=0,
                                      bytes_accessed=bytes_accessed),
    )(x, w1c, b1c, w2c, b2c, wf1, bf1, bns, bnt, wf2, bf2)


# ---------------------------------------------------------------------------
# Parameters (deterministic init, PyTorch-default-style uniform bounds)
# ---------------------------------------------------------------------------
def init_params(key):
    ks = jax.random.split(key, 8)

    def u(k, shape, fan_in):
        bound = 1.0 / jnp.sqrt(float(fan_in))
        return jax.random.uniform(k, shape, jnp.float32, -bound, bound)

    p = {}
    p["conv1_w"] = u(ks[0], (32, 3, 3, 3, 3), 3 * 27)        # torch (Cout,Cin,3,3,3)
    p["conv1_b"] = u(ks[1], (32,), 3 * 27)
    p["conv2_w"] = u(ks[2], (64, 32, 3, 3, 3), 32 * 27)
    p["conv2_b"] = u(ks[3], (64,), 32 * 27)
    p["fc1_w"] = u(ks[4], (2 ** 3 * 64, 128), 2 ** 3 * 64)   # (512,128), torch row order
    p["fc1_b"] = u(ks[5], (128,), 2 ** 3 * 64)
    p["fc2_w"] = u(ks[6], (128, NUM_CLASSES), 128)
    p["fc2_b"] = u(ks[7], (NUM_CLASSES,), 128)
    # BatchNorm1d(128): default affine params + running stats (eval mode)
    p["bn_gamma"] = jnp.ones((128,), jnp.float32)
    p["bn_beta"] = jnp.zeros((128,), jnp.float32)
    p["bn_mean"] = jnp.zeros((128,), jnp.float32)
    p["bn_var"] = jnp.ones((128,), jnp.float32)
    return p


def fold_conv_weight(w, *, w_real, w_pad, wp_out):
    """torch Conv3d weight (Cout,Cin,3,3,3) -> (9*w_pad*Cin, 2*wp_out*Cout).

    All three kernel taps are folded into the contraction (K ordered
    (kd,kh,w,cin)); output columns are ordered [even ow | odd ow] so the
    width max-pool is a max of two contiguous, lane-aligned halves, and the
    pooled width is zero-padded to wp_out for 128-lane alignment.
    """
    cout, cin = int(w.shape[0]), int(w.shape[1])
    wo = w_real - 2
    assert wo % 2 == 0, "MaxPool3d floor mode: odd conv output width unsupported"
    wp = wo // 2
    assert wp <= wp_out
    wt = jnp.transpose(w, (2, 3, 4, 1, 0)).astype(jnp.float32)       # (kd,kh,kw,cin,cout)
    wi = jnp.arange(w_pad)
    ow = jnp.arange(wo)
    kw = jnp.arange(3)
    ind = (wi[:, None, None] == (ow[None, None, :] + kw[None, :, None])
           ).astype(jnp.float32)                                      # (w_pad, kw, ow)
    big = jnp.einsum('wxo,dhxcf->dhwcof', ind, wt)                    # (3,3,w_pad,cin,wo,cout)
    big = big.reshape(9 * w_pad * cin, wo, cout)
    out = jnp.zeros((9 * w_pad * cin, 2, wp_out, cout), jnp.float32)
    out = out.at[:, 0, :wp, :].set(big[:, 0::2, :])                   # even ow
    out = out.at[:, 1, :wp, :].set(big[:, 1::2, :])                   # odd ow
    return out.reshape(9 * w_pad * cin, 2 * wp_out * cout)


def tile_bias(b, wp_real, wp_out):
    cout = int(b.shape[0])
    t = jnp.zeros((wp_out, cout), jnp.float32)
    t = t.at[:wp_real].set(jnp.broadcast_to(b.astype(jnp.float32)[None, :],
                                            (wp_real, cout)))
    return t.reshape(1, wp_out * cout)


def prepare_params(p, *, spatial=14):
    """One-time folding of weights into the layouts the fused kernel consumes."""
    s1 = spatial                 # conv1 input spatial size
    s2 = (s1 - 2) // 2           # conv2 input spatial size (after pool1)
    s3 = (s2 - 2) // 2           # spatial after pool2
    c1 = int(p["conv1_w"].shape[0])
    c2 = int(p["conv2_w"].shape[0])
    nf = int(p["fc1_w"].shape[1])
    assert s3 ** 3 * c2 == p["fc1_w"].shape[0], "fc1 expects spatial=14 input"

    def pad_wp(wp, cout):        # pad pooled width so wp*cout is 128-lane aligned
        m = 128 // math.gcd(cout, 128)
        return -(-wp // m) * m

    wp1, wp2 = (s1 - 2) // 2, (s2 - 2) // 2
    wp1p = pad_wp(wp1, c1)       # 6 -> 8  (half1 = 256, lane-dense split/pool)
    # conv2's pooled output is not padded: it feeds the fc flatten directly.

    prep = {}
    prep["conv1_w"] = fold_conv_weight(p["conv1_w"], w_real=s1, w_pad=s1,
                                       wp_out=wp1p).astype(jnp.bfloat16)
    prep["conv1_b"] = tile_bias(p["conv1_b"], wp1, wp1p)
    prep["conv2_w"] = fold_conv_weight(p["conv2_w"], w_real=s2, w_pad=wp1p,
                                       wp_out=wp2).astype(jnp.bfloat16)
    prep["conv2_b"] = tile_bias(p["conv2_b"], wp2, wp2)

    # fc1: kernel activations arrive flattened in (d, h, w, c) order; PyTorch's
    # out.view(B,-1) flattens NCDHW (c,d,h,w) -> permute weight rows once, and
    # split into (d*h)-indexed row blocks matching the pooled activation rows.
    w1 = p["fc1_w"].reshape(c2, s3, s3, s3, nf)
    w1 = jnp.transpose(w1, (1, 2, 3, 0, 4)).reshape(s3 ** 3 * c2, nf)
    prep["fc1_w"] = w1.reshape(s3 * s3, s3 * c2, nf).astype(jnp.bfloat16)
    prep["fc1_b"] = p["fc1_b"].reshape(1, -1).astype(jnp.float32)

    # BatchNorm1d (eval mode): fold running stats into scale/shift.
    scale = p["bn_gamma"] / jnp.sqrt(p["bn_var"] + BN_EPS)
    shift = p["bn_beta"] - p["bn_mean"] * scale
    prep["bn_scale"] = scale.reshape(1, -1).astype(jnp.float32)
    prep["bn_shift"] = shift.reshape(1, -1).astype(jnp.float32)

    # fc2: pad N 10 -> 128 so the output store is lane-dense; slice outside.
    n_pad = 128
    w2 = jnp.zeros((nf, n_pad), jnp.float32).at[:, :NUM_CLASSES].set(p["fc2_w"])
    b2 = jnp.zeros((n_pad,), jnp.float32).at[:NUM_CLASSES].set(p["fc2_b"])
    prep["fc2_w"] = w2.astype(jnp.bfloat16)
    prep["fc2_b"] = b2.reshape(1, -1)
    return prep


# ---------------------------------------------------------------------------
# Forward pass (mirrors CNNModel.forward, eval-mode semantics)
# ---------------------------------------------------------------------------
def cnn_forward(prep, x_ncdhw):
    B, Cin, D, H, W = x_ncdhw.shape
    # NCDHW -> NDHWC, then fold (W, C) into the lane dimension (free reshape).
    x = jnp.transpose(x_ncdhw, (0, 2, 3, 4, 1)).astype(jnp.float32)
    x = x.reshape(B, D, H, W * Cin)
    out = _cnn_fused_call(x, prep)                 # (B, 1, 128) padded logits
    return out.reshape(B, -1)[:, :NUM_CLASSES]     # (B, 10)


# ---------------------------------------------------------------------------
# Pure-JAX reference (same math, standard XLA ops) for a sanity check
# ---------------------------------------------------------------------------
def reference_forward(p, x):
    def lrelu(v):
        return jnp.where(v >= 0.0, v, NEG_SLOPE * v)

    def conv3d(v, w, b):
        out = jax.lax.conv_general_dilated(
            v, w, window_strides=(1, 1, 1), padding="VALID",
            dimension_numbers=("NCDHW", "OIDHW", "NCDHW"))
        return out + b[None, :, None, None, None]

    def pool(v):
        return jax.lax.reduce_window(v, -jnp.inf, jax.lax.max,
                                     (1, 1, 2, 2, 2), (1, 1, 2, 2, 2), "VALID")

    y = pool(lrelu(conv3d(x, p["conv1_w"], p["conv1_b"])))
    y = pool(lrelu(conv3d(y, p["conv2_w"], p["conv2_b"])))
    y = y.reshape(y.shape[0], -1)
    y = lrelu(y @ p["fc1_w"] + p["fc1_b"])
    scale = p["bn_gamma"] / jnp.sqrt(p["bn_var"] + BN_EPS)
    y = (y - p["bn_mean"]) * scale + p["bn_beta"]
    return y @ p["fc2_w"] + p["fc2_b"]


# ---------------------------------------------------------------------------
if __name__ == "__main__":
    key = jax.random.PRNGKey(0)
    k_params, k_x = jax.random.split(key)

    params = init_params(k_params)
    prep = prepare_params(params, spatial=14)
    # fc1 expects 2**3 * 64 features -> input spatial must be 14:
    # ((14-2)//2 - 2)//2 = 2 per dim.  Input is PyTorch-style NCDHW.
    x = jax.random.normal(k_x, (2, 3, 14, 14, 14), dtype=jnp.float32)

    fwd = jax.jit(cnn_forward)
    logits = jax.block_until_ready(fwd(prep, x))

    assert logits.shape == (2, NUM_CLASSES), logits.shape
    assert bool(jnp.all(jnp.isfinite(logits)))

    ref = jax.block_until_ready(jax.jit(reference_forward)(params, x))
    max_err = float(jnp.max(jnp.abs(logits - ref)))
    assert max_err < 5e-2, f"kernel/reference mismatch: max abs err {max_err}"

    print("KERNEL_OK")
</pallas_src>

<mosaic_0001>
module attributes {stable_mosaic.version = 11 : i64} {
  func.func @_cnn_fused_kernel(%arg0: i32, %arg1: memref<1x14x14x42xf32, #tpu.memory_space<vmem>>, %arg2: memref<378x512xbf16, #tpu.memory_space<vmem>>, %arg3: memref<1x256xf32, #tpu.memory_space<vmem>>, %arg4: memref<2304x256xbf16, #tpu.memory_space<vmem>>, %arg5: memref<1x128xf32, #tpu.memory_space<vmem>>, %arg6: memref<4x128x128xbf16, #tpu.memory_space<vmem>>, %arg7: memref<1x128xf32, #tpu.memory_space<vmem>>, %arg8: memref<1x128xf32, #tpu.memory_space<vmem>>, %arg9: memref<1x128xf32, #tpu.memory_space<vmem>>, %arg10: memref<128x128xbf16, #tpu.memory_space<vmem>>, %arg11: memref<1x128xf32, #tpu.memory_space<vmem>>, %arg12: memref<1x1x128xf32, #tpu.memory_space<vmem>>) attributes {dimension_semantics = [#tpu.dimension_semantics<parallel>], iteration_bounds = array<i64: 2>, scalar_prefetch = 0 : i64, scratch_operands = 0 : i64, tpu.core_type = #tpu.core_type<tc>, window_params = [{transform_indices = @transform_0, window_bounds = array<i64: 1, 14, 14, 42>}, {pipeline_mode = #tpu.pipeline_mode<synchronous>, transform_indices = @transform_1, window_bounds = array<i64: 378, 512>}, {pipeline_mode = #tpu.pipeline_mode<synchronous>, transform_indices = @transform_2, window_bounds = array<i64: 1, 256>}, {pipeline_mode = #tpu.pipeline_mode<synchronous>, transform_indices = @transform_3, window_bounds = array<i64: 2304, 256>}, {pipeline_mode = #tpu.pipeline_mode<synchronous>, transform_indices = @transform_4, window_bounds = array<i64: 1, 128>}, {pipeline_mode = #tpu.pipeline_mode<synchronous>, transform_indices = @transform_5, window_bounds = array<i64: 4, 128, 128>}, {pipeline_mode = #tpu.pipeline_mode<synchronous>, transform_indices = @transform_6, window_bounds = array<i64: 1, 128>}, {pipeline_mode = #tpu.pipeline_mode<synchronous>, transform_indices = @transform_7, window_bounds = array<i64: 1, 128>}, {pipeline_mode = #tpu.pipeline_mode<synchronous>, transform_indices = @transform_8, window_bounds = array<i64: 1, 128>}, {pipeline_mode = #tpu.pipeline_mode<synchronous>, transform_indices = @transform_9, window_bounds = array<i64: 128, 128>}, {pipeline_mode = #tpu.pipeline_mode<synchronous>, transform_indices = @transform_10, window_bounds = array<i64: 1, 128>}, {transform_indices = @transform_11, window_bounds = array<i64: 1, 1, 128>}]} {
    %c0 = arith.constant 0 : index
    %c0_0 = arith.constant 0 : index
    %c0_1 = arith.constant 0 : index
    %c0_2 = arith.constant 0 : index
    %0 = vector.load %arg1[%c0, %c0_0, %c0_1, %c0_2] : memref<1x14x14x42xf32, #tpu.memory_space<vmem>>, vector<1x1x12x42xf32>
    %1 = vector.shape_cast %0 : vector<1x1x12x42xf32> to vector<12x42xf32>
    %c0_3 = arith.constant 0 : index
    %c0_4 = arith.constant 0 : index
    %c1 = arith.constant 1 : index
    %c0_5 = arith.constant 0 : index
    %2 = vector.load %arg1[%c0_3, %c0_4, %c1, %c0_5] : memref<1x14x14x42xf32, #tpu.memory_space<vmem>>, vector<1x1x12x42xf32>
    %3 = vector.shape_cast %2 : vector<1x1x12x42xf32> to vector<12x42xf32>
    %c0_6 = arith.constant 0 : index
    %c0_7 = arith.constant 0 : index
    %c2 = arith.constant 2 : index
    %c0_8 = arith.constant 0 : index
    %4 = vector.load %arg1[%c0_6, %c0_7, %c2, %c0_8] : memref<1x14x14x42xf32, #tpu.memory_space<vmem>>, vector<1x1x12x42xf32>
    %5 = vector.shape_cast %4 : vector<1x1x12x42xf32> to vector<12x42xf32>
    %6 = tpu.concatenate %1, %3, %5 in 1 : vector<12x42xf32>, vector<12x42xf32>, vector<12x42xf32> -> vector<12x126xf32>
    %c0_9 = arith.constant 0 : index
    %c1_10 = arith.constant 1 : index
    %c0_11 = arith.constant 0 : index
    %c0_12 = arith.constant 0 : index
    %7 = vector.load %arg1[%c0_9, %c1_10, %c0_11, %c0_12] : memref<1x14x14x42xf32, #tpu.memory_space<vmem>>, vector<1x1x12x42xf32>
    %8 = vector.shape_cast %7 : vector<1x1x12x42xf32> to vector<12x42xf32>
    %c0_13 = arith.constant 0 : index
    %c1_14 = arith.constant 1 : index
    %c1_15 = arith.constant 1 : index
    %c0_16 = arith.constant 0 : index
    %9 = vector.load %arg1[%c0_13, %c1_14, %c1_15, %c0_16] : memref<1x14x14x42xf32, #tpu.memory_space<vmem>>, vector<1x1x12x42xf32>
    %10 = vector.shape_cast %9 : vector<1x1x12x42xf32> to vector<12x42xf32>
    %c0_17 = arith.constant 0 : index
    %c1_18 = arith.constant 1 : index
    %c2_19 = arith.constant 2 : index
    %c0_20 = arith.constant 0 : index
    %11 = vector.load %arg1[%c0_17, %c1_18, %c2_19, %c0_20] : memref<1x14x14x42xf32, #tpu.memory_space<vmem>>, vector<1x1x12x42xf32>
    %12 = vector.shape_cast %11 : vector<1x1x12x42xf32> to vector<12x42xf32>
    %13 = tpu.concatenate %8, %10, %12 in 1 : vector<12x42xf32>, vector<12x42xf32>, vector<12x42xf32> -> vector<12x126xf32>
    %c0_21 = arith.constant 0 : index
    %c2_22 = arith.constant 2 : index
    %c0_23 = arith.constant 0 : index
    %c0_24 = arith.constant 0 : index
    %14 = vector.load %arg1[%c0_21, %c2_22, %c0_23, %c0_24] : memref<1x14x14x42xf32, #tpu.memory_space<vmem>>, vector<1x1x12x42xf32>
    %15 = vector.shape_cast %14 : vector<1x1x12x42xf32> to vector<12x42xf32>
    %c0_25 = arith.constant 0 : index
    %c2_26 = arith.constant 2 : index
    %c1_27 = arith.constant 1 : index
    %c0_28 = arith.constant 0 : index
    %16 = vector.load %arg1[%c0_25, %c2_26, %c1_27, %c0_28] : memref<1x14x14x42xf32, #tpu.memory_space<vmem>>, vector<1x1x12x42xf32>
    %17 = vector.shape_cast %16 : vector<1x1x12x42xf32> to vector<12x42xf32>
    %c0_29 = arith.constant 0 : index
    %c2_30 = arith.constant 2 : index
    %c2_31 = arith.constant 2 : index
    %c0_32 = arith.constant 0 : index
    %18 = vector.load %arg1[%c0_29, %c2_30, %c2_31, %c0_32] : memref<1x14x14x42xf32, #tpu.memory_space<vmem>>, vector<1x1x12x42xf32>
    %19 = vector.shape_cast %18 : vector<1x1x12x42xf32> to vector<12x42xf32>
    %20 = tpu.concatenate %15, %17, %19 in 1 : vector<12x42xf32>, vector<12x42xf32>, vector<12x42xf32> -> vector<12x126xf32>
    %c0_33 = arith.constant 0 : index
    %c3 = arith.constant 3 : index
    %c0_34 = arith.constant 0 : index
    %c0_35 = arith.constant 0 : index
    %21 = vector.load %arg1[%c0_33, %c3, %c0_34, %c0_35] : memref<1x14x14x42xf32, #tpu.memory_space<vmem>>, vector<1x1x12x42xf32>
    %22 = vector.shape_cast %21 : vector<1x1x12x42xf32> to vector<12x42xf32>
    %c0_36 = arith.constant 0 : index
    %c3_37 = arith.constant 3 : index
    %c1_38 = arith.constant 1 : index
    %c0_39 = arith.constant 0 : index
    %23 = vector.load %arg1[%c0_36, %c3_37, %c1_38, %c0_39] : memref<1x14x14x42xf32, #tpu.memory_space<vmem>>, vector<1x1x12x42xf32>
    %24 = vector.shape_cast %23 : vector<1x1x12x42xf32> to vector<12x42xf32>
    %c0_40 = arith.constant 0 : index
    %c3_41 = arith.constant 3 : index
    %c2_42 = arith.constant 2 : index
    %c0_43 = arith.constant 0 : index
    %25 = vector.load %arg1[%c0_40, %c3_41, %c2_42, %c0_43] : memref<1x14x14x42xf32, #tpu.memory_space<vmem>>, vector<1x1x12x42xf32>
    %26 = vector.shape_cast %25 : vector<1x1x12x42xf32> to vector<12x42xf32>
    %27 = tpu.concatenate %22, %24, %26 in 1 : vector<12x42xf32>, vector<12x42xf32>, vector<12x42xf32> -> vector<12x126xf32>
    %c0_44 = arith.constant 0 : index
    %c4 = arith.constant 4 : index
    %c0_45 = arith.constant 0 : index
    %c0_46 = arith.constant 0 : index
    %28 = vector.load %arg1[%c0_44, %c4, %c0_45, %c0_46] : memref<1x14x14x42xf32, #tpu.memory_space<vmem>>, vector<1x1x12x42xf32>
    %29 = vector.shape_cast %28 : vector<1x1x12x42xf32> to vector<12x42xf32>
    %c0_47 = arith.constant 0 : index
    %c4_48 = arith.constant 4 : index
    %c1_49 = arith.constant 1 : index
    %c0_50 = arith.constant 0 : index
    %30 = vector.load %arg1[%c0_47, %c4_48, %c1_49, %c0_50] : memref<1x14x14x42xf32, #tpu.memory_space<vmem>>, vector<1x1x12x42xf32>
    %31 = vector.shape_cast %30 : vector<1x1x12x42xf32> to vector<12x42xf32>
    %c0_51 = arith.constant 0 : index
    %c4_52 = arith.constant 4 : index
    %c2_53 = arith.constant 2 : index
    %c0_54 = arith.constant 0 : index
    %32 = vector.load %arg1[%c0_51, %c4_52, %c2_53, %c0_54] : memref<1x14x14x42xf32, #tpu.memory_space<vmem>>, vector<1x1x12x42xf32>
    %33 = vector.shape_cast %32 : vector<1x1x12x42xf32> to vector<12x42xf32>
    %34 = tpu.concatenate %29, %31, %33 in 1 : vector<12x42xf32>, vector<12x42xf32>, vector<12x42xf32> -> vector<12x126xf32>
    %c0_55 = arith.constant 0 : index
    %c5 = arith.constant 5 : index
    %c0_56 = arith.constant 0 : index
    %c0_57 = arith.constant 0 : index
    %35 = vector.load %arg1[%c0_55, %c5, %c0_56, %c0_57] : memref<1x14x14x42xf32, #tpu.memory_space<vmem>>, vector<1x1x12x42xf32>
    %36 = vector.shape_cast %35 : vector<1x1x12x42xf32> to vector<12x42xf32>
    %c0_58 = arith.constant 0 : index
    %c5_59 = arith.constant 5 : index
    %c1_60 = arith.constant 1 : index
    %c0_61 = arith.constant 0 : index
    %37 = vector.load %arg1[%c0_58, %c5_59, %c1_60, %c0_61] : memref<1x14x14x42xf32, #tpu.memory_space<vmem>>, vector<1x1x12x42xf32>
    %38 = vector.shape_cast %37 : vector<1x1x12x42xf32> to vector<12x42xf32>
    %c0_62 = arith.constant 0 : index
    %c5_63 = arith.constant 5 : index
    %c2_64 = arith.constant 2 : index
    %c0_65 = arith.constant 0 : index
    %39 = vector.load %arg1[%c0_62, %c5_63, %c2_64, %c0_65] : memref<1x14x14x42xf32, #tpu.memory_space<vmem>>, vector<1x1x12x42xf32>
    %40 = vector.shape_cast %39 : vector<1x1x12x42xf32> to vector<12x42xf32>
    %41 = tpu.concatenate %36, %38, %40 in 1 : vector<12x42xf32>, vector<12x42xf32>, vector<12x42xf32> -> vector<12x126xf32>
    %c0_66 = arith.constant 0 : index
    %c6 = arith.constant 6 : index
    %c0_67 = arith.constant 0 : index
    %c0_68 = arith.constant 0 : index
    %42 = vector.load %arg1[%c0_66, %c6, %c0_67, %c0_68] : memref<1x14x14x42xf32, #tpu.memory_space<vmem>>, vector<1x1x12x42xf32>
    %43 = vector.shape_cast %42 : vector<1x1x12x42xf32> to vector<12x42xf32>
    %c0_69 = arith.constant 0 : index
    %c6_70 = arith.constant 6 : index
    %c1_71 = arith.constant 1 : index
    %c0_72 = arith.constant 0 : index
    %44 = vector.load %arg1[%c0_69, %c6_70, %c1_71, %c0_72] : memref<1x14x14x42xf32, #tpu.memory_space<vmem>>, vector<1x1x12x42xf32>
    %45 = vector.shape_cast %44 : vector<1x1x12x42xf32> to vector<12x42xf32>
    %c0_73 = arith.constant 0 : index
    %c6_74 = arith.constant 6 : index
    %c2_75 = arith.constant 2 : index
    %c0_76 = arith.constant 0 : index
    %46 = vector.load %arg1[%c0_73, %c6_74, %c2_75, %c0_76] : memref<1x14x14x42xf32, #tpu.memory_space<vmem>>, vector<1x1x12x42xf32>
    %47 = vector.shape_cast %46 : vector<1x1x12x42xf32> to vector<12x42xf32>
    %48 = tpu.concatenate %43, %45, %47 in 1 : vector<12x42xf32>, vector<12x42xf32>, vector<12x42xf32> -> vector<12x126xf32>
    %c0_77 = arith.constant 0 : index
    %c7 = arith.constant 7 : index
    %c0_78 = arith.constant 0 : index
    %c0_79 = arith.constant 0 : index
    %49 = vector.load %arg1[%c0_77, %c7, %c0_78, %c0_79] : memref<1x14x14x42xf32, #tpu.memory_space<vmem>>, vector<1x1x12x42xf32>
    %50 = vector.shape_cast %49 : vector<1x1x12x42xf32> to vector<12x42xf32>
    %c0_80 = arith.constant 0 : index
    %c7_81 = arith.constant 7 : index
    %c1_82 = arith.constant 1 : index
    %c0_83 = arith.constant 0 : index
    %51 = vector.load %arg1[%c0_80, %c7_81, %c1_82, %c0_83] : memref<1x14x14x42xf32, #tpu.memory_space<vmem>>, vector<1x1x12x42xf32>
    %52 = vector.shape_cast %51 : vector<1x1x12x42xf32> to vector<12x42xf32>
    %c0_84 = arith.constant 0 : index
    %c7_85 = arith.constant 7 : index
    %c2_86 = arith.constant 2 : index
    %c0_87 = arith.constant 0 : index
    %53 = vector.load %arg1[%c0_84, %c7_85, %c2_86, %c0_87] : memref<1x14x14x42xf32, #tpu.memory_space<vmem>>, vector<1x1x12x42xf32>
    %54 = vector.shape_cast %53 : vector<1x1x12x42xf32> to vector<12x42xf32>
    %55 = tpu.concatenate %50, %52, %54 in 1 : vector<12x42xf32>, vector<12x42xf32>, vector<12x42xf32> -> vector<12x126xf32>
    %c0_88 = arith.constant 0 : index
    %c8 = arith.constant 8 : index
    %c0_89 = arith.constant 0 : index
    %c0_90 = arith.constant 0 : index
    %56 = vector.load %arg1[%c0_88, %c8, %c0_89, %c0_90] : memref<1x14x14x42xf32, #tpu.memory_space<vmem>>, vector<1x1x12x42xf32>
    %57 = vector.shape_cast %56 : vector<1x1x12x42xf32> to vector<12x42xf32>
    %c0_91 = arith.constant 0 : index
    %c8_92 = arith.constant 8 : index
    %c1_93 = arith.constant 1 : index
    %c0_94 = arith.constant 0 : index
    %58 = vector.load %arg1[%c0_91, %c8_92, %c1_93, %c0_94] : memref<1x14x14x42xf32, #tpu.memory_space<vmem>>, vector<1x1x12x42xf32>
    %59 = vector.shape_cast %58 : vector<1x1x12x42xf32> to vector<12x42xf32>
    %c0_95 = arith.constant 0 : index
    %c8_96 = arith.constant 8 : index
    %c2_97 = arith.constant 2 : index
    %c0_98 = arith.constant 0 : index
    %60 = vector.load %arg1[%c0_95, %c8_96, %c2_97, %c0_98] : memref<1x14x14x42xf32, #tpu.memory_space<vmem>>, vector<1x1x12x42xf32>
    %61 = vector.shape_cast %60 : vector<1x1x12x42xf32> to vector<12x42xf32>
    %62 = tpu.concatenate %57, %59, %61 in 1 : vector<12x42xf32>, vector<12x42xf32>, vector<12x42xf32> -> vector<12x126xf32>
    %c0_99 = arith.constant 0 : index
    %c9 = arith.constant 9 : index
    %c0_100 = arith.constant 0 : index
    %c0_101 = arith.constant 0 : index
    %63 = vector.load %arg1[%c0_99, %c9, %c0_100, %c0_101] : memref<1x14x14x42xf32, #tpu.memory_space<vmem>>, vector<1x1x12x42xf32>
    %64 = vector.shape_cast %63 : vector<1x1x12x42xf32> to vector<12x42xf32>
    %c0_102 = arith.constant 0 : index
    %c9_103 = arith.constant 9 : index
    %c1_104 = arith.constant 1 : index
    %c0_105 = arith.constant 0 : index
    %65 = vector.load %arg1[%c0_102, %c9_103, %c1_104, %c0_105] : memref<1x14x14x42xf32, #tpu.memory_space<vmem>>, vector<1x1x12x42xf32>
    %66 = vector.shape_cast %65 : vector<1x1x12x42xf32> to vector<12x42xf32>
    %c0_106 = arith.constant 0 : index
    %c9_107 = arith.constant 9 : index
    %c2_108 = arith.constant 2 : index
    %c0_109 = arith.constant 0 : index
    %67 = vector.load %arg1[%c0_106, %c9_107, %c2_108, %c0_109] : memref<1x14x14x42xf32, #tpu.memory_space<vmem>>, vector<1x1x12x42xf32>
    %68 = vector.shape_cast %67 : vector<1x1x12x42xf32> to vector<12x42xf32>
    %69 = tpu.concatenate %64, %66, %68 in 1 : vector<12x42xf32>, vector<12x42xf32>, vector<12x42xf32> -> vector<12x126xf32>
    %c0_110 = arith.constant 0 : index
    %c10 = arith.constant 10 : index
    %c0_111 = arith.constant 0 : index
    %c0_112 = arith.constant 0 : index
    %70 = vector.load %arg1[%c0_110, %c10, %c0_111, %c0_112] : memref<1x14x14x42xf32, #tpu.memory_space<vmem>>, vector<1x1x12x42xf32>
    %71 = vector.shape_cast %70 : vector<1x1x12x42xf32> to vector<12x42xf32>
    %c0_113 = arith.constant 0 : index
    %c10_114 = arith.constant 10 : index
    %c1_115 = arith.constant 1 : index
    %c0_116 = arith.constant 0 : index
    %72 = vector.load %arg1[%c0_113, %c10_114, %c1_115, %c0_116] : memref<1x14x14x42xf32, #tpu.memory_space<vmem>>, vector<1x1x12x42xf32>
    %73 = vector.shape_cast %72 : vector<1x1x12x42xf32> to vector<12x42xf32>
    %c0_117 = arith.constant 0 : index
    %c10_118 = arith.constant 10 : index
    %c2_119 = arith.constant 2 : index
    %c0_120 = arith.constant 0 : index
    %74 = vector.load %arg1[%c0_117, %c10_118, %c2_119, %c0_120] : memref<1x14x14x42xf32, #tpu.memory_space<vmem>>, vector<1x1x12x42xf32>
    %75 = vector.shape_cast %74 : vector<1x1x12x42xf32> to vector<12x42xf32>
    %76 = tpu.concatenate %71, %73, %75 in 1 : vector<12x42xf32>, vector<12x42xf32>, vector<12x42xf32> -> vector<12x126xf32>
    %c0_121 = arith.constant 0 : index
    %c11 = arith.constant 11 : index
    %c0_122 = arith.constant 0 : index
    %c0_123 = arith.constant 0 : index
    %77 = vector.load %arg1[%c0_121, %c11, %c0_122, %c0_123] : memref<1x14x14x42xf32, #tpu.memory_space<vmem>>, vector<1x1x12x42xf32>
    %78 = vector.shape_cast %77 : vector<1x1x12x42xf32> to vector<12x42xf32>
    %c0_124 = arith.constant 0 : index
    %c11_125 = arith.constant 11 : index
    %c1_126 = arith.constant 1 : index
    %c0_127 = arith.constant 0 : index
    %79 = vector.load %arg1[%c0_124, %c11_125, %c1_126, %c0_127] : memref<1x14x14x42xf32, #tpu.memory_space<vmem>>, vector<1x1x12x42xf32>
    %80 = vector.shape_cast %79 : vector<1x1x12x42xf32> to vector<12x42xf32>
    %c0_128 = arith.constant 0 : index
    %c11_129 = arith.constant 11 : index
    %c2_130 = arith.constant 2 : index
    %c0_131 = arith.constant 0 : index
    %81 = vector.load %arg1[%c0_128, %c11_129, %c2_130, %c0_131] : memref<1x14x14x42xf32, #tpu.memory_space<vmem>>, vector<1x1x12x42xf32>
    %82 = vector.shape_cast %81 : vector<1x1x12x42xf32> to vector<12x42xf32>
    %83 = tpu.concatenate %78, %80, %82 in 1 : vector<12x42xf32>, vector<12x42xf32>, vector<12x42xf32> -> vector<12x126xf32>
    %c0_132 = arith.constant 0 : index
    %c12 = arith.constant 12 : index
    %c0_133 = arith.constant 0 : index
    %c0_134 = arith.constant 0 : index
    %84 = vector.load %arg1[%c0_132, %c12, %c0_133, %c0_134] : memref<1x14x14x42xf32, #tpu.memory_space<vmem>>, vector<1x1x12x42xf32>
    %85 = vector.shape_cast %84 : vector<1x1x12x42xf32> to vector<12x42xf32>
    %c0_135 = arith.constant 0 : index
    %c12_136 = arith.constant 12 : index
    %c1_137 = arith.constant 1 : index
    %c0_138 = arith.constant 0 : index
    %86 = vector.load %arg1[%c0_135, %c12_136, %c1_137, %c0_138] : memref<1x14x14x42xf32, #tpu.memory_space<vmem>>, vector<1x1x12x42xf32>
    %87 = vector.shape_cast %86 : vector<1x1x12x42xf32> to vector<12x42xf32>
    %c0_139 = arith.constant 0 : index
    %c12_140 = arith.constant 12 : index
    %c2_141 = arith.constant 2 : index
    %c0_142 = arith.constant 0 : index
    %88 = vector.load %arg1[%c0_139, %c12_140, %c2_141, %c0_142] : memref<1x14x14x42xf32, #tpu.memory_space<vmem>>, vector<1x1x12x42xf32>
    %89 = vector.shape_cast %88 : vector<1x1x12x42xf32> to vector<12x42xf32>
    %90 = tpu.concatenate %85, %87, %89 in 1 : vector<12x42xf32>, vector<12x42xf32>, vector<12x42xf32> -> vector<12x126xf32>
    %c0_143 = arith.constant 0 : index
    %c13 = arith.constant 13 : index
    %c0_144 = arith.constant 0 : index
    %c0_145 = arith.constant 0 : index
    %91 = vector.load %arg1[%c0_143, %c13, %c0_144, %c0_145] : memref<1x14x14x42xf32, #tpu.memory_space<vmem>>, vector<1x1x12x42xf32>
    %92 = vector.shape_cast %91 : vector<1x1x12x42xf32> to vector<12x42xf32>
    %c0_146 = arith.constant 0 : index
    %c13_147 = arith.constant 13 : index
    %c1_148 = arith.constant 1 : index
    %c0_149 = arith.constant 0 : index
    %93 = vector.load %arg1[%c0_146, %c13_147, %c1_148, %c0_149] : memref<1x14x14x42xf32, #tpu.memory_space<vmem>>, vector<1x1x12x42xf32>
    %94 = vector.shape_cast %93 : vector<1x1x12x42xf32> to vector<12x42xf32>
    %c0_150 = arith.constant 0 : index
    %c13_151 = arith.constant 13 : index
    %c2_152 = arith.constant 2 : index
    %c0_153 = arith.constant 0 : index
    %95 = vector.load %arg1[%c0_150, %c13_151, %c2_152, %c0_153] : memref<1x14x14x42xf32, #tpu.memory_space<vmem>>, vector<1x1x12x42xf32>
    %96 = vector.shape_cast %95 : vector<1x1x12x42xf32> to vector<12x42xf32>
    %97 = tpu.concatenate %92, %94, %96 in 1 : vector<12x42xf32>, vector<12x42xf32>, vector<12x42xf32> -> vector<12x126xf32>
    %98 = tpu.concatenate %6, %13, %20 in 1 : vector<12x126xf32>, vector<12x126xf32>, vector<12x126xf32> -> vector<12x378xf32>
    %99 = tpu.concatenate %13, %20, %27 in 1 : vector<12x126xf32>, vector<12x126xf32>, vector<12x126xf32> -> vector<12x378xf32>
    %100 = tpu.concatenate %20, %27, %34 in 1 : vector<12x126xf32>, vector<12x126xf32>, vector<12x126xf32> -> vector<12x378xf32>
    %101 = tpu.concatenate %27, %34, %41 in 1 : vector<12x126xf32>, vector<12x126xf32>, vector<12x126xf32> -> vector<12x378xf32>
    %102 = tpu.concatenate %34, %41, %48 in 1 : vector<12x126xf32>, vector<12x126xf32>, vector<12x126xf32> -> vector<12x378xf32>
    %103 = tpu.concatenate %41, %48, %55 in 1 : vector<12x126xf32>, vector<12x126xf32>, vector<12x126xf32> -> vector<12x378xf32>
    %104 = tpu.concatenate %48, %55, %62 in 1 : vector<12x126xf32>, vector<12x126xf32>, vector<12x126xf32> -> vector<12x378xf32>
    %105 = tpu.concatenate %55, %62, %69 in 1 : vector<12x126xf32>, vector<12x126xf32>, vector<12x126xf32> -> vector<12x378xf32>
    %106 = tpu.concatenate %62, %69, %76 in 1 : vector<12x126xf32>, vector<12x126xf32>, vector<12x126xf32> -> vector<12x378xf32>
    %107 = tpu.concatenate %69, %76, %83 in 1 : vector<12x126xf32>, vector<12x126xf32>, vector<12x126xf32> -> vector<12x378xf32>
    %108 = tpu.concatenate %76, %83, %90 in 1 : vector<12x126xf32>, vector<12x126xf32>, vector<12x126xf32> -> vector<12x378xf32>
    %109 = tpu.concatenate %83, %90, %97 in 1 : vector<12x126xf32>, vector<12x126xf32>, vector<12x126xf32> -> vector<12x378xf32>
    %110 = tpu.concatenate %98, %99, %100, %101, %102, %103, %104, %105, %106, %107, %108, %109 in 0 : vector<12x378xf32>, vector<12x378xf32>, vector<12x378xf32>, vector<12x378xf32>, vector<12x378xf32>, vector<12x378xf32>, vector<12x378xf32>, vector<12x378xf32>, vector<12x378xf32>, vector<12x378xf32>, vector<12x378xf32>, vector<12x378xf32> -> vector<144x378xf32>
    %c0_154 = arith.constant 0 : index
    %c0_155 = arith.constant 0 : index
    %111 = vector.load %arg3[%c0_154, %c0_155] : memref<1x256xf32, #tpu.memory_space<vmem>>, vector<1x256xf32>
    %112 = arith.truncf %110 : vector<144x378xf32> to vector<144x378xbf16>
    %c0_156 = arith.constant 0 : index
    %c0_157 = arith.constant 0 : index
    %113 = vector.load %arg2[%c0_156, %c0_157] : memref<378x512xbf16, #tpu.memory_space<vmem>>, vector<378x512xbf16>
    %cst = arith.constant dense<0.000000e+00> : vector<144x512xf32>
    %114 = tpu.matmul %112, %113, %cst {dimension_numbers = #tpu.dot_dimension_numbers<[1], [0], [0], [1], [0, 0, 1, 1], [], []>} : vector<144x378xbf16>, vector<378x512xbf16>, vector<144x512xf32> -> vector<144x512xf32>
    %115 = vector.extract_strided_slice %114 {offsets = [0, 0], sizes = [144, 256], strides = [1, 1]} : vector<144x512xf32> to vector<144x256xf32>
    %116 = vector.extract_strided_slice %114 {offsets = [0, 256], sizes = [144, 256], strides = [1, 1]} : vector<144x512xf32> to vector<144x256xf32>
    %117 = arith.maximumf %115, %116 : vector<144x256xf32>
    %118 = vector.extract_strided_slice %117 {offsets = [0, 0], sizes = [12, 256], strides = [1, 1]} : vector<144x256xf32> to vector<12x256xf32>
    %119 = vector.extract_strided_slice %117 {offsets = [12, 0], sizes = [12, 256], strides = [1, 1]} : vector<144x256xf32> to vector<12x256xf32>
    %120 = arith.maximumf %118, %119 : vector<12x256xf32>
    %121 = vector.extract_strided_slice %120 {offsets = [0, 0], sizes = [1, 256], strides = [1, 1]} : vector<12x256xf32> to vector<1x256xf32>
    %122 = vector.extract_strided_slice %120 {offsets = [1, 0], sizes = [1, 256], strides = [1, 1]} : vector<12x256xf32> to vector<1x256xf32>
    %123 = arith.maximumf %121, %122 : vector<1x256xf32>
    %124 = vector.extract_strided_slice %120 {offsets = [2, 0], sizes = [1, 256], strides = [1, 1]} : vector<12x256xf32> to vector<1x256xf32>
    %125 = vector.extract_strided_slice %120 {offsets = [3, 0], sizes = [1, 256], strides = [1, 1]} : vector<12x256xf32> to vector<1x256xf32>
    %126 = arith.maximumf %124, %125 : vector<1x256xf32>
    %127 = vector.extract_strided_slice %120 {offsets = [4, 0], sizes = [1, 256], strides = [1, 1]} : vector<12x256xf32> to vector<1x256xf32>
    %128 = vector.extract_strided_slice %120 {offsets = [5, 0], sizes = [1, 256], strides = [1, 1]} : vector<12x256xf32> to vector<1x256xf32>
    %129 = arith.maximumf %127, %128 : vector<1x256xf32>
    %130 = vector.extract_strided_slice %120 {offsets = [6, 0], sizes = [1, 256], strides = [1, 1]} : vector<12x256xf32> to vector<1x256xf32>
    %131 = vector.extract_strided_slice %120 {offsets = [7, 0], sizes = [1, 256], strides = [1, 1]} : vector<12x256xf32> to vector<1x256xf32>
    %132 = arith.maximumf %130, %131 : vector<1x256xf32>
    %133 = vector.extract_strided_slice %120 {offsets = [8, 0], sizes = [1, 256], strides = [1, 1]} : vector<12x256xf32> to vector<1x256xf32>
    %134 = vector.extract_strided_slice %120 {offsets = [9, 0], sizes = [1, 256], strides = [1, 1]} : vector<12x256xf32> to vector<1x256xf32>
    %135 = arith.maximumf %133, %134 : vector<1x256xf32>
    %136 = vector.extract_strided_slice %120 {offsets = [10, 0], sizes = [1, 256], strides = [1, 1]} : vector<12x256xf32> to vector<1x256xf32>
    %137 = vector.extract_strided_slice %120 {offsets = [11, 0], sizes = [1, 256], strides = [1, 1]} : vector<12x256xf32> to vector<1x256xf32>
    %138 = arith.maximumf %136, %137 : vector<1x256xf32>
    %139 = vector.extract_strided_slice %117 {offsets = [24, 0], sizes = [12, 256], strides = [1, 1]} : vector<144x256xf32> to vector<12x256xf32>
    %140 = vector.extract_strided_slice %117 {offsets = [36, 0], sizes = [12, 256], strides = [1, 1]} : vector<144x256xf32> to vector<12x256xf32>
    %141 = arith.maximumf %139, %140 : vector<12x256xf32>
    %142 = vector.extract_strided_slice %141 {offsets = [0, 0], sizes = [1, 256], strides = [1, 1]} : vector<12x256xf32> to vector<1x256xf32>
    %143 = vector.extract_strided_slice %141 {offsets = [1, 0], sizes = [1, 256], strides = [1, 1]} : vector<12x256xf32> to vector<1x256xf32>
    %144 = arith.maximumf %142, %143 : vector<1x256xf32>
    %145 = vector.extract_strided_slice %141 {offsets = [2, 0], sizes = [1, 256], strides = [1, 1]} : vector<12x256xf32> to vector<1x256xf32>
    %146 = vector.extract_strided_slice %141 {offsets = [3, 0], sizes = [1, 256], strides = [1, 1]} : vector<12x256xf32> to vector<1x256xf32>
    %147 = arith.maximumf %145, %146 : vector<1x256xf32>
    %148 = vector.extract_strided_slice %141 {offsets = [4, 0], sizes = [1, 256], strides = [1, 1]} : vector<12x256xf32> to vector<1x256xf32>
    %149 = vector.extract_strided_slice %141 {offsets = [5, 0], sizes = [1, 256], strides = [1, 1]} : vector<12x256xf32> to vector<1x256xf32>
    %150 = arith.maximumf %148, %149 : vector<1x256xf32>
    %151 = vector.extract_strided_slice %141 {offsets = [6, 0], sizes = [1, 256], strides = [1, 1]} : vector<12x256xf32> to vector<1x256xf32>
    %152 = vector.extract_strided_slice %141 {offsets = [7, 0], sizes = [1, 256], strides = [1, 1]} : vector<12x256xf32> to vector<1x256xf32>
    %153 = arith.maximumf %151, %152 : vector<1x256xf32>
    %154 = vector.extract_strided_slice %141 {offsets = [8, 0], sizes = [1, 256], strides = [1, 1]} : vector<12x256xf32> to vector<1x256xf32>
    %155 = vector.extract_strided_slice %141 {offsets = [9, 0], sizes = [1, 256], strides = [1, 1]} : vector<12x256xf32> to vector<1x256xf32>
    %156 = arith.maximumf %154, %155 : vector<1x256xf32>
    %157 = vector.extract_strided_slice %141 {offsets = [10, 0], sizes = [1, 256], strides = [1, 1]} : vector<12x256xf32> to vector<1x256xf32>
    %158 = vector.extract_strided_slice %141 {offsets = [11, 0], sizes = [1, 256], strides = [1, 1]} : vector<12x256xf32> to vector<1x256xf32>
    %159 = arith.maximumf %157, %158 : vector<1x256xf32>
    %160 = vector.extract_strided_slice %117 {offsets = [48, 0], sizes = [12, 256], strides = [1, 1]} : vector<144x256xf32> to vector<12x256xf32>
    %161 = vector.extract_strided_slice %117 {offsets = [60, 0], sizes = [12, 256], strides = [1, 1]} : vector<144x256xf32> to vector<12x256xf32>
    %162 = arith.maximumf %160, %161 : vector<12x256xf32>
    %163 = vector.extract_strided_slice %162 {offsets = [0, 0], sizes = [1, 256], strides = [1, 1]} : vector<12x256xf32> to vector<1x256xf32>
    %164 = vector.extract_strided_slice %162 {offsets = [1, 0], sizes = [1, 256], strides = [1, 1]} : vector<12x256xf32> to vector<1x256xf32>
    %165 = arith.maximumf %163, %164 : vector<1x256xf32>
    %166 = vector.extract_strided_slice %162 {offsets = [2, 0], sizes = [1, 256], strides = [1, 1]} : vector<12x256xf32> to vector<1x256xf32>
    %167 = vector.extract_strided_slice %162 {offsets = [3, 0], sizes = [1, 256], strides = [1, 1]} : vector<12x256xf32> to vector<1x256xf32>
    %168 = arith.maximumf %166, %167 : vector<1x256xf32>
    %169 = vector.extract_strided_slice %162 {offsets = [4, 0], sizes = [1, 256], strides = [1, 1]} : vector<12x256xf32> to vector<1x256xf32>
    %170 = vector.extract_strided_slice %162 {offsets = [5, 0], sizes = [1, 256], strides = [1, 1]} : vector<12x256xf32> to vector<1x256xf32>
    %171 = arith.maximumf %169, %170 : vector<1x256xf32>
    %172 = vector.extract_strided_slice %162 {offsets = [6, 0], sizes = [1, 256], strides = [1, 1]} : vector<12x256xf32> to vector<1x256xf32>
    %173 = vector.extract_strided_slice %162 {offsets = [7, 0], sizes = [1, 256], strides = [1, 1]} : vector<12x256xf32> to vector<1x256xf32>
    %174 = arith.maximumf %172, %173 : vector<1x256xf32>
    %175 = vector.extract_strided_slice %162 {offsets = [8, 0], sizes = [1, 256], strides = [1, 1]} : vector<12x256xf32> to vector<1x256xf32>
    %176 = vector.extract_strided_slice %162 {offsets = [9, 0], sizes = [1, 256], strides = [1, 1]} : vector<12x256xf32> to vector<1x256xf32>
    %177 = arith.maximumf %175, %176 : vector<1x256xf32>
    %178 = vector.extract_strided_slice %162 {offsets = [10, 0], sizes = [1, 256], strides = [1, 1]} : vector<12x256xf32> to vector<1x256xf32>
    %179 = vector.extract_strided_slice %162 {offsets = [11, 0], sizes = [1, 256], strides = [1, 1]} : vector<12x256xf32> to vector<1x256xf32>
    %180 = arith.maximumf %178, %179 : vector<1x256xf32>
    %181 = vector.extract_strided_slice %117 {offsets = [72, 0], sizes = [12, 256], strides = [1, 1]} : vector<144x256xf32> to vector<12x256xf32>
    %182 = vector.extract_strided_slice %117 {offsets = [84, 0], sizes = [12, 256], strides = [1, 1]} : vector<144x256xf32> to vector<12x256xf32>
    %183 = arith.maximumf %181, %182 : vector<12x256xf32>
    %184 = vector.extract_strided_slice %183 {offsets = [0, 0], sizes = [1, 256], strides = [1, 1]} : vector<12x256xf32> to vector<1x256xf32>
    %185 = vector.extract_strided_slice %183 {offsets = [1, 0], sizes = [1, 256], strides = [1, 1]} : vector<12x256xf32> to vector<1x256xf32>
    %186 = arith.maximumf %184, %185 : vector<1x256xf32>
    %187 = vector.extract_strided_slice %183 {offsets = [2, 0], sizes = [1, 256], strides = [1, 1]} : vector<12x256xf32> to vector<1x256xf32>
    %188 = vector.extract_strided_slice %183 {offsets = [3, 0], sizes = [1, 256], strides = [1, 1]} : vector<12x256xf32> to vector<1x256xf32>
    %189 = arith.maximumf %187, %188 : vector<1x256xf32>
    %190 = vector.extract_strided_slice %183 {offsets = [4, 0], sizes = [1, 256], strides = [1, 1]} : vector<12x256xf32> to vector<1x256xf32>
    %191 = vector.extract_strided_slice %183 {offsets = [5, 0], sizes = [1, 256], strides = [1, 1]} : vector<12x256xf32> to vector<1x256xf32>
    %192 = arith.maximumf %190, %191 : vector<1x256xf32>
    %193 = vector.extract_strided_slice %183 {offsets = [6, 0], sizes = [1, 256], strides = [1, 1]} : vector<12x256xf32> to vector<1x256xf32>
    %194 = vector.extract_strided_slice %183 {offsets = [7, 0], sizes = [1, 256], strides = [1, 1]} : vector<12x256xf32> to vector<1x256xf32>
    %195 = arith.maximumf %193, %194 : vector<1x256xf32>
    %196 = vector.extract_strided_slice %183 {offsets = [8, 0], sizes = [1, 256], strides = [1, 1]} : vector<12x256xf32> to vector<1x256xf32>
    %197 = vector.extract_strided_slice %183 {offsets = [9, 0], sizes = [1, 256], strides = [1, 1]} : vector<12x256xf32> to vector<1x256xf32>
    %198 = arith.maximumf %196, %197 : vector<1x256xf32>
    %199 = vector.extract_strided_slice %183 {offsets = [10, 0], sizes = [1, 256], strides = [1, 1]} : vector<12x256xf32> to vector<1x256xf32>
    %200 = vector.extract_strided_slice %183 {offsets = [11, 0], sizes = [1, 256], strides = [1, 1]} : vector<12x256xf32> to vector<1x256xf32>
    %201 = arith.maximumf %199, %200 : vector<1x256xf32>
    %202 = vector.extract_strided_slice %117 {offsets = [96, 0], sizes = [12, 256], strides = [1, 1]} : vector<144x256xf32> to vector<12x256xf32>
    %203 = vector.extract_strided_slice %117 {offsets = [108, 0], sizes = [12, 256], strides = [1, 1]} : vector<144x256xf32> to vector<12x256xf32>
    %204 = arith.maximumf %202, %203 : vector<12x256xf32>
    %205 = vector.extract_strided_slice %204 {offsets = [0, 0], sizes = [1, 256], strides = [1, 1]} : vector<12x256xf32> to vector<1x256xf32>
    %206 = vector.extract_strided_slice %204 {offsets = [1, 0], sizes = [1, 256], strides = [1, 1]} : vector<12x256xf32> to vector<1x256xf32>
    %207 = arith.maximumf %205, %206 : vector<1x256xf32>
    %208 = vector.extract_strided_slice %204 {offsets = [2, 0], sizes = [1, 256], strides = [1, 1]} : vector<12x256xf32> to vector<1x256xf32>
    %209 = vector.extract_strided_slice %204 {offsets = [3, 0], sizes = [1, 256], strides = [1, 1]} : vector<12x256xf32> to vector<1x256xf32>
    %210 = arith.maximumf %208, %209 : vector<1x256xf32>
    %211 = vector.extract_strided_slice %204 {offsets = [4, 0], sizes = [1, 256], strides = [1, 1]} : vector<12x256xf32> to vector<1x256xf32>
    %212 = vector.extract_strided_slice %204 {offsets = [5, 0], sizes = [1, 256], strides = [1, 1]} : vector<12x256xf32> to vector<1x256xf32>
    %213 = arith.maximumf %211, %212 : vector<1x256xf32>
    %214 = vector.extract_strided_slice %204 {offsets = [6, 0], sizes = [1, 256], strides = [1, 1]} : vector<12x256xf32> to vector<1x256xf32>
    %215 = vector.extract_strided_slice %204 {offsets = [7, 0], sizes = [1, 256], strides = [1, 1]} : vector<12x256xf32> to vector<1x256xf32>
    %216 = arith.maximumf %214, %215 : vector<1x256xf32>
    %217 = vector.extract_strided_slice %204 {offsets = [8, 0], sizes = [1, 256], strides = [1, 1]} : vector<12x256xf32> to vector<1x256xf32>
    %218 = vector.extract_strided_slice %204 {offsets = [9, 0], sizes = [1, 256], strides = [1, 1]} : vector<12x256xf32> to vector<1x256xf32>
    %219 = arith.maximumf %217, %218 : vector<1x256xf32>
    %220 = vector.extract_strided_slice %204 {offsets = [10, 0], sizes = [1, 256], strides = [1, 1]} : vector<12x256xf32> to vector<1x256xf32>
    %221 = vector.extract_strided_slice %204 {offsets = [11, 0], sizes = [1, 256], strides = [1, 1]} : vector<12x256xf32> to vector<1x256xf32>
    %222 = arith.maximumf %220, %221 : vector<1x256xf32>
    %223 = vector.extract_strided_slice %117 {offsets = [120, 0], sizes = [12, 256], strides = [1, 1]} : vector<144x256xf32> to vector<12x256xf32>
    %224 = vector.extract_strided_slice %117 {offsets = [132, 0], sizes = [12, 256], strides = [1, 1]} : vector<144x256xf32> to vector<12x256xf32>
    %225 = arith.maximumf %223, %224 : vector<12x256xf32>
    %226 = vector.extract_strided_slice %225 {offsets = [0, 0], sizes = [1, 256], strides = [1, 1]} : vector<12x256xf32> to vector<1x256xf32>
    %227 = vector.extract_strided_slice %225 {offsets = [1, 0], sizes = [1, 256], strides = [1, 1]} : vector<12x256xf32> to vector<1x256xf32>
    %228 = arith.maximumf %226, %227 : vector<1x256xf32>
    %229 = vector.extract_strided_slice %225 {offsets = [2, 0], sizes = [1, 256], strides = [1, 1]} : vector<12x256xf32> to vector<1x256xf32>
    %230 = vector.extract_strided_slice %225 {offsets = [3, 0], sizes = [1, 256], strides = [1, 1]} : vector<12x256xf32> to vector<1x256xf32>
    %231 = arith.maximumf %229, %230 : vector<1x256xf32>
    %232 = vector.extract_strided_slice %225 {offsets = [4, 0], sizes = [1, 256], strides = [1, 1]} : vector<12x256xf32> to vector<1x256xf32>
    %233 = vector.extract_strided_slice %225 {offsets = [5, 0], sizes = [1, 256], strides = [1, 1]} : vector<12x256xf32> to vector<1x256xf32>
    %234 = arith.maximumf %232, %233 : vector<1x256xf32>
    %235 = vector.extract_strided_slice %225 {offsets = [6, 0], sizes = [1, 256], strides = [1, 1]} : vector<12x256xf32> to vector<1x256xf32>
    %236 = vector.extract_strided_slice %225 {offsets = [7, 0], sizes = [1, 256], strides = [1, 1]} : vector<12x256xf32> to vector<1x256xf32>
    %237 = arith.maximumf %235, %236 : vector<1x256xf32>
    %238 = vector.extract_strided_slice %225 {offsets = [8, 0], sizes = [1, 256], strides = [1, 1]} : vector<12x256xf32> to vector<1x256xf32>
    %239 = vector.extract_strided_slice %225 {offsets = [9, 0], sizes = [1, 256], strides = [1, 1]} : vector<12x256xf32> to vector<1x256xf32>
    %240 = arith.maximumf %238, %239 : vector<1x256xf32>
    %241 = vector.extract_strided_slice %225 {offsets = [10, 0], sizes = [1, 256], strides = [1, 1]} : vector<12x256xf32> to vector<1x256xf32>
    %242 = vector.extract_strided_slice %225 {offsets = [11, 0], sizes = [1, 256], strides = [1, 1]} : vector<12x256xf32> to vector<1x256xf32>
    %243 = arith.maximumf %241, %242 : vector<1x256xf32>
    %244 = tpu.concatenate %123, %126, %129, %132, %135, %138, %144, %147, %150, %153, %156, %159, %165, %168, %171, %174 in 0 : vector<1x256xf32>, vector<1x256xf32>, vector<1x256xf32>, vector<1x256xf32>, vector<1x256xf32>, vector<1x256xf32>, vector<1x256xf32>, vector<1x256xf32>, vector<1x256xf32>, vector<1x256xf32>, vector<1x256xf32>, vector<1x256xf32>, vector<1x256xf32>, vector<1x256xf32>, vector<1x256xf32>, vector<1x256xf32> -> vector<16x256xf32>
    %245 = tpu.concatenate %177, %180, %186, %189, %192, %195, %198, %201, %207, %210, %213, %216, %219, %222, %228, %231 in 0 : vector<1x256xf32>, vector<1x256xf32>, vector<1x256xf32>, vector<1x256xf32>, vector<1x256xf32>, vector<1x256xf32>, vector<1x256xf32>, vector<1x256xf32>, vector<1x256xf32>, vector<1x256xf32>, vector<1x256xf32>, vector<1x256xf32>, vector<1x256xf32>, vector<1x256xf32>, vector<1x256xf32>, vector<1x256xf32> -> vector<16x256xf32>
    %246 = tpu.concatenate %234, %237, %240, %243 in 0 : vector<1x256xf32>, vector<1x256xf32>, vector<1x256xf32>, vector<1x256xf32> -> vector<4x256xf32>
    %247 = tpu.concatenate %244, %245, %246 in 0 : vector<16x256xf32>, vector<16x256xf32>, vector<4x256xf32> -> vector<36x256xf32>
    %248 = vector.broadcast %111 : vector<1x256xf32> to vector<36x256xf32>
    %249 = arith.addf %247, %248 : vector<36x256xf32>
    %cst_158 = arith.constant 0.000000e+00 : f32
    %250 = vector.broadcast %cst_158 : f32 to vector<36x256xf32>
    %251 = arith.cmpf oge, %249, %250 : vector<36x256xf32>
    %cst_159 = arith.constant 0.00999999977 : f32
    %252 = vector.broadcast %cst_159 : f32 to vector<36x256xf32>
    %253 = arith.mulf %252, %249 : vector<36x256xf32>
    %254 = arith.select %251, %249, %253 : vector<36x256xi1>, vector<36x256xf32>
    %255 = vector.extract_strided_slice %254 {offsets = [0, 0], sizes = [4, 256], strides = [1, 1]} : vector<36x256xf32> to vector<4x256xf32>
    %256 = vector.extract_strided_slice %254 {offsets = [1, 0], sizes = [4, 256], strides = [1, 1]} : vector<36x256xf32> to vector<4x256xf32>
    %257 = vector.extract_strided_slice %254 {offsets = [2, 0], sizes = [4, 256], strides = [1, 1]} : vector<36x256xf32> to vector<4x256xf32>
    %258 = vector.extract_strided_slice %254 {offsets = [6, 0], sizes = [4, 256], strides = [1, 1]} : vector<36x256xf32> to vector<4x256xf32>
    %259 = vector.extract_strided_slice %254 {offsets = [7, 0], sizes = [4, 256], strides = [1, 1]} : vector<36x256xf32> to vector<4x256xf32>
    %260 = vector.extract_strided_slice %254 {offsets = [8, 0], sizes = [4, 256], strides = [1, 1]} : vector<36x256xf32> to vector<4x256xf32>
    %261 = vector.extract_strided_slice %254 {offsets = [12, 0], sizes = [4, 256], strides = [1, 1]} : vector<36x256xf32> to vector<4x256xf32>
    %262 = vector.extract_strided_slice %254 {offsets = [13, 0], sizes = [4, 256], strides = [1, 1]} : vector<36x256xf32> to vector<4x256xf32>
    %263 = vector.extract_strided_slice %254 {offsets = [14, 0], sizes = [4, 256], strides = [1, 1]} : vector<36x256xf32> to vector<4x256xf32>
    %264 = tpu.concatenate %255, %256, %257, %258, %259, %260, %261, %262, %263 in 1 : vector<4x256xf32>, vector<4x256xf32>, vector<4x256xf32>, vector<4x256xf32>, vector<4x256xf32>, vector<4x256xf32>, vector<4x256xf32>, vector<4x256xf32>, vector<4x256xf32> -> vector<4x2304xf32>
    %265 = vector.extract_strided_slice %254 {offsets = [6, 0], sizes = [4, 256], strides = [1, 1]} : vector<36x256xf32> to vector<4x256xf32>
    %266 = vector.extract_strided_slice %254 {offsets = [7, 0], sizes = [4, 256], strides = [1, 1]} : vector<36x256xf32> to vector<4x256xf32>
    %267 = vector.extract_strided_slice %254 {offsets = [8, 0], sizes = [4, 256], strides = [1, 1]} : vector<36x256xf32> to vector<4x256xf32>
    %268 = vector.extract_strided_slice %254 {offsets = [12, 0], sizes = [4, 256], strides = [1, 1]} : vector<36x256xf32> to vector<4x256xf32>
    %269 = vector.extract_strided_slice %254 {offsets = [13, 0], sizes = [4, 256], strides = [1, 1]} : vector<36x256xf32> to vector<4x256xf32>
    %270 = vector.extract_strided_slice %254 {offsets = [14, 0], sizes = [4, 256], strides = [1, 1]} : vector<36x256xf32> to vector<4x256xf32>
    %271 = vector.extract_strided_slice %254 {offsets = [18, 0], sizes = [4, 256], strides = [1, 1]} : vector<36x256xf32> to vector<4x256xf32>
    %272 = vector.extract_strided_slice %254 {offsets = [19, 0], sizes = [4, 256], strides = [1, 1]} : vector<36x256xf32> to vector<4x256xf32>
    %273 = vector.extract_strided_slice %254 {offsets = [20, 0], sizes = [4, 256], strides = [1, 1]} : vector<36x256xf32> to vector<4x256xf32>
    %274 = tpu.concatenate %265, %266, %267, %268, %269, %270, %271, %272, %273 in 1 : vector<4x256xf32>, vector<4x256xf32>, vector<4x256xf32>, vector<4x256xf32>, vector<4x256xf32>, vector<4x256xf32>, vector<4x256xf32>, vector<4x256xf32>, vector<4x256xf32> -> vector<4x2304xf32>
    %275 = vector.extract_strided_slice %254 {offsets = [12, 0], sizes = [4, 256], strides = [1, 1]} : vector<36x256xf32> to vector<4x256xf32>
    %276 = vector.extract_strided_slice %254 {offsets = [13, 0], sizes = [4, 256], strides = [1, 1]} : vector<36x256xf32> to vector<4x256xf32>
    %277 = vector.extract_strided_slice %254 {offsets = [14, 0], sizes = [4, 256], strides = [1, 1]} : vector<36x256xf32> to vector<4x256xf32>
    %278 = vector.extract_strided_slice %254 {offsets = [18, 0], sizes = [4, 256], strides = [1, 1]} : vector<36x256xf32> to vector<4x256xf32>
    %279 = vector.extract_strided_slice %254 {offsets = [19, 0], sizes = [4, 256], strides = [1, 1]} : vector<36x256xf32> to vector<4x256xf32>
    %280 = vector.extract_strided_slice %254 {offsets = [20, 0], sizes = [4, 256], strides = [1, 1]} : vector<36x256xf32> to vector<4x256xf32>
    %281 = vector.extract_strided_slice %254 {offsets = [24, 0], sizes = [4, 256], strides = [1, 1]} : vector<36x256xf32> to vector<4x256xf32>
    %282 = vector.extract_strided_slice %254 {offsets = [25, 0], sizes = [4, 256], strides = [1, 1]} : vector<36x256xf32> to vector<4x256xf32>
    %283 = vector.extract_strided_slice %254 {offsets = [26, 0], sizes = [4, 256], strides = [1, 1]} : vector<36x256xf32> to vector<4x256xf32>
    %284 = tpu.concatenate %275, %276, %277, %278, %279, %280, %281, %282, %283 in 1 : vector<4x256xf32>, vector<4x256xf32>, vector<4x256xf32>, vector<4x256xf32>, vector<4x256xf32>, vector<4x256xf32>, vector<4x256xf32>, vector<4x256xf32>, vector<4x256xf32> -> vector<4x2304xf32>
    %285 = vector.extract_strided_slice %254 {offsets = [18, 0], sizes = [4, 256], strides = [1, 1]} : vector<36x256xf32> to vector<4x256xf32>
    %286 = vector.extract_strided_slice %254 {offsets = [19, 0], sizes = [4, 256], strides = [1, 1]} : vector<36x256xf32> to vector<4x256xf32>
    %287 = vector.extract_strided_slice %254 {offsets = [20, 0], sizes = [4, 256], strides = [1, 1]} : vector<36x256xf32> to vector<4x256xf32>
    %288 = vector.extract_strided_slice %254 {offsets = [24, 0], sizes = [4, 256], strides = [1, 1]} : vector<36x256xf32> to vector<4x256xf32>
    %289 = vector.extract_strided_slice %254 {offsets = [25, 0], sizes = [4, 256], strides = [1, 1]} : vector<36x256xf32> to vector<4x256xf32>
    %290 = vector.extract_strided_slice %254 {offsets = [26, 0], sizes = [4, 256], strides = [1, 1]} : vector<36x256xf32> to vector<4x256xf32>
    %291 = vector.extract_strided_slice %254 {offsets = [30, 0], sizes = [4, 256], strides = [1, 1]} : vector<36x256xf32> to vector<4x256xf32>
    %292 = vector.extract_strided_slice %254 {offsets = [31, 0], sizes = [4, 256], strides = [1, 1]} : vector<36x256xf32> to vector<4x256xf32>
    %293 = vector.extract_strided_slice %254 {offsets = [32, 0], sizes = [4, 256], strides = [1, 1]} : vector<36x256xf32> to vector<4x256xf32>
    %294 = tpu.concatenate %285, %286, %287, %288, %289, %290, %291, %292, %293 in 1 : vector<4x256xf32>, vector<4x256xf32>, vector<4x256xf32>, vector<4x256xf32>, vector<4x256xf32>, vector<4x256xf32>, vector<4x256xf32>, vector<4x256xf32>, vector<4x256xf32> -> vector<4x2304xf32>
    %295 = tpu.concatenate %264, %274, %284, %294 in 0 : vector<4x2304xf32>, vector<4x2304xf32>, vector<4x2304xf32>, vector<4x2304xf32> -> vector<16x2304xf32>
    %c0_160 = arith.constant 0 : index
    %c0_161 = arith.constant 0 : index
    %296 = vector.load %arg5[%c0_160, %c0_161] : memref<1x128xf32, #tpu.memory_space<vmem>>, vector<1x128xf32>
    %297 = arith.truncf %295 : vector<16x2304xf32> to vector<16x2304xbf16>
    %c0_162 = arith.constant 0 : index
    %c0_163 = arith.constant 0 : index
    %298 = vector.load %arg4[%c0_162, %c0_163] : memref<2304x256xbf16, #tpu.memory_space<vmem>>, vector<2304x256xbf16>
    %cst_164 = arith.constant dense<0.000000e+00> : vector<16x256xf32>
    %299 = tpu.matmul %297, %298, %cst_164 {dimension_numbers = #tpu.dot_dimension_numbers<[1], [0], [0], [1], [0, 0, 1, 1], [], []>} : vector<16x2304xbf16>, vector<2304x256xbf16>, vector<16x256xf32> -> vector<16x256xf32>
    %300 = vector.extract_strided_slice %299 {offsets = [0, 0], sizes = [16, 128], strides = [1, 1]} : vector<16x256xf32> to vector<16x128xf32>
    %301 = vector.extract_strided_slice %299 {offsets = [0, 128], sizes = [16, 128], strides = [1, 1]} : vector<16x256xf32> to vector<16x128xf32>
    %302 = arith.maximumf %300, %301 : vector<16x128xf32>
    %303 = vector.extract_strided_slice %302 {offsets = [0, 0], sizes = [4, 128], strides = [1, 1]} : vector<16x128xf32> to vector<4x128xf32>
    %304 = vector.extract_strided_slice %302 {offsets = [4, 0], sizes = [4, 128], strides = [1, 1]} : vector<16x128xf32> to vector<4x128xf32>
    %305 = arith.maximumf %303, %304 : vector<4x128xf32>
    %306 = vector.extract_strided_slice %305 {offsets = [0, 0], sizes = [1, 128], strides = [1, 1]} : vector<4x128xf32> to vector<1x128xf32>
    %307 = vector.extract_strided_slice %305 {offsets = [1, 0], sizes = [1, 128], strides = [1, 1]} : vector<4x128xf32> to vector<1x128xf32>
    %308 = arith.maximumf %306, %307 : vector<1x128xf32>
    %309 = vector.extract_strided_slice %305 {offsets = [2, 0], sizes = [1, 128], strides = [1, 1]} : vector<4x128xf32> to vector<1x128xf32>
    %310 = vector.extract_strided_slice %305 {offsets = [3, 0], sizes = [1, 128], strides = [1, 1]} : vector<4x128xf32> to vector<1x128xf32>
    %311 = arith.maximumf %309, %310 : vector<1x128xf32>
    %312 = vector.extract_strided_slice %302 {offsets = [8, 0], sizes = [4, 128], strides = [1, 1]} : vector<16x128xf32> to vector<4x128xf32>
    %313 = vector.extract_strided_slice %302 {offsets = [12, 0], sizes = [4, 128], strides = [1, 1]} : vector<16x128xf32> to vector<4x128xf32>
    %314 = arith.maximumf %312, %313 : vector<4x128xf32>
    %315 = vector.extract_strided_slice %314 {offsets = [0, 0], sizes = [1, 128], strides = [1, 1]} : vector<4x128xf32> to vector<1x128xf32>
    %316 = vector.extract_strided_slice %314 {offsets = [1, 0], sizes = [1, 128], strides = [1, 1]} : vector<4x128xf32> to vector<1x128xf32>
    %317 = arith.maximumf %315, %316 : vector<1x128xf32>
    %318 = vector.extract_strided_slice %314 {offsets = [2, 0], sizes = [1, 128], strides = [1, 1]} : vector<4x128xf32> to vector<1x128xf32>
    %319 = vector.extract_strided_slice %314 {offsets = [3, 0], sizes = [1, 128], strides = [1, 1]} : vector<4x128xf32> to vector<1x128xf32>
    %320 = arith.maximumf %318, %319 : vector<1x128xf32>
    %321 = tpu.concatenate %308, %311, %317, %320 in 0 : vector<1x128xf32>, vector<1x128xf32>, vector<1x128xf32>, vector<1x128xf32> -> vector<4x128xf32>
    %322 = vector.broadcast %296 : vector<1x128xf32> to vector<4x128xf32>
    %323 = arith.addf %321, %322 : vector<4x128xf32>
    %cst_165 = arith.constant 0.000000e+00 : f32
    %324 = vector.broadcast %cst_165 : f32 to vector<4x128xf32>
    %325 = arith.cmpf oge, %323, %324 : vector<4x128xf32>
    %cst_166 = arith.constant 0.00999999977 : f32
    %326 = vector.broadcast %cst_166 : f32 to vector<4x128xf32>
    %327 = arith.mulf %326, %323 : vector<4x128xf32>
    %328 = arith.select %325, %323, %327 : vector<4x128xi1>, vector<4x128xf32>
    %c0_167 = arith.constant 0 : index
    %c0_168 = arith.constant 0 : index
    %329 = vector.load %arg7[%c0_167, %c0_168] : memref<1x128xf32, #tpu.memory_space<vmem>>, vector<1x128xf32>
    %330 = vector.extract_strided_slice %328 {offsets = [0, 0], sizes = [1, 128], strides = [1, 1]} : vector<4x128xf32> to vector<1x128xf32>
    %331 = arith.truncf %330 : vector<1x128xf32> to vector<1x128xbf16>
    %c0_169 = arith.constant 0 : index
    %c0_170 = arith.constant 0 : index
    %c0_171 = arith.constant 0 : index
    %332 = vector.load %arg6[%c0_169, %c0_170, %c0_171] : memref<4x128x128xbf16, #tpu.memory_space<vmem>>, vector<1x128x128xbf16>
    %333 = vector.shape_cast %332 : vector<1x128x128xbf16> to vector<128x128xbf16>
    %cst_172 = arith.constant dense<0.000000e+00> : vector<1x128xf32>
    %334 = tpu.matmul %331, %333, %cst_172 {dimension_numbers = #tpu.dot_dimension_numbers<[1], [0], [0], [1], [0, 0, 1, 1], [], []>} : vector<1x128xbf16>, vector<128x128xbf16>, vector<1x128xf32> -> vector<1x128xf32>
    %335 = arith.addf %329, %334 : vector<1x128xf32>
    %336 = vector.extract_strided_slice %328 {offsets = [1, 0], sizes = [1, 128], strides = [1, 1]} : vector<4x128xf32> to vector<1x128xf32>
    %337 = arith.truncf %336 : vector<1x128xf32> to vector<1x128xbf16>
    %c1_173 = arith.constant 1 : index
    %c0_174 = arith.constant 0 : index
    %c0_175 = arith.constant 0 : index
    %338 = vector.load %arg6[%c1_173, %c0_174, %c0_175] : memref<4x128x128xbf16, #tpu.memory_space<vmem>>, vector<1x128x128xbf16>
    %339 = vector.shape_cast %338 : vector<1x128x128xbf16> to vector<128x128xbf16>
    %cst_176 = arith.constant dense<0.000000e+00> : vector<1x128xf32>
    %340 = tpu.matmul %337, %339, %cst_176 {dimension_numbers = #tpu.dot_dimension_numbers<[1], [0], [0], [1], [0, 0, 1, 1], [], []>} : vector<1x128xbf16>, vector<128x128xbf16>, vector<1x128xf32> -> vector<1x128xf32>
    %341 = arith.addf %335, %340 : vector<1x128xf32>
    %342 = vector.extract_strided_slice %328 {offsets = [2, 0], sizes = [1, 128], strides = [1, 1]} : vector<4x128xf32> to vector<1x128xf32>
    %343 = arith.truncf %342 : vector<1x128xf32> to vector<1x128xbf16>
    %c2_177 = arith.constant 2 : index
    %c0_178 = arith.constant 0 : index
    %c0_179 = arith.constant 0 : index
    %344 = vector.load %arg6[%c2_177, %c0_178, %c0_179] : memref<4x128x128xbf16, #tpu.memory_space<vmem>>, vector<1x128x128xbf16>
    %345 = vector.shape_cast %344 : vector<1x128x128xbf16> to vector<128x128xbf16>
    %cst_180 = arith.constant dense<0.000000e+00> : vector<1x128xf32>
    %346 = tpu.matmul %343, %345, %cst_180 {dimension_numbers = #tpu.dot_dimension_numbers<[1], [0], [0], [1], [0, 0, 1, 1], [], []>} : vector<1x128xbf16>, vector<128x128xbf16>, vector<1x128xf32> -> vector<1x128xf32>
    %347 = arith.addf %341, %346 : vector<1x128xf32>
    %348 = vector.extract_strided_slice %328 {offsets = [3, 0], sizes = [1, 128], strides = [1, 1]} : vector<4x128xf32> to vector<1x128xf32>
    %349 = arith.truncf %348 : vector<1x128xf32> to vector<1x128xbf16>
    %c3_181 = arith.constant 3 : index
    %c0_182 = arith.constant 0 : index
    %c0_183 = arith.constant 0 : index
    %350 = vector.load %arg6[%c3_181, %c0_182, %c0_183] : memref<4x128x128xbf16, #tpu.memory_space<vmem>>, vector<1x128x128xbf16>
    %351 = vector.shape_cast %350 : vector<1x128x128xbf16> to vector<128x128xbf16>
    %cst_184 = arith.constant dense<0.000000e+00> : vector<1x128xf32>
    %352 = tpu.matmul %349, %351, %cst_184 {dimension_numbers = #tpu.dot_dimension_numbers<[1], [0], [0], [1], [0, 0, 1, 1], [], []>} : vector<1x128xbf16>, vector<128x128xbf16>, vector<1x128xf32> -> vector<1x128xf32>
    %353 = arith.addf %347, %352 : vector<1x128xf32>
    %cst_185 = arith.constant 0.000000e+00 : f32
    %354 = vector.broadcast %cst_185 : f32 to vector<1x128xf32>
    %355 = arith.cmpf oge, %353, %354 : vector<1x128xf32>
    %cst_186 = arith.constant 0.00999999977 : f32
    %356 = vector.broadcast %cst_186 : f32 to vector<1x128xf32>
    %357 = arith.mulf %356, %353 : vector<1x128xf32>
    %358 = arith.select %355, %353, %357 : vector<1x128xi1>, vector<1x128xf32>
    %c0_187 = arith.constant 0 : index
    %c0_188 = arith.constant 0 : index
    %359 = vector.load %arg8[%c0_187, %c0_188] : memref<1x128xf32, #tpu.memory_space<vmem>>, vector<1x128xf32>
    %360 = arith.mulf %358, %359 : vector<1x128xf32>
    %c0_189 = arith.constant 0 : index
    %c0_190 = arith.constant 0 : index
    %361 = vector.load %arg9[%c0_189, %c0_190] : memref<1x128xf32, #tpu.memory_space<vmem>>, vector<1x128xf32>
    %362 = arith.addf %360, %361 : vector<1x128xf32>
    %363 = arith.truncf %362 : vector<1x128xf32> to vector<1x128xbf16>
    %c0_191 = arith.constant 0 : index
    %c0_192 = arith.constant 0 : index
    %364 = vector.load %arg10[%c0_191, %c0_192] : memref<128x128xbf16, #tpu.memory_space<vmem>>, vector<128x128xbf16>
    %cst_193 = arith.constant dense<0.000000e+00> : vector<1x128xf32>
    %365 = tpu.matmul %363, %364, %cst_193 {dimension_numbers = #tpu.dot_dimension_numbers<[1], [0], [0], [1], [0, 0, 1, 1], [], []>} : vector<1x128xbf16>, vector<128x128xbf16>, vector<1x128xf32> -> vector<1x128xf32>
    %c0_194 = arith.constant 0 : index
    %c0_195 = arith.constant 0 : index
    %366 = vector.load %arg11[%c0_194, %c0_195] : memref<1x128xf32, #tpu.memory_space<vmem>>, vector<1x128xf32>
    %367 = arith.addf %365, %366 : vector<1x128xf32>
    %c0_196 = arith.constant 0 : index
    %c0_197 = arith.constant 0 : index
    %c0_198 = arith.constant 0 : index
    %368 = vector.load %arg12[%c0_196, %c0_197, %c0_198] : memref<1x1x128xf32, #tpu.memory_space<vmem>>, vector<1x1x128xf32>
    %369 = vector.shape_cast %368 : vector<1x1x128xf32> to vector<1x128xf32>
    %370 = vector.shape_cast %367 : vector<1x128xf32> to vector<1x1x128xf32>
    tpu.vector_store %arg12[%c0_196, %c0_197, %c0_198], %370 {strides = array<i32>} : memref<1x1x128xf32, #tpu.memory_space<vmem>>, vector<1x1x128xf32>,
    return
  }
  func.func @transform_0(%arg0: i32) -> (i32, i32, i32, i32) {
    %c0_i32 = arith.constant 0 : i32
    %c0_i32_0 = arith.constant 0 : i32
    %c0_i32_1 = arith.constant 0 : i32
    %c0_i32_2 = arith.constant 0 : i32
    return %arg0, %c0_i32, %c0_i32_0, %c0_i32_1 : i32, i32, i32, i32
  }
  func.func @transform_1(%arg0: i32) -> (i32, i32) {
    %c0_i32 = arith.constant 0 : i32
    %c0_i32_0 = arith.constant 0 : i32
    %c0_i32_1 = arith.constant 0 : i32
    return %c0_i32, %c0_i32_0 : i32, i32
  }
  func.func @transform_2(%arg0: i32) -> (i32, i32) {
    %c0_i32 = arith.constant 0 : i32
    %c0_i32_0 = arith.constant 0 : i32
    %c0_i32_1 = arith.constant 0 : i32
    return %c0_i32, %c0_i32_0 : i32, i32
  }
  func.func @transform_3(%arg0: i32) -> (i32, i32) {
    %c0_i32 = arith.constant 0 : i32
    %c0_i32_0 = arith.constant 0 : i32
    %c0_i32_1 = arith.constant 0 : i32
    return %c0_i32, %c0_i32_0 : i32, i32
  }
  func.func @transform_4(%arg0: i32) -> (i32, i32) {
    %c0_i32 = arith.constant 0 : i32
    %c0_i32_0 = arith.constant 0 : i32
    %c0_i32_1 = arith.constant 0 : i32
    return %c0_i32, %c0_i32_0 : i32, i32
  }
  func.func @transform_5(%arg0: i32) -> (i32, i32, i32) {
    %c0_i32 = arith.constant 0 : i32
    %c0_i32_0 = arith.constant 0 : i32
    %c0_i32_1 = arith.constant 0 : i32
    %c0_i32_2 = arith.constant 0 : i32
    return %c0_i32, %c0_i32_0, %c0_i32_1 : i32, i32, i32
  }
  func.func @transform_6(%arg0: i32) -> (i32, i32) {
    %c0_i32 = arith.constant 0 : i32
    %c0_i32_0 = arith.constant 0 : i32
    %c0_i32_1 = arith.constant 0 : i32
    return %c0_i32, %c0_i32_0 : i32, i32
  }
  func.func @transform_7(%arg0: i32) -> (i32, i32) {
    %c0_i32 = arith.constant 0 : i32
    %c0_i32_0 = arith.constant 0 : i32
    %c0_i32_1 = arith.constant 0 : i32
    return %c0_i32, %c0_i32_0 : i32, i32
  }
  func.func @transform_8(%arg0: i32) -> (i32, i32) {
    %c0_i32 = arith.constant 0 : i32
    %c0_i32_0 = arith.constant 0 : i32
    %c0_i32_1 = arith.constant 0 : i32
    return %c0_i32, %c0_i32_0 : i32, i32
  }
  func.func @transform_9(%arg0: i32) -> (i32, i32) {
    %c0_i32 = arith.constant 0 : i32
    %c0_i32_0 = arith.constant 0 : i32
    %c0_i32_1 = arith.constant 0 : i32
    return %c0_i32, %c0_i32_0 : i32, i32
  }
  func.func @transform_10(%arg0: i32) -> (i32, i32) {
    %c0_i32 = arith.constant 0 : i32
    %c0_i32_0 = arith.constant 0 : i32
    %c0_i32_1 = arith.constant 0 : i32
    return %c0_i32, %c0_i32_0 : i32, i32
  }
  func.func @transform_11(%arg0: i32) -> (i32, i32, i32) {
    %c0_i32 = arith.constant 0 : i32
    %c0_i32_0 = arith.constant 0 : i32
    %c0_i32_1 = arith.constant 0 : i32
    return %arg0, %c0_i32, %c0_i32_0 : i32, i32, i32
  }
}

</mosaic_0001>

<llo_original>
// kernel: cnn_forward.1
$region0: #{cnn_forward.1}
  #allocation0 [shape = 'u32[]', space=smem, size = 0x4, offset = 0x4, fixed_abs, tag = 'smem constant byte address 0x4 - core index']
  #allocation1 [shape = 'u32[72,128]{1,0:T(1,128)}', space=vmem, size = 0x9000, scoped, tag = 'internal scratch']
  %s0 = inlined_call_operand.vmem [shape: f32[2,14,14,42], index: 0, kind: input, shape index: {}]
  %s1 = inlined_call_operand.vmem [shape: bf16[378,512], index: 1, kind: input, shape index: {}]
  %s2 = inlined_call_operand.vmem [shape: f32[1,256], index: 2, kind: input, shape index: {}]
  %s3 = inlined_call_operand.vmem [shape: bf16[2304,256], index: 3, kind: input, shape index: {}]
  %s4 = inlined_call_operand.vmem [shape: f32[1,128], index: 4, kind: input, shape index: {}]
  %s5 = inlined_call_operand.vmem [shape: bf16[4,128,128], index: 5, kind: input, shape index: {}]
  %s6 = inlined_call_operand.vmem [shape: f32[1,128], index: 6, kind: input, shape index: {}]
  %s7 = inlined_call_operand.vmem [shape: f32[1,128], index: 7, kind: input, shape index: {}]
  %s8 = inlined_call_operand.vmem [shape: f32[1,128], index: 8, kind: input, shape index: {}]
  %s9 = inlined_call_operand.vmem [shape: bf16[128,128], index: 9, kind: input, shape index: {}]
  %s10 = inlined_call_operand.vmem [shape: f32[1,128], index: 10, kind: input, shape index: {}]
  %s11 = inlined_call_operand.hbm [shape: f32[2,1,128], index: 11, kind: output, shape index: {}]
  %s12 = sld [smem:[#allocation0]]
  $region77: #{cnn_forward.1} parent=0
    _
  %s14 = ssub.s32 1, %s12
  %s15 = scalar_select 0, %s14, %s12
  $region1: #{cnn_forward.1} parent=0
    #allocation2 [shape = 'u8[1024]{0}', space=vmem, size = 0x400, scoped, tag = 'output window, operand 0']
    #allocation3 [shape = 's32[2]{0}', space=sflag, size = 0x8, scoped, tag = 'scoped memory for cnn_forward.1']
    %16 = vsyncpa [#allocation3], 0
    %s17 = scalar_lea.sflag [#allocation3], 1
    %18 = vsyncpa %s17, 0
    loop: start=0, step=1, limit=4
    $region2: #{cnn_forward.1} parent=1 // loop_pre_header
      _
    $region3: #{cnn_forward.1} parent=1 // loop_header
      %s20 = sphi 0, %s24
      %p21 = scmp.ge.s32.totalorder %s20, 4
      %s30 = sphi 0, %s32
      %s33 = sphi 0, %s30
      %s34 = sphi 0, %s33
      %s50 = sphi 0, %s34
      %s54 = sphi 0, %s54
      %s56 = sphi 0, %s54
      %s57 = sphi 0, %s56
      %s71 = sphi 0, %s57
      %s75 = sphi 0, %s75
      %s77 = sphi 0, %s75
      %s78 = sphi 0, %s77
      %s92 = sphi 0, %s78
      %s96 = sphi 0, %s96
      %s98 = sphi 0, %s96
      %s99 = sphi 0, %s98
      %s113 = sphi 0, %s99
      %s117 = sphi 0, %s117
      %s119 = sphi 0, %s117
      %s120 = sphi 0, %s119
      %s134 = sphi 0, %s120
      %s138 = sphi 0, %s138
      %s140 = sphi 0, %s138
      %s141 = sphi 0, %s140
      %s155 = sphi 0, %s141
      %s159 = sphi 0, %s159
      %s161 = sphi 0, %s159
      %s162 = sphi 0, %s161
      %s176 = sphi 0, %s162
      %s180 = sphi 0, %s180
      %s182 = sphi 0, %s180
      %s183 = sphi 0, %s182
      %s197 = sphi 0, %s183
      %s201 = sphi 0, %s201
      %s203 = sphi 0, %s201
      %s204 = sphi 0, %s203
      %s218 = sphi 0, %s204
      %s222 = sphi 0, %s222
      %s224 = sphi 0, %s222
      %s225 = sphi 0, %s224
      %s239 = sphi 0, %s225
      %s243 = sphi 0, %s243
      %s245 = sphi 0, %s243
      %s246 = sphi 0, %s245
      %s260 = sphi 0, %s246
      %s266 = sphi 0, %s268
      %s269 = sphi 0, %s266
      %s270 = sphi 0, %s269
      %s286 = sphi 0, %s270
    $region4: #{cnn_forward.1} parent=1 // loop_header_branch
      %23 = sbr.rel (%p21) target = $region8
    $region5: #{cnn_forward.1} parent=1 // loop_body
      %s25 = ssub.s32 %s20, 1
      %s26 = ssub.s32 %s20, 2
      %s27 = sadd.s32 %s20, 1
      %s28 = ssub.s32 %s20, %s27
      %p29 = scmp.eq.s32.totalorder %s28, 0
      %s31 = sadd.s32 %s30, 1
      %s32 = scalar_select %p29, %s30, %s31
      %p35 = pneg %p29
      %p36 = scmp.eq.s32.totalorder %s20, 1
      %p37 = por %p35, %p36
      %p38 = scmp.ne.s32.totalorder %s30, %s33
      %p39 = scmp.eq.s32.totalorder %s20, 0
      %p40 = por %p38, %p39
      %p41 = scmp.ne.s32.totalorder %s30, %s33
      %p42 = scmp.eq.s32.totalorder %s25, 1
      %p43 = por %p41, %p42
      %p44 = scmp.ne.s32.totalorder %s33, %s34
      %p45 = scmp.eq.s32.totalorder %s25, 0
      %p46 = por %p44, %p45
      %p47 = scmp.ne.s32.totalorder %s33, %s34
      %p48 = scmp.eq.s32.totalorder %s26, 1
      %p49 = por %p47, %p48
      %p51 = scmp.ne.s32.totalorder %s34, %s50
      %p52 = scmp.eq.s32.totalorder %s26, 0
      %p53 = por %p51, %p52
      %s55 = sadd.s32 %s54, 1
      %p58 = scmp.eq.s32.totalorder %s20, 1
      %p59 = scmp.ne.s32.totalorder %s54, %s56
      %p60 = scmp.eq.s32.totalorder %s20, 0
      %p61 = por %p59, %p60
      %p62 = scmp.ne.s32.totalorder %s54, %s56
      %p63 = scmp.eq.s32.totalorder %s25, 1
      %p64 = por %p62, %p63
      %p65 = scmp.ne.s32.totalorder %s56, %s57
      %p66 = scmp.eq.s32.totalorder %s25, 0
      %p67 = por %p65, %p66
      %p68 = scmp.ne.s32.totalorder %s56, %s57
      %p69 = scmp.eq.s32.totalorder %s26, 1
      %p70 = por %p68, %p69
      %p72 = scmp.ne.s32.totalorder %s57, %s71
      %p73 = scmp.eq.s32.totalorder %s26, 0
      %p74 = por %p72, %p73
      %s76 = sadd.s32 %s75, 1
      %p79 = scmp.eq.s32.totalorder %s20, 1
      %p80 = scmp.ne.s32.totalorder %s75, %s77
      %p81 = scmp.eq.s32.totalorder %s20, 0
      %p82 = por %p80, %p81
      %p83 = scmp.ne.s32.totalorder %s75, %s77
      %p84 = scmp.eq.s32.totalorder %s25, 1
      %p85 = por %p83, %p84
      %p86 = scmp.ne.s32.totalorder %s77, %s78
      %p87 = scmp.eq.s32.totalorder %s25, 0
      %p88 = por %p86, %p87
      %p89 = scmp.ne.s32.totalorder %s77, %s78
      %p90 = scmp.eq.s32.totalorder %s26, 1
      %p91 = por %p89, %p90
      %p93 = scmp.ne.s32.totalorder %s78, %s92
      %p94 = scmp.eq.s32.totalorder %s26, 0
      %p95 = por %p93, %p94
      %s97 = sadd.s32 %s96, 1
      %p100 = scmp.eq.s32.totalorder %s20, 1
      %p101 = scmp.ne.s32.totalorder %s96, %s98
      %p102 = scmp.eq.s32.totalorder %s20, 0
      %p103 = por %p101, %p102
      %p104 = scmp.ne.s32.totalorder %s96, %s98
      %p105 = scmp.eq.s32.totalorder %s25, 1
      %p106 = por %p104, %p105
      %p107 = scmp.ne.s32.totalorder %s98, %s99
      %p108 = scmp.eq.s32.totalorder %s25, 0
      %p109 = por %p107, %p108
      %p110 = scmp.ne.s32.totalorder %s98, %s99
      %p111 = scmp.eq.s32.totalorder %s26, 1
      %p112 = por %p110, %p111
      %p114 = scmp.ne.s32.totalorder %s99, %s113
      %p115 = scmp.eq.s32.totalorder %s26, 0
      %p116 = por %p114, %p115
      %s118 = sadd.s32 %s117, 1
      %p121 = scmp.eq.s32.totalorder %s20, 1
      %p122 = scmp.ne.s32.totalorder %s117, %s119
      %p123 = scmp.eq.s32.totalorder %s20, 0
      %p124 = por %p122, %p123
      %p125 = scmp.ne.s32.totalorder %s117, %s119
      %p126 = scmp.eq.s32.totalorder %s25, 1
      %p127 = por %p125, %p126
      %p128 = scmp.ne.s32.totalorder %s119, %s120
      %p129 = scmp.eq.s32.totalorder %s25, 0
      %p130 = por %p128, %p129
      %p131 = scmp.ne.s32.totalorder %s119, %s120
      %p132 = scmp.eq.s32.totalorder %s26, 1
      %p133 = por %p131, %p132
      %p135 = scmp.ne.s32.totalorder %s120, %s134
      %p136 = scmp.eq.s32.totalorder %s26, 0
      %p137 = por %p135, %p136
      %s139 = sadd.s32 %s138, 1
      %p142 = scmp.eq.s32.totalorder %s20, 1
      %p143 = scmp.ne.s32.totalorder %s138, %s140
      %p144 = scmp.eq.s32.totalorder %s20, 0
      %p145 = por %p143, %p144
      %p146 = scmp.ne.s32.totalorder %s138, %s140
      %p147 = scmp.eq.s32.totalorder %s25, 1
      %p148 = por %p146, %p147
      %p149 = scmp.ne.s32.totalorder %s140, %s141
      %p150 = scmp.eq.s32.totalorder %s25, 0
      %p151 = por %p149, %p150
      %p152 = scmp.ne.s32.totalorder %s140, %s141
      %p153 = scmp.eq.s32.totalorder %s26, 1
      %p154 = por %p152, %p153
      %p156 = scmp.ne.s32.totalorder %s141, %s155
      %p157 = scmp.eq.s32.totalorder %s26, 0
      %p158 = por %p156, %p157
      %s160 = sadd.s32 %s159, 1
      %p163 = scmp.eq.s32.totalorder %s20, 1
      %p164 = scmp.ne.s32.totalorder %s159, %s161
      %p165 = scmp.eq.s32.totalorder %s20, 0
      %p166 = por %p164, %p165
      %p167 = scmp.ne.s32.totalorder %s159, %s161
      %p168 = scmp.eq.s32.totalorder %s25, 1
      %p169 = por %p167, %p168
      %p170 = scmp.ne.s32.totalorder %s161, %s162
      %p171 = scmp.eq.s32.totalorder %s25, 0
      %p172 = por %p170, %p171
      %p173 = scmp.ne.s32.totalorder %s161, %s162
      %p174 = scmp.eq.s32.totalorder %s26, 1
      %p175 = por %p173, %p174
      %p177 = scmp.ne.s32.totalorder %s162, %s176
      %p178 = scmp.eq.s32.totalorder %s26, 0
      %p179 = por %p177, %p178
      %s181 = sadd.s32 %s180, 1
      %p184 = scmp.eq.s32.totalorder %s20, 1
      %p185 = scmp.ne.s32.totalorder %s180, %s182
      %p186 = scmp.eq.s32.totalorder %s20, 0
      %p187 = por %p185, %p186
      %p188 = scmp.ne.s32.totalorder %s180, %s182
      %p189 = scmp.eq.s32.totalorder %s25, 1
      %p190 = por %p188, %p189
      %p191 = scmp.ne.s32.totalorder %s182, %s183
      %p192 = scmp.eq.s32.totalorder %s25, 0
      %p193 = por %p191, %p192
      %p194 = scmp.ne.s32.totalorder %s182, %s183
      %p195 = scmp.eq.s32.totalorder %s26, 1
      %p196 = por %p194, %p195
      %p198 = scmp.ne.s32.totalorder %s183, %s197
      %p199 = scmp.eq.s32.totalorder %s26, 0
      %p200 = por %p198, %p199
      %s202 = sadd.s32 %s201, 1
      %p205 = scmp.eq.s32.totalorder %s20, 1
      %p206 = scmp.ne.s32.totalorder %s201, %s203
      %p207 = scmp.eq.s32.totalorder %s20, 0
      %p208 = por %p206, %p207
      %p209 = scmp.ne.s32.totalorder %s201, %s203
      %p210 = scmp.eq.s32.totalorder %s25, 1
      %p211 = por %p209, %p210
      %p212 = scmp.ne.s32.totalorder %s203, %s204
      %p213 = scmp.eq.s32.totalorder %s25, 0
      %p214 = por %p212, %p213
      %p215 = scmp.ne.s32.totalorder %s203, %s204
      %p216 = scmp.eq.s32.totalorder %s26, 1
      %p217 = por %p215, %p216
      %p219 = scmp.ne.s32.totalorder %s204, %s218
      %p220 = scmp.eq.s32.totalorder %s26, 0
      %p221 = por %p219, %p220
      %s223 = sadd.s32 %s222, 1
      %p226 = scmp.eq.s32.totalorder %s20, 1
      %p227 = scmp.ne.s32.totalorder %s222, %s224
      %p228 = scmp.eq.s32.totalorder %s20, 0
      %p229 = por %p227, %p228
      %p230 = scmp.ne.s32.totalorder %s222, %s224
      %p231 = scmp.eq.s32.totalorder %s25, 1
      %p232 = por %p230, %p231
      %p233 = scmp.ne.s32.totalorder %s224, %s225
      %p234 = scmp.eq.s32.totalorder %s25, 0
      %p235 = por %p233, %p234
      %p236 = scmp.ne.s32.totalorder %s224, %s225
      %p237 = scmp.eq.s32.totalorder %s26, 1
      %p238 = por %p236, %p237
      %p240 = scmp.ne.s32.totalorder %s225, %s239
      %p241 = scmp.eq.s32.totalorder %s26, 0
      %p242 = por %p240, %p241
      %s244 = sadd.s32 %s243, 1
      %p247 = scmp.eq.s32.totalorder %s20, 1
      %p248 = scmp.ne.s32.totalorder %s243, %s245
      %p249 = scmp.eq.s32.totalorder %s20, 0
      %p250 = por %p248, %p249
      %p251 = scmp.ne.s32.totalorder %s243, %s245
      %p252 = scmp.eq.s32.totalorder %s25, 1
      %p253 = por %p251, %p252
      %p254 = scmp.ne.s32.totalorder %s245, %s246
      %p255 = scmp.eq.s32.totalorder %s25, 0
      %p256 = por %p254, %p255
      %p257 = scmp.ne.s32.totalorder %s245, %s246
      %p258 = scmp.eq.s32.totalorder %s26, 1
      %p259 = por %p257, %p258
      %p261 = scmp.ne.s32.totalorder %s246, %s260
      %p262 = scmp.eq.s32.totalorder %s26, 0
      %p263 = por %p261, %p262
      %s264 = ssub.s32 %s20, %s27
      %p265 = scmp.eq.s32.totalorder %s264, 0
      %s267 = sadd.s32 %s266, 1
      %s268 = scalar_select %p265, %s266, %s267
      %p271 = pneg %p265
      %p272 = scmp.eq.s32.totalorder %s20, 1
      %p273 = por %p271, %p272
      %p274 = scmp.ne.s32.totalorder %s266, %s269
      %p275 = scmp.eq.s32.totalorder %s20, 0
      %p276 = por %p274, %p275
      %p277 = scmp.ne.s32.totalorder %s266, %s269
      %p278 = scmp.eq.s32.totalorder %s25, 1
      %p279 = por %p277, %p278
      %p280 = scmp.ne.s32.totalorder %s269, %s270
      %p281 = scmp.eq.s32.totalorder %s25, 0
      %p282 = por %p280, %p281
      %p283 = scmp.ne.s32.totalorder %s269, %s270
      %p284 = scmp.eq.s32.totalorder %s26, 1
      %p285 = por %p283, %p284
      %p287 = scmp.ne.s32.totalorder %s270, %s286
      %p288 = scmp.eq.s32.totalorder %s26, 0
      %p289 = por %p287, %p288
      %p290 = scmp.le.s32.totalorder 1, %s20
      %p291 = scmp.lt.s32.totalorder %s20, 3
      %p292 = pnand %p290, %p291
      %p293 = pneg %p292
      // Predicated region
      $region9: #{cnn_forward.1} parent=5 // pred_check
        _
      $region10: #{cnn_forward.1} parent=5 // pred_check_branch
        %295 = sbr.rel (%p292) target = $region12
      $region11: #{cnn_forward.1} parent=5 // pred_region
        %s296 = ssub.s32 %s20, 1
        // Predicated region
        $region13: #{cnn_forward.1} parent=11 // pred_check
          %p297 = pneg %p67
        $region14: #{cnn_forward.1} parent=11 // pred_check_branch
          %299 = sbr.rel (%p297) target = $region16
        $region15: #{cnn_forward.1} parent=11 // pred_region
          _
        $region16: #{cnn_forward.1} parent=11 // pred_fallthru
          _
        // Predicated region
        $region17: #{cnn_forward.1} parent=11 // pred_check
          %p300 = pneg %p88
        $region18: #{cnn_forward.1} parent=11 // pred_check_branch
          %302 = sbr.rel (%p300) target = $region20
        $region19: #{cnn_forward.1} parent=11 // pred_region
          _
        $region20: #{cnn_forward.1} parent=11 // pred_fallthru
          _
        // Predicated region
        $region21: #{cnn_forward.1} parent=11 // pred_check
          %p303 = pneg %p109
        $region22: #{cnn_forward.1} parent=11 // pred_check_branch
          %305 = sbr.rel (%p303) target = $region24
        $region23: #{cnn_forward.1} parent=11 // pred_region
          _
        $region24: #{cnn_forward.1} parent=11 // pred_fallthru
          _
        // Predicated region
        $region25: #{cnn_forward.1} parent=11 // pred_check
          %p306 = pneg %p130
        $region26: #{cnn_forward.1} parent=11 // pred_check_branch
          %308 = sbr.rel (%p306) target = $region28
        $region27: #{cnn_forward.1} parent=11 // pred_region
          _
        $region28: #{cnn_forward.1} parent=11 // pred_fallthru
          _
        // Predicated region
        $region29: #{cnn_forward.1} parent=11 // pred_check
          %p309 = pneg %p151
        $region30: #{cnn_forward.1} parent=11 // pred_check_branch
          %311 = sbr.rel (%p309) target = $region32
        $region31: #{cnn_forward.1} parent=11 // pred_region
          _
        $region32: #{cnn_forward.1} parent=11 // pred_fallthru
          _
        // Predicated region
        $region33: #{cnn_forward.1} parent=11 // pred_check
          %p312 = pneg %p172
        $region34: #{cnn_forward.1} parent=11 // pred_check_branch
          %314 = sbr.rel (%p312) target = $region36
        $region35: #{cnn_forward.1} parent=11 // pred_region
          _
        $region36: #{cnn_forward.1} parent=11 // pred_fallthru
          _
        // Predicated region
        $region37: #{cnn_forward.1} parent=11 // pred_check
          %p315 = pneg %p193
        $region38: #{cnn_forward.1} parent=11 // pred_check_branch
          %317 = sbr.rel (%p315) target = $region40
        $region39: #{cnn_forward.1} parent=11 // pred_region
          _
        $region40: #{cnn_forward.1} parent=11 // pred_fallthru
          _
        // Predicated region
        $region41: #{cnn_forward.1} parent=11 // pred_check
          %p318 = pneg %p214
        $region42: #{cnn_forward.1} parent=11 // pred_check_branch
          %320 = sbr.rel (%p318) target = $region44
        $region43: #{cnn_forward.1} parent=11 // pred_region
          _
        $region44: #{cnn_forward.1} parent=11 // pred_fallthru
          _
        // Predicated region
        $region45: #{cnn_forward.1} parent=11 // pred_check
          %p321 = pneg %p235
        $region46: #{cnn_forward.1} parent=11 // pred_check_branch
          %323 = sbr.rel (%p321) target = $region48
        $region47: #{cnn_forward.1} parent=11 // pred_region
          _
        $region48: #{cnn_forward.1} parent=11 // pred_fallthru
          _
        // Predicated region
        $region49: #{cnn_forward.1} parent=11 // pred_check
          %p324 = pneg %p256
        $region50: #{cnn_forward.1} parent=11 // pred_check_branch
          %326 = sbr.rel (%p324) target = $region52
        $region51: #{cnn_forward.1} parent=11 // pred_region
          _
        $region52: #{cnn_forward.1} parent=11 // pred_fallthru
          _
      $region12: #{cnn_forward.1} parent=5 // pred_fallthru
        _
      %p327 = scmp.lt.s32.totalorder %s20, 2
      // Predicated region
      $region53: #{cnn_forward.1} parent=5 // pred_check
        %p328 = pneg %p327
      $region54: #{cnn_forward.1} parent=5 // pred_check_branch
        %330 = sbr.rel (%p328) target = $region56
      $region55: #{cnn_forward.1} parent=5 // pred_region
        // Predicated region
        $region57: #{cnn_forward.1} parent=55 // pred_check
          %p331 = pneg %p40
        $region58: #{cnn_forward.1} parent=55 // pred_check_branch
          %333 = sbr.rel (%p331) target = $region60
        $region59: #{cnn_forward.1} parent=55 // pred_region
          %p334 = scmp.lt.s32.totalorder %s20, 1
          %s335 = scalar_select %p334, %s20, 1
          %s336 = smul.addr %s335, 28
          %s337 = smul.addr %s336, 8
          %s338 = scalar_lea.vmem %s0, %s337
        $region60: #{cnn_forward.1} parent=55 // pred_fallthru
          _
      $region56: #{cnn_forward.1} parent=5 // pred_fallthru
        _
      %p339 = scmp.le.s32.totalorder 1, %s20
      %p340 = scmp.lt.s32.totalorder %s20, 3
      %p341 = pnand %p339, %p340
      %p342 = pneg %p341
      // Predicated region
      $region61: #{cnn_forward.1} parent=5 // pred_check
        _
      $region62: #{cnn_forward.1} parent=5 // pred_check_branch
        %344 = sbr.rel (%p341) target = $region64
      $region63: #{cnn_forward.1} parent=5 // pred_region
        %s345 = ssub.s32 %s20, 1
        %p346 = scmp.lt.s32.totalorder %s25, 1
        %s347 = scalar_select %p346, %s25, 1
        %s348 = smul.addr %s347, 28
        %s349 = smul.addr %s348, 8
        %s350 = scalar_lea.vmem %s0, %s349
        %p351 = pneg %p46
        %p352 = pneg %p43
        %p353 = pneg %p67
        %p354 = pneg %p64
        %p355 = pneg %p88
        %p356 = pneg %p85
        %p357 = pneg %p109
        %p358 = pneg %p106
        %p359 = pneg %p130
        %p360 = pneg %p127
        %p361 = pneg %p151
        %p362 = pneg %p148
        %p363 = pneg %p172
        %p364 = pneg %p169
        %p365 = pneg %p193
        %p366 = pneg %p190
        %p367 = pneg %p214
        %p368 = pneg %p211
        %p369 = pneg %p235
        %p370 = pneg %p232
        %p371 = pneg %p256
        %p372 = pneg %p253
        %p373 = pneg %p282
        %p374 = pneg %p279
        %s375 = sand.u32 %s269, 1
        %s376 = scalar_lea.sflag [#allocation3], %s375
        %s377 = sand.u32 %s269, 1
        %s378 = scalar_lea.vmem [#allocation2], %s377
        %p379 = scmp.lt.s32.totalorder %s25, 1
        %s380 = scalar_select %p379, %s25, 1
        %s381 = smul.addr %s380, 28
        %s382 = smul.addr %s381, 8
        %s383 = scalar_lea.vmem %s0, %s382
        %v384 = vld [vmem:[%s383] sm:$0xff]
        %v385 = vld [vmem:[%s383 + $0x8] sm:$0xf]
        %v386 = vld [vmem:[%s383 + $0x1] sm:$0xff]
        %v387 = vld [vmem:[%s383 + $0x9] sm:$0xf]
        %v388 = vld [vmem:[%s383 + $0x2] sm:$0xff]
        %v389 = vld [vmem:[%s383 + $0xa] sm:$0xf]
        %392 = vrot.lane.b32.xlu0 %v386, 42
        %v393 = vpop.permute.xlu0 %392
        %394 = vrot.lane.b32.xlu0 %v387, 42
        %v395 = vpop.permute.xlu0 %394
        %400 = vrot.lane.b32.xlu0 %v388, 84
        %v401 = vpop.permute.xlu0 %400
        %402 = vrot.lane.b32.xlu0 %v389, 84
        %v403 = vpop.permute.xlu0 %402
        %vm406 = vcmask 343040
        %v407 = vsel %vm406, %v384, %v393
        %v408 = vsel %vm406, %v385, %v395
        %vm409 = vcmask 687104
        %v410 = vsel %vm409, %v407, %v401
        %v411 = vsel %vm409, %v408, %v403
        %s412 = scalar_lea.vmem %s383, 16
        %v413 = vld [vmem:[%s412] sm:$0xff]
        %v414 = vld [vmem:[%s412 + $0x8] sm:$0xf]
        %v415 = vld [vmem:[%s412 + $0x1] sm:$0xff]
        %v416 = vld [vmem:[%s412 + $0x9] sm:$0xf]
        %v417 = vld [vmem:[%s412 + $0x2] sm:$0xff]
        %v418 = vld [vmem:[%s412 + $0xa] sm:$0xf]
        %421 = vrot.lane.b32.xlu0 %v415, 42
        %v422 = vpop.permute.xlu0 %421
        %423 = vrot.lane.b32.xlu0 %v416, 42
        %v424 = vpop.permute.xlu0 %423
        %429 = vrot.lane.b32.xlu0 %v417, 84
        %v430 = vpop.permute.xlu0 %429
        %431 = vrot.lane.b32.xlu0 %v418, 84
        %v432 = vpop.permute.xlu0 %431
        %v435 = vsel %vm406, %v413, %v422
        %v436 = vsel %vm406, %v414, %v424
        %v437 = vsel %vm409, %v435, %v430
        %v438 = vsel %vm409, %v436, %v432
        %s439 = scalar_lea.vmem %s383, 32
        %v440 = vld [vmem:[%s439] sm:$0xff]
        %v441 = vld [vmem:[%s439 + $0x8] sm:$0xf]
        %v442 = vld [vmem:[%s439 + $0x1] sm:$0xff]
        %v443 = vld [vmem:[%s439 + $0x9] sm:$0xf]
        %v444 = vld [vmem:[%s439 + $0x2] sm:$0xff]
        %v445 = vld [vmem:[%s439 + $0xa] sm:$0xf]
        %448 = vrot.lane.b32.xlu0 %v442, 42
        %v449 = vpop.permute.xlu0 %448
        %450 = vrot.lane.b32.xlu0 %v443, 42
        %v451 = vpop.permute.xlu0 %450
        %456 = vrot.lane.b32.xlu0 %v444, 84
        %v457 = vpop.permute.xlu0 %456
        %458 = vrot.lane.b32.xlu0 %v445, 84
        %v459 = vpop.permute.xlu0 %458
        %v462 = vsel %vm406, %v440, %v449
        %v463 = vsel %vm406, %v441, %v451
        %v464 = vsel %vm409, %v462, %v457
        %v465 = vsel %vm409, %v463, %v459
        %s466 = scalar_lea.vmem %s383, 48
        %v467 = vld [vmem:[%s466] sm:$0xff]
        %v468 = vld [vmem:[%s466 + $0x8] sm:$0xf]
        %v469 = vld [vmem:[%s466 + $0x1] sm:$0xff]
        %v470 = vld [vmem:[%s466 + $0x9] sm:$0xf]
        %v471 = vld [vmem:[%s466 + $0x2] sm:$0xff]
        %v472 = vld [vmem:[%s466 + $0xa] sm:$0xf]
        %475 = vrot.lane.b32.xlu0 %v469, 42
        %v476 = vpop.permute.xlu0 %475
        %477 = vrot.lane.b32.xlu0 %v470, 42
        %v478 = vpop.permute.xlu0 %477
        %483 = vrot.lane.b32.xlu0 %v471, 84
        %v484 = vpop.permute.xlu0 %483
        %485 = vrot.lane.b32.xlu0 %v472, 84
        %v486 = vpop.permute.xlu0 %485
        %v489 = vsel %vm406, %v467, %v476
        %v490 = vsel %vm406, %v468, %v478
        %v491 = vsel %vm409, %v489, %v484
        %v492 = vsel %vm409, %v490, %v486
        %s493 = scalar_lea.vmem %s383, 64
        %v494 = vld [vmem:[%s493] sm:$0xff]
        %v495 = vld [vmem:[%s493 + $0x8] sm:$0xf]
        %v496 = vld [vmem:[%s493 + $0x1] sm:$0xff]
        %v497 = vld [vmem:[%s493 + $0x9] sm:$0xf]
        %v498 = vld [vmem:[%s493 + $0x2] sm:$0xff]
        %v499 = vld [vmem:[%s493 + $0xa] sm:$0xf]
        %502 = vrot.lane.b32.xlu0 %v496, 42
        %v503 = vpop.permute.xlu0 %502
        %504 = vrot.lane.b32.xlu0 %v497, 42
        %v505 = vpop.permute.xlu0 %504
        %510 = vrot.lane.b32.xlu0 %v498, 84
        %v511 = vpop.permute.xlu0 %510
        %512 = vrot.lane.b32.xlu0 %v499, 84
        %v513 = vpop.permute.xlu0 %512
        %v516 = vsel %vm406, %v494, %v503
        %v517 = vsel %vm406, %v495, %v505
        %v518 = vsel %vm409, %v516, %v511
        %v519 = vsel %vm409, %v517, %v513
        %s520 = scalar_lea.vmem %s383, 80
        %v521 = vld [vmem:[%s520] sm:$0xff]
        %v522 = vld [vmem:[%s520 + $0x8] sm:$0xf]
        %v523 = vld [vmem:[%s520 + $0x1] sm:$0xff]
        %v524 = vld [vmem:[%s520 + $0x9] sm:$0xf]
        %v525 = vld [vmem:[%s520 + $0x2] sm:$0xff]
        %v526 = vld [vmem:[%s520 + $0xa] sm:$0xf]
        %529 = vrot.lane.b32.xlu0 %v523, 42
        %v530 = vpop.permute.xlu0 %529
        %531 = vrot.lane.b32.xlu0 %v524, 42
        %v532 = vpop.permute.xlu0 %531
        %537 = vrot.lane.b32.xlu0 %v525, 84
        %v538 = vpop.permute.xlu0 %537
        %539 = vrot.lane.b32.xlu0 %v526, 84
        %v540 = vpop.permute.xlu0 %539
        %v543 = vsel %vm406, %v521, %v530
        %v544 = vsel %vm406, %v522, %v532
        %v545 = vsel %vm409, %v543, %v538
        %v546 = vsel %vm409, %v544, %v540
        %s547 = scalar_lea.vmem %s383, 96
        %v548 = vld [vmem:[%s547] sm:$0xff]
        %v549 = vld [vmem:[%s547 + $0x8] sm:$0xf]
        %v550 = vld [vmem:[%s547 + $0x1] sm:$0xff]
        %v551 = vld [vmem:[%s547 + $0x9] sm:$0xf]
        %v552 = vld [vmem:[%s547 + $0x2] sm:$0xff]
        %v553 = vld [vmem:[%s547 + $0xa] sm:$0xf]
        %556 = vrot.lane.b32.xlu0 %v550, 42
        %v557 = vpop.permute.xlu0 %556
        %558 = vrot.lane.b32.xlu0 %v551, 42
        %v559 = vpop.permute.xlu0 %558
        %564 = vrot.lane.b32.xlu0 %v552, 84
        %v565 = vpop.permute.xlu0 %564
        %566 = vrot.lane.b32.xlu0 %v553, 84
        %v567 = vpop.permute.xlu0 %566
        %v570 = vsel %vm406, %v548, %v557
        %v571 = vsel %vm406, %v549, %v559
        %v572 = vsel %vm409, %v570, %v565
        %v573 = vsel %vm409, %v571, %v567
        %s574 = scalar_lea.vmem %s383, 112
        %v575 = vld [vmem:[%s574] sm:$0xff]
        %v576 = vld [vmem:[%s574 + $0x8] sm:$0xf]
        %v577 = vld [vmem:[%s574 + $0x1] sm:$0xff]
        %v578 = vld [vmem:[%s574 + $0x9] sm:$0xf]
        %v579 = vld [vmem:[%s574 + $0x2] sm:$0xff]
        %v580 = vld [vmem:[%s574 + $0xa] sm:$0xf]
        %583 = vrot.lane.b32.xlu0 %v577, 42
        %v584 = vpop.permute.xlu0 %583
        %585 = vrot.lane.b32.xlu0 %v578, 42
        %v586 = vpop.permute.xlu0 %585
        %591 = vrot.lane.b32.xlu0 %v579, 84
        %v592 = vpop.permute.xlu0 %591
        %593 = vrot.lane.b32.xlu0 %v580, 84
        %v594 = vpop.permute.xlu0 %593
        %v597 = vsel %vm406, %v575, %v584
        %v598 = vsel %vm406, %v576, %v586
        %v599 = vsel %vm409, %v597, %v592
        %v600 = vsel %vm409, %v598, %v594
        %s601 = scalar_lea.vmem %s383, 128
        %v602 = vld [vmem:[%s601] sm:$0xff]
        %v603 = vld [vmem:[%s601 + $0x8] sm:$0xf]
        %v604 = vld [vmem:[%s601 + $0x1] sm:$0xff]
        %v605 = vld [vmem:[%s601 + $0x9] sm:$0xf]
        %v606 = vld [vmem:[%s601 + $0x2] sm:$0xff]
        %v607 = vld [vmem:[%s601 + $0xa] sm:$0xf]
        %610 = vrot.lane.b32.xlu0 %v604, 42
        %v611 = vpop.permute.xlu0 %610
        %612 = vrot.lane.b32.xlu0 %v605, 42
        %v613 = vpop.permute.xlu0 %612
        %618 = vrot.lane.b32.xlu0 %v606, 84
        %v619 = vpop.permute.xlu0 %618
        %620 = vrot.lane.b32.xlu0 %v607, 84
        %v621 = vpop.permute.xlu0 %620
        %v624 = vsel %vm406, %v602, %v611
        %v625 = vsel %vm406, %v603, %v613
        %v626 = vsel %vm409, %v624, %v619
        %v627 = vsel %vm409, %v625, %v621
        %s628 = scalar_lea.vmem %s383, 144
        %v629 = vld [vmem:[%s628] sm:$0xff]
        %v630 = vld [vmem:[%s628 + $0x8] sm:$0xf]
        %v631 = vld [vmem:[%s628 + $0x1] sm:$0xff]
        %v632 = vld [vmem:[%s628 + $0x9] sm:$0xf]
        %v633 = vld [vmem:[%s628 + $0x2] sm:$0xff]
        %v634 = vld [vmem:[%s628 + $0xa] sm:$0xf]
        %637 = vrot.lane.b32.xlu0 %v631, 42
        %v638 = vpop.permute.xlu0 %637
        %639 = vrot.lane.b32.xlu0 %v632, 42
        %v640 = vpop.permute.xlu0 %639
        %645 = vrot.lane.b32.xlu0 %v633, 84
        %v646 = vpop.permute.xlu0 %645
        %647 = vrot.lane.b32.xlu0 %v634, 84
        %v648 = vpop.permute.xlu0 %647
        %v651 = vsel %vm406, %v629, %v638
        %v652 = vsel %vm406, %v630, %v640
        %v653 = vsel %vm409, %v651, %v646
        %v654 = vsel %vm409, %v652, %v648
        %s655 = scalar_lea.vmem %s383, 160
        %v656 = vld [vmem:[%s655] sm:$0xff]
        %v657 = vld [vmem:[%s655 + $0x8] sm:$0xf]
        %v658 = vld [vmem:[%s655 + $0x1] sm:$0xff]
        %v659 = vld [vmem:[%s655 + $0x9] sm:$0xf]
        %v660 = vld [vmem:[%s655 + $0x2] sm:$0xff]
        %v661 = vld [vmem:[%s655 + $0xa] sm:$0xf]
        %664 = vrot.lane.b32.xlu0 %v658, 42
        %v665 = vpop.permute.xlu0 %664
        %666 = vrot.lane.b32.xlu0 %v659, 42
        %v667 = vpop.permute.xlu0 %666
        %672 = vrot.lane.b32.xlu0 %v660, 84
        %v673 = vpop.permute.xlu0 %672
        %674 = vrot.lane.b32.xlu0 %v661, 84
        %v675 = vpop.permute.xlu0 %674
        %v678 = vsel %vm406, %v656, %v665
        %v679 = vsel %vm406, %v657, %v667
        %v680 = vsel %vm409, %v678, %v673
        %v681 = vsel %vm409, %v679, %v675
        %s682 = scalar_lea.vmem %s383, 176
        %v683 = vld [vmem:[%s682] sm:$0xff]
        %v684 = vld [vmem:[%s682 + $0x8] sm:$0xf]
        %v685 = vld [vmem:[%s682 + $0x1] sm:$0xff]
        %v686 = vld [vmem:[%s682 + $0x9] sm:$0xf]
        %v687 = vld [vmem:[%s682 + $0x2] sm:$0xff]
        %v688 = vld [vmem:[%s682 + $0xa] sm:$0xf]
        %691 = vrot.lane.b32.xlu0 %v685, 42
        %v692 = vpop.permute.xlu0 %691
        %693 = vrot.lane.b32.xlu0 %v686, 42
        %v694 = vpop.permute.xlu0 %693
        %699 = vrot.lane.b32.xlu0 %v687, 84
        %v700 = vpop.permute.xlu0 %699
        %701 = vrot.lane.b32.xlu0 %v688, 84
        %v702 = vpop.permute.xlu0 %701
        %v705 = vsel %vm406, %v683, %v692
        %v706 = vsel %vm406, %v684, %v694
        %v707 = vsel %vm409, %v705, %v700
        %v708 = vsel %vm409, %v706, %v702
        %s709 = scalar_lea.vmem %s383, 192
        %v710 = vld [vmem:[%s709] sm:$0xff]
        %v711 = vld [vmem:[%s709 + $0x8] sm:$0xf]
        %v712 = vld [vmem:[%s709 + $0x1] sm:$0xff]
        %v713 = vld [vmem:[%s709 + $0x9] sm:$0xf]
        %v714 = vld [vmem:[%s709 + $0x2] sm:$0xff]
        %v715 = vld [vmem:[%s709 + $0xa] sm:$0xf]
        %718 = vrot.lane.b32.xlu0 %v712, 42
        %v719 = vpop.permute.xlu0 %718
        %720 = vrot.lane.b32.xlu0 %v713, 42
        %v721 = vpop.permute.xlu0 %720
        %726 = vrot.lane.b32.xlu0 %v714, 84
        %v727 = vpop.permute.xlu0 %726
        %728 = vrot.lane.b32.xlu0 %v715, 84
        %v729 = vpop.permute.xlu0 %728
        %v732 = vsel %vm406, %v710, %v719
        %v733 = vsel %vm406, %v711, %v721
        %v734 = vsel %vm409, %v732, %v727
        %v735 = vsel %vm409, %v733, %v729
        %s736 = scalar_lea.vmem %s383, 208
        %v737 = vld [vmem:[%s736] sm:$0xff]
        %v738 = vld [vmem:[%s736 + $0x8] sm:$0xf]
        %v739 = vld [vmem:[%s736 + $0x1] sm:$0xff]
        %v740 = vld [vmem:[%s736 + $0x9] sm:$0xf]
        %v741 = vld [vmem:[%s736 + $0x2] sm:$0xff]
        %v742 = vld [vmem:[%s736 + $0xa] sm:$0xf]
        %745 = vrot.lane.b32.xlu0 %v739, 42
        %v746 = vpop.permute.xlu0 %745
        %747 = vrot.lane.b32.xlu0 %v740, 42
        %v748 = vpop.permute.xlu0 %747
        %753 = vrot.lane.b32.xlu0 %v741, 84
        %v754 = vpop.permute.xlu0 %753
        %755 = vrot.lane.b32.xlu0 %v742, 84
        %v756 = vpop.permute.xlu0 %755
        %v759 = vsel %vm406, %v737, %v746
        %v760 = vsel %vm406, %v738, %v748
        %v761 = vsel %vm409, %v759, %v754
        %v762 = vsel %vm409, %v760, %v756
        %765 = vrot.lane.b32.xlu0 %v437, 126
        %v766 = vpop.permute.xlu0 %765
        %767 = vrot.lane.b32.xlu0 %v438, 126
        %v768 = vpop.permute.xlu0 %767
        %773 = vrot.lane.b32.xlu0 %v464, 124
        %v774 = vpop.permute.xlu0 %773
        %775 = vrot.lane.b32.xlu0 %v465, 124
        %v776 = vpop.permute.xlu0 %775
        %vm779 = vcmask 1031168
        %v780 = vsel %vm779, %v410, %v766
        %v781 = vsel %vm779, %v411, %v768
        %vm782 = vcmask 1014784
        %v783 = vsel %vm782, %v766, %v774
        %v784 = vsel %vm782, %v768, %v776
        %785 = vrot.lane.b32.xlu0 %v464, 126
        %v786 = vpop.permute.xlu0 %785
        %787 = vrot.lane.b32.xlu0 %v465, 126
        %v788 = vpop.permute.xlu0 %787
        %793 = vrot.lane.b32.xlu0 %v491, 124
        %v794 = vpop.permute.xlu0 %793
        %795 = vrot.lane.b32.xlu0 %v492, 124
        %v796 = vpop.permute.xlu0 %795
        %v799 = vsel %vm779, %v437, %v786
        %v800 = vsel %vm779, %v438, %v788
        %v801 = vsel %vm782, %v786, %v794
        %v802 = vsel %vm782, %v788, %v796
        %803 = vrot.lane.b32.xlu0 %v491, 126
        %v804 = vpop.permute.xlu0 %803
        %805 = vrot.lane.b32.xlu0 %v492, 126
        %v806 = vpop.permute.xlu0 %805
        %811 = vrot.lane.b32.xlu0 %v518, 124
        %v812 = vpop.permute.xlu0 %811
        %813 = vrot.lane.b32.xlu0 %v519, 124
        %v814 = vpop.permute.xlu0 %813
        %v817 = vsel %vm779, %v464, %v804
        %v818 = vsel %vm779, %v465, %v806
        %v819 = vsel %vm782, %v804, %v812
        %v820 = vsel %vm782, %v806, %v814
        %821 = vrot.lane.b32.xlu0 %v518, 126
        %v822 = vpop.permute.xlu0 %821
        %823 = vrot.lane.b32.xlu0 %v519, 126
        %v824 = vpop.permute.xlu0 %823
        %829 = vrot.lane.b32.xlu0 %v545, 124
        %v830 = vpop.permute.xlu0 %829
        %831 = vrot.lane.b32.xlu0 %v546, 124
        %v832 = vpop.permute.xlu0 %831
        %v835 = vsel %vm779, %v491, %v822
        %v836 = vsel %vm779, %v492, %v824
        %v837 = vsel %vm782, %v822, %v830
        %v838 = vsel %vm782, %v824, %v832
        %839 = vrot.lane.b32.xlu0 %v545, 126
        %v840 = vpop.permute.xlu0 %839
        %841 = vrot.lane.b32.xlu0 %v546, 126
        %v842 = vpop.permute.xlu0 %841
        %847 = vrot.lane.b32.xlu0 %v572, 124
        %v848 = vpop.permute.xlu0 %847
        %849 = vrot.lane.b32.xlu0 %v573, 124
        %v850 = vpop.permute.xlu0 %849
        %v853 = vsel %vm779, %v518, %v840
        %v854 = vsel %vm779, %v519, %v842
        %v855 = vsel %vm782, %v840, %v848
        %v856 = vsel %vm782, %v842, %v850
        %857 = vrot.lane.b32.xlu0 %v572, 126
        %v858 = vpop.permute.xlu0 %857
        %859 = vrot.lane.b32.xlu0 %v573, 126
        %v860 = vpop.permute.xlu0 %859
        %865 = vrot.lane.b32.xlu0 %v599, 124
        %v866 = vpop.permute.xlu0 %865
        %867 = vrot.lane.b32.xlu0 %v600, 124
        %v868 = vpop.permute.xlu0 %867
        %v871 = vsel %vm779, %v545, %v858
        %v872 = vsel %vm779, %v546, %v860
        %v873 = vsel %vm782, %v858, %v866
        %v874 = vsel %vm782, %v860, %v868
        %875 = vrot.lane.b32.xlu0 %v599, 126
        %v876 = vpop.permute.xlu0 %875
        %877 = vrot.lane.b32.xlu0 %v600, 126
        %v878 = vpop.permute.xlu0 %877
        %883 = vrot.lane.b32.xlu0 %v626, 124
        %v884 = vpop.permute.xlu0 %883
        %885 = vrot.lane.b32.xlu0 %v627, 124
        %v886 = vpop.permute.xlu0 %885
        %v889 = vsel %vm779, %v572, %v876
        %v890 = vsel %vm779, %v573, %v878
        %v891 = vsel %vm782, %v876, %v884
        %v892 = vsel %vm782, %v878, %v886
        %893 = vrot.lane.b32.xlu0 %v626, 126
        %v894 = vpop.permute.xlu0 %893
        %895 = vrot.lane.b32.xlu0 %v627, 126
        %v896 = vpop.permute.xlu0 %895
        %901 = vrot.lane.b32.xlu0 %v653, 124
        %v902 = vpop.permute.xlu0 %901
        %903 = vrot.lane.b32.xlu0 %v654, 124
        %v904 = vpop.permute.xlu0 %903
        %v907 = vsel %vm779, %v599, %v894
        %v908 = vsel %vm779, %v600, %v896
        %v909 = vsel %vm782, %v894, %v902
        %v910 = vsel %vm782, %v896, %v904
        %911 = vrot.lane.b32.xlu0 %v653, 126
        %v912 = vpop.permute.xlu0 %911
        %913 = vrot.lane.b32.xlu0 %v654, 126
        %v914 = vpop.permute.xlu0 %913
        %919 = vrot.lane.b32.xlu0 %v680, 124
        %v920 = vpop.permute.xlu0 %919
        %921 = vrot.lane.b32.xlu0 %v681, 124
        %v922 = vpop.permute.xlu0 %921
        %v925 = vsel %vm779, %v626, %v912
        %v926 = vsel %vm779, %v627, %v914
        %v927 = vsel %vm782, %v912, %v920
        %v928 = vsel %vm782, %v914, %v922
        %929 = vrot.lane.b32.xlu0 %v680, 126
        %v930 = vpop.permute.xlu0 %929
        %931 = vrot.lane.b32.xlu0 %v681, 126
        %v932 = vpop.permute.xlu0 %931
        %937 = vrot.lane.b32.xlu0 %v707, 124
        %v938 = vpop.permute.xlu0 %937
        %939 = vrot.lane.b32.xlu0 %v708, 124
        %v940 = vpop.permute.xlu0 %939
        %v943 = vsel %vm779, %v653, %v930
        %v944 = vsel %vm779, %v654, %v932
        %v945 = vsel %vm782, %v930, %v938
        %v946 = vsel %vm782, %v932, %v940
        %947 = vrot.lane.b32.xlu0 %v707, 126
        %v948 = vpop.permute.xlu0 %947
        %949 = vrot.lane.b32.xlu0 %v708, 126
        %v950 = vpop.permute.xlu0 %949
        %955 = vrot.lane.b32.xlu0 %v734, 124
        %v956 = vpop.permute.xlu0 %955
        %957 = vrot.lane.b32.xlu0 %v735, 124
        %v958 = vpop.permute.xlu0 %957
        %v961 = vsel %vm779, %v680, %v948
        %v962 = vsel %vm779, %v681, %v950
        %v963 = vsel %vm782, %v948, %v956
        %v964 = vsel %vm782, %v950, %v958
        %965 = vrot.lane.b32.xlu0 %v734, 126
        %v966 = vpop.permute.xlu0 %965
        %967 = vrot.lane.b32.xlu0 %v735, 126
        %v968 = vpop.permute.xlu0 %967
        %973 = vrot.lane.b32.xlu0 %v761, 124
        %v974 = vpop.permute.xlu0 %973
        %975 = vrot.lane.b32.xlu0 %v762, 124
        %v976 = vpop.permute.xlu0 %975
        %v979 = vsel %vm779, %v707, %v966
        %v980 = vsel %vm779, %v708, %v968
        %v981 = vsel %vm782, %v966, %v974
        %v982 = vsel %vm782, %v968, %v976
        %vm987 = vcmask 1043456
        %v988 = vrot.slane %v799, 4
        %v989 = vrot.slane %v801, 4
        %v990 = vrot.slane %v794, 4
        %v991 = vrot.slane %v800, 4
        %v992 = vsel %vm987, %v988, %v991
        %v993 = vrot.slane %v802, 4
        %v994 = vsel %vm987, %v989, %v993
        %v995 = vrot.slane %v796, 4
        %v996 = vsel %vm987, %v990, %v995
        %v1007 = vrot.slane %v835, 4
        %v1008 = vrot.slane %v837, 4
        %v1009 = vrot.slane %v830, 4
        %v1010 = vrot.slane %v836, 4
        %v1011 = vsel %vm987, %v1007, %v1010
        %v1012 = vrot.slane %v838, 4
        %v1013 = vsel %vm987, %v1008, %v1012
        %v1014 = vrot.slane %v832, 4
        %v1015 = vsel %vm987, %v1009, %v1014
        %v1026 = vrot.slane %v871, 4
        %v1027 = vrot.slane %v873, 4
        %v1028 = vrot.slane %v866, 4
        %v1029 = vrot.slane %v872, 4
        %v1030 = vsel %vm987, %v1026, %v1029
        %v1031 = vrot.slane %v874, 4
        %v1032 = vsel %vm987, %v1027, %v1031
        %v1033 = vrot.slane %v868, 4
        %v1034 = vsel %vm987, %v1028, %v1033
        %v1045 = vrot.slane %v907, 4
        %v1046 = vrot.slane %v909, 4
        %v1047 = vrot.slane %v902, 4
        %v1048 = vrot.slane %v908, 4
        %v1049 = vsel %vm987, %v1045, %v1048
        %v1050 = vrot.slane %v910, 4
        %v1051 = vsel %vm987, %v1046, %v1050
        %v1052 = vrot.slane %v904, 4
        %v1053 = vsel %vm987, %v1047, %v1052
        %v1064 = vrot.slane %v943, 4
        %v1065 = vrot.slane %v945, 4
        %v1066 = vrot.slane %v938, 4
        %v1067 = vrot.slane %v944, 4
        %v1068 = vsel %vm987, %v1064, %v1067
        %v1069 = vrot.slane %v946, 4
        %v1070 = vsel %vm987, %v1065, %v1069
        %v1071 = vrot.slane %v940, 4
        %v1072 = vsel %vm987, %v1066, %v1071
        %v1083 = vrot.slane %v979, 4
        %v1084 = vrot.slane %v981, 4
        %v1085 = vrot.slane %v974, 4
        %v1086 = vrot.slane %v980, 4
        %v1087 = vsel %vm987, %v1083, %v1086
        %v1088 = vrot.slane %v982, 4
        %v1089 = vsel %vm987, %v1084, %v1088
        %v1090 = vrot.slane %v976, 4
        %v1091 = vsel %vm987, %v1085, %v1090
        %v1098 = vsel %vm987, %v781, %v988
        %v1099 = vsel %vm987, %v784, %v989
        %v1100 = vsel %vm987, %v776, %v990
        %v1101 = vsel %vm987, %v818, %v1007
        %v1102 = vsel %vm987, %v820, %v1008
        %v1103 = vsel %vm987, %v814, %v1009
        %v1104 = vsel %vm987, %v854, %v1026
        %v1105 = vsel %vm987, %v856, %v1027
        %v1106 = vsel %vm987, %v850, %v1028
        %v1107 = vsel %vm987, %v890, %v1045
        %v1108 = vsel %vm987, %v892, %v1046
        %v1109 = vsel %vm987, %v886, %v1047
        %v1110 = vsel %vm987, %v926, %v1064
        %v1111 = vsel %vm987, %v928, %v1065
        %v1112 = vsel %vm987, %v922, %v1066
        %v1113 = vsel %vm987, %v962, %v1083
        %v1114 = vsel %vm987, %v964, %v1084
        %v1115 = vsel %vm987, %v958, %v1085
        %v1116 = vld [vmem:[%s2] sm:$0x3]
        %v1117 = vpack.c.bf16 %v1098, %v780
        %v1118 = vpack.c.bf16 %v1099, %v783
        %v1119 = vpack.c.bf16 %v1100, %v774
        %v1120 = vpack.c.bf16 %v817, %v992
        %v1121 = vpack.c.bf16 %v819, %v994
        %v1122 = vpack.c.bf16 %v812, %v996
        %v1123 = vpack.c.bf16 %v1011, %v1101
        %v1124 = vpack.c.bf16 %v1013, %v1102
        %v1125 = vpack.c.bf16 %v1015, %v1103
        %v1126 = vpack.c.bf16 %v1104, %v853
        %v1127 = vpack.c.bf16 %v1105, %v855
        %v1128 = vpack.c.bf16 %v1106, %v848
        %v1129 = vpack.c.bf16 %v889, %v1030
        %v1130 = vpack.c.bf16 %v891, %v1032
        %v1131 = vpack.c.bf16 %v884, %v1034
        %v1132 = vpack.c.bf16 %v1049, %v1107
        %v1133 = vpack.c.bf16 %v1051, %v1108
        %v1134 = vpack.c.bf16 %v1053, %v1109
        %v1135 = vpack.c.bf16 %v1110, %v925
        %v1136 = vpack.c.bf16 %v1111, %v927
        %v1137 = vpack.c.bf16 %v1112, %v920
        %v1138 = vpack.c.bf16 %v961, %v1068
        %v1139 = vpack.c.bf16 %v963, %v1070
        %v1140 = vpack.c.bf16 %v956, %v1072
        %v1141 = vpack.c.bf16 %v1087, %v1113
        %v1142 = vpack.c.bf16 %v1089, %v1114
        %v1143 = vpack.c.bf16 %v1091, %v1115
        %v1144 = vld [vmem:[%s1] sm:$0xff]
        %v1145 = vld [vmem:[%s1 + $0x8] sm:$0xff]
        %v1146 = vld [vmem:[%s1 + $0x10] sm:$0xff]
        %v1147 = vld [vmem:[%s1 + $0x18] sm:$0xff]
        %v1148 = vld [vmem:[%s1 + $0x20] sm:$0xff]
        %v1149 = vld [vmem:[%s1 + $0x28] sm:$0xff]
        %v1150 = vld [vmem:[%s1 + $0x30] sm:$0xff]
        %v1151 = vld [vmem:[%s1 + $0x38] sm:$0xff]
        %v1152 = vld [vmem:[%s1 + $0x40] sm:$0xff]
        %v1153 = vld [vmem:[%s1 + $0x48] sm:$0xff]
        %v1154 = vld [vmem:[%s1 + $0x50] sm:$0xff]
        %v1155 = vld [vmem:[%s1 + $0x58] sm:$0xff]
        %v1156 = vld [vmem:[%s1 + $0x60] sm:$0xff]
        %v1157 = vld [vmem:[%s1 + $0x68] sm:$0xff]
        %v1158 = vld [vmem:[%s1 + $0x70] sm:$0xff]
        %v1159 = vld [vmem:[%s1 + $0x78] sm:$0xff]
        %v1160 = vld [vmem:[%s1 + $0x80] sm:$0xff]
        %v1161 = vld [vmem:[%s1 + $0x88] sm:$0xff]
        %v1162 = vld [vmem:[%s1 + $0x90] sm:$0xff]
        %v1163 = vld [vmem:[%s1 + $0x98] sm:$0xff]
        %v1164 = vld [vmem:[%s1 + $0xa0] sm:$0xff]
        %v1165 = vld [vmem:[%s1 + $0xa8] sm:$0xff]
        %v1166 = vld [vmem:[%s1 + $0xb0] sm:$0xff]
        %v1167 = vld [vmem:[%s1 + $0xb8] sm:$0xff]
        %v1168 = vld [vmem:[%s1 + $0xc0] sm:$0xff]
        %v1169 = vld [vmem:[%s1 + $0xc8] sm:$0xff]
        %v1170 = vld [vmem:[%s1 + $0xd0] sm:$0xff]
        %v1171 = vld [vmem:[%s1 + $0xd8] sm:$0xff]
        %v1172 = vld [vmem:[%s1 + $0xe0] sm:$0xff]
        %v1173 = vld [vmem:[%s1 + $0xe8] sm:$0xff]
        %v1174 = vld [vmem:[%s1 + $0xf0] sm:$0xff]
        %v1175 = vld [vmem:[%s1 + $0xf8] sm:$0xff]
        %v1176 = vld [vmem:[%s1 + $0x100] sm:$0xff]
        %v1177 = vld [vmem:[%s1 + $0x108] sm:$0xff]
        %v1178 = vld [vmem:[%s1 + $0x110] sm:$0xff]
        %v1179 = vld [vmem:[%s1 + $0x118] sm:$0xff]
        %v1180 = vld [vmem:[%s1 + $0x120] sm:$0xff]
        %v1181 = vld [vmem:[%s1 + $0x128] sm:$0xff]
        %v1182 = vld [vmem:[%s1 + $0x130] sm:$0xff]
        %v1183 = vld [vmem:[%s1 + $0x138] sm:$0xff]
        %v1184 = vld [vmem:[%s1 + $0x140] sm:$0xff]
        %v1185 = vld [vmem:[%s1 + $0x148] sm:$0xff]
        %v1186 = vld [vmem:[%s1 + $0x150] sm:$0xff]
        %v1187 = vld [vmem:[%s1 + $0x158] sm:$0xff]
        %v1188 = vld [vmem:[%s1 + $0x160] sm:$0xff]
        %v1189 = vld [vmem:[%s1 + $0x168] sm:$0xff]
        %v1190 = vld [vmem:[%s1 + $0x170] sm:$0xff]
        %v1191 = vld [vmem:[%s1 + $0x178] sm:$0xff]
        %v1192 = vld [vmem:[%s1 + $0x180] sm:$0xff]
        %v1193 = vld [vmem:[%s1 + $0x188] sm:$0xff]
        %v1194 = vld [vmem:[%s1 + $0x190] sm:$0xff]
        %v1195 = vld [vmem:[%s1 + $0x198] sm:$0xff]
        %v1196 = vld [vmem:[%s1 + $0x1a0] sm:$0xff]
        %v1197 = vld [vmem:[%s1 + $0x1a8] sm:$0xff]
        %v1198 = vld [vmem:[%s1 + $0x1b0] sm:$0xff]
        %v1199 = vld [vmem:[%s1 + $0x1b8] sm:$0xff]
        %v1200 = vld [vmem:[%s1 + $0x1c0] sm:$0xff]
        %v1201 = vld [vmem:[%s1 + $0x1c8] sm:$0xff]
        %v1202 = vld [vmem:[%s1 + $0x1d0] sm:$0xff]
        %v1203 = vld [vmem:[%s1 + $0x1d8] sm:$0xff]
        %v1204 = vld [vmem:[%s1 + $0x1e0] sm:$0xff]
        %v1205 = vld [vmem:[%s1 + $0x1e8] sm:$0xff]
        %v1206 = vld [vmem:[%s1 + $0x1f0] sm:$0xff]
        %v1207 = vld [vmem:[%s1 + $0x1f8] sm:$0xff]
        %v1208 = vld [vmem:[%s1 + $0x200] sm:$0xff]
        %v1209 = vld [vmem:[%s1 + $0x208] sm:$0xff]
        %v1210 = vld [vmem:[%s1 + $0x210] sm:$0xff]
        %v1211 = vld [vmem:[%s1 + $0x218] sm:$0xff]
        %v1212 = vld [vmem:[%s1 + $0x220] sm:$0xff]
        %v1213 = vld [vmem:[%s1 + $0x228] sm:$0xff]
        %v1214 = vld [vmem:[%s1 + $0x230] sm:$0xff]
        %v1215 = vld [vmem:[%s1 + $0x238] sm:$0xff]
        %v1216 = vld [vmem:[%s1 + $0x240] sm:$0xff]
        %v1217 = vld [vmem:[%s1 + $0x248] sm:$0xff]
        %v1218 = vld [vmem:[%s1 + $0x250] sm:$0xff]
        %v1219 = vld [vmem:[%s1 + $0x258] sm:$0xff]
        %v1220 = vld [vmem:[%s1 + $0x260] sm:$0xff]
        %v1221 = vld [vmem:[%s1 + $0x268] sm:$0xff]
        %v1222 = vld [vmem:[%s1 + $0x270] sm:$0xff]
        %v1223 = vld [vmem:[%s1 + $0x278] sm:$0xff]
        %v1224 = vld [vmem:[%s1 + $0x280] sm:$0xff]
        %v1225 = vld [vmem:[%s1 + $0x288] sm:$0xff]
        %v1226 = vld [vmem:[%s1 + $0x290] sm:$0xff]
        %v1227 = vld [vmem:[%s1 + $0x298] sm:$0xff]
        %v1228 = vld [vmem:[%s1 + $0x2a0] sm:$0xff]
        %v1229 = vld [vmem:[%s1 + $0x2a8] sm:$0xff]
        %v1230 = vld [vmem:[%s1 + $0x2b0] sm:$0xff]
        %v1231 = vld [vmem:[%s1 + $0x2b8] sm:$0xff]
        %v1232 = vld [vmem:[%s1 + $0x2c0] sm:$0xff]
        %v1233 = vld [vmem:[%s1 + $0x2c8] sm:$0xff]
        %v1234 = vld [vmem:[%s1 + $0x2d0] sm:$0xff]
        %v1235 = vld [vmem:[%s1 + $0x2d8] sm:$0xff]
        %v1236 = vld [vmem:[%s1 + $0x2e0] sm:$0xff]
        %v1237 = vld [vmem:[%s1 + $0x2e8] sm:$0xff]
        %v1238 = vld [vmem:[%s1 + $0x2f0] sm:$0x11]
        %v1239 = vld [vmem:[%s1 + $0x2f8] sm:$0x11]
        %v1336 = vunpack.c.l.b16 %v1144
        %v1337 = vunpack.c.h.b16 %v1144
        %v1338 = vunpack.c.l.b16 %v1145
        %v1339 = vunpack.c.h.b16 %v1145
        %v1340 = vunpack.c.l.b16 %v1146
        %v1341 = vunpack.c.h.b16 %v1146
        %v1342 = vunpack.c.l.b16 %v1147
        %v1343 = vunpack.c.h.b16 %v1147
        %v1344 = vunpack.c.l.b16 %v1148
        %v1345 = vunpack.c.h.b16 %v1148
        %v1346 = vunpack.c.l.b16 %v1149
        %v1347 = vunpack.c.h.b16 %v1149
        %v1348 = vunpack.c.l.b16 %v1150
        %v1349 = vunpack.c.h.b16 %v1150
        %v1350 = vunpack.c.l.b16 %v1151
        %v1351 = vunpack.c.h.b16 %v1151
        %v1352 = vunpack.c.l.b16 %v1152
        %v1353 = vunpack.c.h.b16 %v1152
        %v1354 = vunpack.c.l.b16 %v1153
        %v1355 = vunpack.c.h.b16 %v1153
        %v1356 = vunpack.c.l.b16 %v1154
        %v1357 = vunpack.c.h.b16 %v1154
        %v1358 = vunpack.c.l.b16 %v1155
        %v1359 = vunpack.c.h.b16 %v1155
        %v1360 = vunpack.c.l.b16 %v1156
        %v1361 = vunpack.c.h.b16 %v1156
        %v1362 = vunpack.c.l.b16 %v1157
        %v1363 = vunpack.c.h.b16 %v1157
        %v1364 = vunpack.c.l.b16 %v1158
        %v1365 = vunpack.c.h.b16 %v1158
        %v1366 = vunpack.c.l.b16 %v1159
        %v1367 = vunpack.c.h.b16 %v1159
        %v1368 = vunpack.c.l.b16 %v1160
        %v1369 = vunpack.c.h.b16 %v1160
        %v1370 = vunpack.c.l.b16 %v1161
        %v1371 = vunpack.c.h.b16 %v1161
        %v1372 = vunpack.c.l.b16 %v1162
        %v1373 = vunpack.c.h.b16 %v1162
        %v1374 = vunpack.c.l.b16 %v1163
        %v1375 = vunpack.c.h.b16 %v1163
        %v1376 = vunpack.c.l.b16 %v1164
        %v1377 = vunpack.c.h.b16 %v1164
        %v1378 = vunpack.c.l.b16 %v1165
        %v1379 = vunpack.c.h.b16 %v1165
        %v1380 = vunpack.c.l.b16 %v1166
        %v1381 = vunpack.c.h.b16 %v1166
        %v1382 = vunpack.c.l.b16 %v1167
        %v1383 = vunpack.c.h.b16 %v1167
        %v1384 = vunpack.c.l.b16 %v1168
        %v1385 = vunpack.c.h.b16 %v1168
        %v1386 = vunpack.c.l.b16 %v1169
        %v1387 = vunpack.c.h.b16 %v1169
        %v1388 = vunpack.c.l.b16 %v1170
        %v1389 = vunpack.c.h.b16 %v1170
        %v1390 = vunpack.c.l.b16 %v1171
        %v1391 = vunpack.c.h.b16 %v1171
        %v1392 = vunpack.c.l.b16 %v1172
        %v1393 = vunpack.c.h.b16 %v1172
        %v1394 = vunpack.c.l.b16 %v1173
        %v1395 = vunpack.c.h.b16 %v1173
        %v1396 = vunpack.c.l.b16 %v1174
        %v1397 = vunpack.c.h.b16 %v1174
        %v1398 = vunpack.c.l.b16 %v1175
        %v1399 = vunpack.c.h.b16 %v1175
        %v1400 = vunpack.c.l.b16 %v1176
        %v1401 = vunpack.c.h.b16 %v1176
        %v1402 = vunpack.c.l.b16 %v1177
        %v1403 = vunpack.c.h.b16 %v1177
        %v1404 = vunpack.c.l.b16 %v1178
        %v1405 = vunpack.c.h.b16 %v1178
        %v1406 = vunpack.c.l.b16 %v1179
        %v1407 = vunpack.c.h.b16 %v1179
        %v1408 = vunpack.c.l.b16 %v1180
        %v1409 = vunpack.c.h.b16 %v1180
        %v1410 = vunpack.c.l.b16 %v1181
        %v1411 = vunpack.c.h.b16 %v1181
        %v1412 = vunpack.c.l.b16 %v1182
        %v1413 = vunpack.c.h.b16 %v1182
        %v1414 = vunpack.c.l.b16 %v1183
        %v1415 = vunpack.c.h.b16 %v1183
        %v1416 = vunpack.c.l.b16 %v1184
        %v1417 = vunpack.c.h.b16 %v1184
        %v1418 = vunpack.c.l.b16 %v1185
        %v1419 = vunpack.c.h.b16 %v1185
        %v1420 = vunpack.c.l.b16 %v1186
        %v1421 = vunpack.c.h.b16 %v1186
        %v1422 = vunpack.c.l.b16 %v1187
        %v1423 = vunpack.c.h.b16 %v1187
        %v1424 = vunpack.c.l.b16 %v1188
        %v1425 = vunpack.c.h.b16 %v1188
        %v1426 = vunpack.c.l.b16 %v1189
        %v1427 = vunpack.c.h.b16 %v1189
        %v1428 = vunpack.c.l.b16 %v1190
        %v1429 = vunpack.c.h.b16 %v1190
        %v1430 = vunpack.c.l.b16 %v1191
        %v1431 = vunpack.c.h.b16 %v1191
        %v1432 = vunpack.c.l.b16 %v1192
        %v1433 = vunpack.c.h.b16 %v1192
        %v1434 = vunpack.c.l.b16 %v1193
        %v1435 = vunpack.c.h.b16 %v1193
        %v1436 = vunpack.c.l.b16 %v1194
        %v1437 = vunpack.c.h.b16 %v1194
        %v1438 = vunpack.c.l.b16 %v1195
        %v1439 = vunpack.c.h.b16 %v1195
        %v1440 = vunpack.c.l.b16 %v1196
        %v1441 = vunpack.c.h.b16 %v1196
        %v1442 = vunpack.c.l.b16 %v1197
        %v1443 = vunpack.c.h.b16 %v1197
        %v1444 = vunpack.c.l.b16 %v1198
        %v1445 = vunpack.c.h.b16 %v1198
        %v1446 = vunpack.c.l.b16 %v1199
        %v1447 = vunpack.c.h.b16 %v1199
        %v1448 = vunpack.c.l.b16 %v1200
        %v1449 = vunpack.c.h.b16 %v1200
        %v1450 = vunpack.c.l.b16 %v1201
        %v1451 = vunpack.c.h.b16 %v1201
        %v1452 = vunpack.c.l.b16 %v1202
        %v1453 = vunpack.c.h.b16 %v1202
        %v1454 = vunpack.c.l.b16 %v1203
        %v1455 = vunpack.c.h.b16 %v1203
        %v1456 = vunpack.c.l.b16 %v1204
        %v1457 = vunpack.c.h.b16 %v1204
        %v1458 = vunpack.c.l.b16 %v1205
        %v1459 = vunpack.c.h.b16 %v1205
        %v1460 = vunpack.c.l.b16 %v1206
        %v1461 = vunpack.c.h.b16 %v1206
        %v1462 = vunpack.c.l.b16 %v1207
        %v1463 = vunpack.c.h.b16 %v1207
        %v1464 = vunpack.c.l.b16 %v1208
        %v1465 = vunpack.c.h.b16 %v1208
        %v1466 = vunpack.c.l.b16 %v1209
        %v1467 = vunpack.c.h.b16 %v1209
        %v1468 = vunpack.c.l.b16 %v1210
        %v1469 = vunpack.c.h.b16 %v1210
        %v1470 = vunpack.c.l.b16 %v1211
        %v1471 = vunpack.c.h.b16 %v1211
        %v1472 = vunpack.c.l.b16 %v1212
        %v1473 = vunpack.c.h.b16 %v1212
        %v1474 = vunpack.c.l.b16 %v1213
        %v1475 = vunpack.c.h.b16 %v1213
        %v1476 = vunpack.c.l.b16 %v1214
        %v1477 = vunpack.c.h.b16 %v1214
        %v1478 = vunpack.c.l.b16 %v1215
        %v1479 = vunpack.c.h.b16 %v1215
        %v1480 = vunpack.c.l.b16 %v1216
        %v1481 = vunpack.c.h.b16 %v1216
        %v1482 = vunpack.c.l.b16 %v1217
        %v1483 = vunpack.c.h.b16 %v1217
        %v1484 = vunpack.c.l.b16 %v1218
        %v1485 = vunpack.c.h.b16 %v1218
        %v1486 = vunpack.c.l.b16 %v1219
        %v1487 = vunpack.c.h.b16 %v1219
        %v1488 = vunpack.c.l.b16 %v1220
        %v1489 = vunpack.c.h.b16 %v1220
        %v1490 = vunpack.c.l.b16 %v1221
        %v1491 = vunpack.c.h.b16 %v1221
        %v1492 = vunpack.c.l.b16 %v1222
        %v1493 = vunpack.c.h.b16 %v1222
        %v1494 = vunpack.c.l.b16 %v1223
        %v1495 = vunpack.c.h.b16 %v1223
        %v1496 = vunpack.c.l.b16 %v1224
        %v1497 = vunpack.c.h.b16 %v1224
        %v1498 = vunpack.c.l.b16 %v1225
        %v1499 = vunpack.c.h.b16 %v1225
        %v1500 = vunpack.c.l.b16 %v1226
        %v1501 = vunpack.c.h.b16 %v1226
        %v1502 = vunpack.c.l.b16 %v1227
        %v1503 = vunpack.c.h.b16 %v1227
        %v1504 = vunpack.c.l.b16 %v1228
        %v1505 = vunpack.c.h.b16 %v1228
        %v1506 = vunpack.c.l.b16 %v1229
        %v1507 = vunpack.c.h.b16 %v1229
        %v1508 = vunpack.c.l.b16 %v1230
        %v1509 = vunpack.c.h.b16 %v1230
        %v1510 = vunpack.c.l.b16 %v1231
        %v1511 = vunpack.c.h.b16 %v1231
        %v1512 = vunpack.c.l.b16 %v1232
        %v1513 = vunpack.c.h.b16 %v1232
        %v1514 = vunpack.c.l.b16 %v1233
        %v1515 = vunpack.c.h.b16 %v1233
        %v1516 = vunpack.c.l.b16 %v1234
        %v1517 = vunpack.c.h.b16 %v1234
        %v1518 = vunpack.c.l.b16 %v1235
        %v1519 = vunpack.c.h.b16 %v1235
        %v1520 = vunpack.c.l.b16 %v1236
        %v1521 = vunpack.c.h.b16 %v1236
        %v1522 = vunpack.c.l.b16 %v1237
        %v1523 = vunpack.c.h.b16 %v1237
        %v1524 = vunpack.c.l.b16 %v1238
        %v1525 = vunpack.c.h.b16 %v1238
        %v1526 = vunpack.c.l.b16 %v1239
        %v1527 = vunpack.c.h.b16 %v1239
        %v1528 = vpack.c.b16 %v1340, %v1336
        %v1529 = vpack.c.b16 %v1341, %v1337
        %v1530 = vpack.c.b16 %v1342, %v1338
        %v1531 = vpack.c.b16 %v1343, %v1339
        %v1532 = vpack.c.b16 %v1348, %v1344
        %v1533 = vpack.c.b16 %v1349, %v1345
        %v1534 = vpack.c.b16 %v1350, %v1346
        %v1535 = vpack.c.b16 %v1351, %v1347
        %v1536 = vpack.c.b16 %v1356, %v1352
        %v1537 = vpack.c.b16 %v1357, %v1353
        %v1538 = vpack.c.b16 %v1358, %v1354
        %v1539 = vpack.c.b16 %v1359, %v1355
        %v1540 = vpack.c.b16 %v1364, %v1360
        %v1541 = vpack.c.b16 %v1365, %v1361
        %v1542 = vpack.c.b16 %v1366, %v1362
        %v1543 = vpack.c.b16 %v1367, %v1363
        %v1544 = vpack.c.b16 %v1372, %v1368
        %v1545 = vpack.c.b16 %v1373, %v1369
        %v1546 = vpack.c.b16 %v1374, %v1370
        %v1547 = vpack.c.b16 %v1375, %v1371
        %v1548 = vpack.c.b16 %v1380, %v1376
        %v1549 = vpack.c.b16 %v1381, %v1377
        %v1550 = vpack.c.b16 %v1382, %v1378
        %v1551 = vpack.c.b16 %v1383, %v1379
        %v1552 = vpack.c.b16 %v1388, %v1384
        %v1553 = vpack.c.b16 %v1389, %v1385
        %v1554 = vpack.c.b16 %v1390, %v1386
        %v1555 = vpack.c.b16 %v1391, %v1387
        %v1556 = vpack.c.b16 %v1396, %v1392
        %v1557 = vpack.c.b16 %v1397, %v1393
        %v1558 = vpack.c.b16 %v1398, %v1394
        %v1559 = vpack.c.b16 %v1399, %v1395
        %v1560 = vpack.c.b16 %v1404, %v1400
        %v1561 = vpack.c.b16 %v1405, %v1401
        %v1562 = vpack.c.b16 %v1406, %v1402
        %v1563 = vpack.c.b16 %v1407, %v1403
        %v1564 = vpack.c.b16 %v1412, %v1408
        %v1565 = vpack.c.b16 %v1413, %v1409
        %v1566 = vpack.c.b16 %v1414, %v1410
        %v1567 = vpack.c.b16 %v1415, %v1411
        %v1568 = vpack.c.b16 %v1420, %v1416
        %v1569 = vpack.c.b16 %v1421, %v1417
        %v1570 = vpack.c.b16 %v1422, %v1418
        %v1571 = vpack.c.b16 %v1423, %v1419
        %v1572 = vpack.c.b16 %v1428, %v1424
        %v1573 = vpack.c.b16 %v1429, %v1425
        %v1574 = vpack.c.b16 %v1430, %v1426
        %v1575 = vpack.c.b16 %v1431, %v1427
        %v1576 = vpack.c.b16 %v1436, %v1432
        %v1577 = vpack.c.b16 %v1437, %v1433
        %v1578 = vpack.c.b16 %v1438, %v1434
        %v1579 = vpack.c.b16 %v1439, %v1435
        %v1580 = vpack.c.b16 %v1444, %v1440
        %v1581 = vpack.c.b16 %v1445, %v1441
        %v1582 = vpack.c.b16 %v1446, %v1442
        %v1583 = vpack.c.b16 %v1447, %v1443
        %v1584 = vpack.c.b16 %v1452, %v1448
        %v1585 = vpack.c.b16 %v1453, %v1449
        %v1586 = vpack.c.b16 %v1454, %v1450
        %v1587 = vpack.c.b16 %v1455, %v1451
        %v1588 = vpack.c.b16 %v1460, %v1456
        %v1589 = vpack.c.b16 %v1461, %v1457
        %v1590 = vpack.c.b16 %v1462, %v1458
        %v1591 = vpack.c.b16 %v1463, %v1459
        %v1592 = vpack.c.b16 %v1468, %v1464
        %v1593 = vpack.c.b16 %v1469, %v1465
        %v1594 = vpack.c.b16 %v1470, %v1466
        %v1595 = vpack.c.b16 %v1471, %v1467
        %v1596 = vpack.c.b16 %v1476, %v1472
        %v1597 = vpack.c.b16 %v1477, %v1473
        %v1598 = vpack.c.b16 %v1478, %v1474
        %v1599 = vpack.c.b16 %v1479, %v1475
        %v1600 = vpack.c.b16 %v1484, %v1480
        %v1601 = vpack.c.b16 %v1485, %v1481
        %v1602 = vpack.c.b16 %v1486, %v1482
        %v1603 = vpack.c.b16 %v1487, %v1483
        %v1604 = vpack.c.b16 %v1492, %v1488
        %v1605 = vpack.c.b16 %v1493, %v1489
        %v1606 = vpack.c.b16 %v1494, %v1490
        %v1607 = vpack.c.b16 %v1495, %v1491
        %v1608 = vpack.c.b16 %v1500, %v1496
        %v1609 = vpack.c.b16 %v1501, %v1497
        %v1610 = vpack.c.b16 %v1502, %v1498
        %v1611 = vpack.c.b16 %v1503, %v1499
        %v1612 = vpack.c.b16 %v1508, %v1504
        %v1613 = vpack.c.b16 %v1509, %v1505
        %v1614 = vpack.c.b16 %v1510, %v1506
        %v1615 = vpack.c.b16 %v1511, %v1507
        %v1616 = vpack.c.b16 %v1516, %v1512
        %v1617 = vpack.c.b16 %v1517, %v1513
        %v1618 = vpack.c.b16 %v1518, %v1514
        %v1619 = vpack.c.b16 %v1519, %v1515
        %v1620 = vpack.c.b16 %v1524, %v1520
        %v1621 = vpack.c.b16 %v1525, %v1521
        %v1622 = vpack.c.b16 %v1526, %v1522
        %v1623 = vpack.c.b16 %v1527, %v1523
        %vm1716 = vcmask 998400
        %v1718 = vsel %vm1716, %v1119, 0
        %v1721 = vsel %vm1716, %v1122, 0
        %v1724 = vsel %vm1716, %v1125, 0
        %v1727 = vsel %vm1716, %v1128, 0
        %v1730 = vsel %vm1716, %v1131, 0
        %v1733 = vsel %vm1716, %v1134, 0
        %v1736 = vsel %vm1716, %v1137, 0
        %v1739 = vsel %vm1716, %v1140, 0
        %v1742 = vsel %vm1716, %v1143, 0
        %vm1744 = vcmask 1044480
        %v1746 = vsel %vm1744, %v1620, 0
        %v1749 = vsel %vm1744, %v1621, 0
        %v1752 = vsel %vm1744, %v1622, 0
        %v1755 = vsel %vm1744, %v1623, 0
        %1757 = vmatpush.bf16.msra.mxu0 %v1556
        %1758 = vmatpush.bf16.msra.mxu0 %v1552
        %1759 = vmatpush.bf16.msra.mxu0 %v1548
        %1760 = vmatpush.bf16.msra.mxu0 %v1544
        %1761 = vmatpush.bf16.msra.mxu0 %v1540
        %1762 = vmatpush.bf16.msra.mxu0 %v1536
        %1763 = vmatpush.bf16.msra.mxu0 %v1532
        %1764 = vmatpush.bf16.msra.mxu0 %v1528
        %1765 = vmatmul.bf16.gmra.mxu0 %v1117
        %v1766 = vpop.f32.mrf.mxu0
        %v1767 = vadd.f32 0.0, %v1766
        %v1768 = vpop.f32.mrf.mxu0
        %v1769 = vadd.f32 0.0, %v1768
        %1770 = vmatmul.bf16.gmra.mxu0 %v1120
        %v1771 = vpop.f32.mrf.mxu0
        %v1772 = vadd.f32 0.0, %v1771
        %v1773 = vpop.f32.mrf.mxu0
        %v1774 = vadd.f32 0.0, %v1773
        %1775 = vmatmul.bf16.gmra.mxu0 %v1123
        %v1776 = vpop.f32.mrf.mxu0
        %v1777 = vadd.f32 0.0, %v1776
        %v1778 = vpop.f32.mrf.mxu0
        %v1779 = vadd.f32 0.0, %v1778
        %1780 = vmatmul.bf16.gmra.mxu0 %v1126
        %v1781 = vpop.f32.mrf.mxu0
        %v1782 = vadd.f32 0.0, %v1781
        %v1783 = vpop.f32.mrf.mxu0
        %v1784 = vadd.f32 0.0, %v1783
        %1785 = vmatmul.bf16.gmra.mxu0 %v1129
        %v1786 = vpop.f32.mrf.mxu0
        %v1787 = vadd.f32 0.0, %v1786
        %v1788 = vpop.f32.mrf.mxu0
        %v1789 = vadd.f32 0.0, %v1788
        %1790 = vmatmul.bf16.gmra.mxu0 %v1132
        %v1791 = vpop.f32.mrf.mxu0
        %v1792 = vadd.f32 0.0, %v1791
        %v1793 = vpop.f32.mrf.mxu0
        %v1794 = vadd.f32 0.0, %v1793
        %1795 = vmatmul.bf16.gmra.mxu0 %v1135
        %v1796 = vpop.f32.mrf.mxu0
        %v1797 = vadd.f32 0.0, %v1796
        %v1798 = vpop.f32.mrf.mxu0
        %v1799 = vadd.f32 0.0, %v1798
        %1800 = vmatmul.bf16.gmra.mxu0 %v1138
        %v1801 = vpop.f32.mrf.mxu0
        %v1802 = vadd.f32 0.0, %v1801
        %v1803 = vpop.f32.mrf.mxu0
        %v1804 = vadd.f32 0.0, %v1803
        %1805 = vmatmul.bf16.gmra.mxu0 %v1141
        %v1806 = vpop.f32.mrf.mxu0
        %v1807 = vadd.f32 0.0, %v1806
        %v1808 = vpop.f32.mrf.mxu0
        %v1809 = vadd.f32 0.0, %v1808
        %1810 = vdwg.mxu0
        %1811 = vmatpush.bf16.msra.mxu0 %v1588
        %1812 = vmatpush.bf16.msra.mxu0 %v1584
        %1813 = vmatpush.bf16.msra.mxu0 %v1580
        %1814 = vmatpush.bf16.msra.mxu0 %v1576
        %1815 = vmatpush.bf16.msra.mxu0 %v1572
        %1816 = vmatpush.bf16.msra.mxu0 %v1568
        %1817 = vmatpush.bf16.msra.mxu0 %v1564
        %1818 = vmatpush.bf16.msra.mxu0 %v1560
        %1819 = vmatmul.bf16.gmra.mxu0 %v1118
        %v1820 = vpop.f32.mrf.mxu0
        %v1821 = vadd.f32 %v1767, %v1820
        %v1822 = vpop.f32.mrf.mxu0
        %v1823 = vadd.f32 %v1769, %v1822
        %1824 = vmatmul.bf16.gmra.mxu0 %v1121
        %v1825 = vpop.f32.mrf.mxu0
        %v1826 = vadd.f32 %v1772, %v1825
        %v1827 = vpop.f32.mrf.mxu0
        %v1828 = vadd.f32 %v1774, %v1827
        %1829 = vmatmul.bf16.gmra.mxu0 %v1124
        %v1830 = vpop.f32.mrf.mxu0
        %v1831 = vadd.f32 %v1777, %v1830
        %v1832 = vpop.f32.mrf.mxu0
        %v1833 = vadd.f32 %v1779, %v1832
        %1834 = vmatmul.bf16.gmra.mxu0 %v1127
        %v1835 = vpop.f32.mrf.mxu0
        %v1836 = vadd.f32 %v1782, %v1835
        %v1837 = vpop.f32.mrf.mxu0
        %v1838 = vadd.f32 %v1784, %v1837
        %1839 = vmatmul.bf16.gmra.mxu0 %v1130
        %v1840 = vpop.f32.mrf.mxu0
        %v1841 = vadd.f32 %v1787, %v1840
        %v1842 = vpop.f32.mrf.mxu0
        %v1843 = vadd.f32 %v1789, %v1842
        %1844 = vmatmul.bf16.gmra.mxu0 %v1133
        %v1845 = vpop.f32.mrf.mxu0
        %v1846 = vadd.f32 %v1792, %v1845
        %v1847 = vpop.f32.mrf.mxu0
        %v1848 = vadd.f32 %v1794, %v1847
        %1849 = vmatmul.bf16.gmra.mxu0 %v1136
        %v1850 = vpop.f32.mrf.mxu0
        %v1851 = vadd.f32 %v1797, %v1850
        %v1852 = vpop.f32.mrf.mxu0
        %v1853 = vadd.f32 %v1799, %v1852
        %1854 = vmatmul.bf16.gmra.mxu0 %v1139
        %v1855 = vpop.f32.mrf.mxu0
        %v1856 = vadd.f32 %v1802, %v1855
        %v1857 = vpop.f32.mrf.mxu0
        %v1858 = vadd.f32 %v1804, %v1857
        %1859 = vmatmul.bf16.gmra.mxu0 %v1142
        %v1860 = vpop.f32.mrf.mxu0
        %v1861 = vadd.f32 %v1807, %v1860
        %v1862 = vpop.f32.mrf.mxu0
        %v1863 = vadd.f32 %v1809, %v1862
        %1864 = vdwg.mxu0
        %1865 = vmatpush.bf16.msra.mxu0 %v1746
        %1866 = vmatpush.bf16.msra.mxu0 %v1616
        %1867 = vmatpush.bf16.msra.mxu0 %v1612
        %1868 = vmatpush.bf16.msra.mxu0 %v1608
        %1869 = vmatpush.bf16.msra.mxu0 %v1604
        %1870 = vmatpush.bf16.msra.mxu0 %v1600
        %1871 = vmatpush.bf16.msra.mxu0 %v1596
        %1872 = vmatpush.bf16.msra.mxu0 %v1592
        %1873 = vmatmul.bf16.gmra.mxu0 %v1718
        %v1874 = vpop.f32.mrf.mxu0
        %v1875 = vadd.f32 %v1821, %v1874
        %v1876 = vpop.f32.mrf.mxu0
        %v1877 = vadd.f32 %v1823, %v1876
        %1878 = vmatmul.bf16.gmra.mxu0 %v1721
        %v1879 = vpop.f32.mrf.mxu0
        %v1880 = vadd.f32 %v1826, %v1879
        %v1881 = vpop.f32.mrf.mxu0
        %v1882 = vadd.f32 %v1828, %v1881
        %1883 = vmatmul.bf16.gmra.mxu0 %v1724
        %v1884 = vpop.f32.mrf.mxu0
        %v1885 = vadd.f32 %v1831, %v1884
        %v1886 = vpop.f32.mrf.mxu0
        %v1887 = vadd.f32 %v1833, %v1886
        %1888 = vmatmul.bf16.gmra.mxu0 %v1727
        %v1889 = vpop.f32.mrf.mxu0
        %v1890 = vadd.f32 %v1836, %v1889
        %v1891 = vpop.f32.mrf.mxu0
        %v1892 = vadd.f32 %v1838, %v1891
        %1893 = vmatmul.bf16.gmra.mxu0 %v1730
        %v1894 = vpop.f32.mrf.mxu0
        %v1895 = vadd.f32 %v1841, %v1894
        %v1896 = vpop.f32.mrf.mxu0
        %v1897 = vadd.f32 %v1843, %v1896
        %1898 = vmatmul.bf16.gmra.mxu0 %v1733
        %v1899 = vpop.f32.mrf.mxu0
        %v1900 = vadd.f32 %v1846, %v1899
        %v1901 = vpop.f32.mrf.mxu0
        %v1902 = vadd.f32 %v1848, %v1901
        %1903 = vmatmul.bf16.gmra.mxu0 %v1736
        %v1904 = vpop.f32.mrf.mxu0
        %v1905 = vadd.f32 %v1851, %v1904
        %v1906 = vpop.f32.mrf.mxu0
        %v1907 = vadd.f32 %v1853, %v1906
        %1908 = vmatmul.bf16.gmra.mxu0 %v1739
        %v1909 = vpop.f32.mrf.mxu0
        %v1910 = vadd.f32 %v1856, %v1909
        %v1911 = vpop.f32.mrf.mxu0
        %v1912 = vadd.f32 %v1858, %v1911
        %1913 = vmatmul.bf16.gmra.mxu0 %v1742
        %v1914 = vpop.f32.mrf.mxu0
        %v1915 = vadd.f32 %v1861, %v1914
        %v1916 = vpop.f32.mrf.mxu0
        %v1917 = vadd.f32 %v1863, %v1916
        %1918 = vdwg.mxu0
        %1919 = vmatpush.bf16.msra.mxu0 %v1557
        %1920 = vmatpush.bf16.msra.mxu0 %v1553
        %1921 = vmatpush.bf16.msra.mxu0 %v1549
        %1922 = vmatpush.bf16.msra.mxu0 %v1545
        %1923 = vmatpush.bf16.msra.mxu0 %v1541
        %1924 = vmatpush.bf16.msra.mxu0 %v1537
        %1925 = vmatpush.bf16.msra.mxu0 %v1533
        %1926 = vmatpush.bf16.msra.mxu0 %v1529
        %1927 = vmatmul.bf16.gmra.mxu0 %v1117
        %v1928 = vpop.f32.mrf.mxu0
        %v1929 = vadd.f32 0.0, %v1928
        %v1930 = vpop.f32.mrf.mxu0
        %v1931 = vadd.f32 0.0, %v1930
        %1932 = vmatmul.bf16.gmra.mxu0 %v1120
        %v1933 = vpop.f32.mrf.mxu0
        %v1934 = vadd.f32 0.0, %v1933
        %v1935 = vpop.f32.mrf.mxu0
        %v1936 = vadd.f32 0.0, %v1935
        %1937 = vmatmul.bf16.gmra.mxu0 %v1123
        %v1938 = vpop.f32.mrf.mxu0
        %v1939 = vadd.f32 0.0, %v1938
        %v1940 = vpop.f32.mrf.mxu0
        %v1941 = vadd.f32 0.0, %v1940
        %1942 = vmatmul.bf16.gmra.mxu0 %v1126
        %v1943 = vpop.f32.mrf.mxu0
        %v1944 = vadd.f32 0.0, %v1943
        %v1945 = vpop.f32.mrf.mxu0
        %v1946 = vadd.f32 0.0, %v1945
        %1947 = vmatmul.bf16.gmra.mxu0 %v1129
        %v1948 = vpop.f32.mrf.mxu0
        %v1949 = vadd.f32 0.0, %v1948
        %v1950 = vpop.f32.mrf.mxu0
        %v1951 = vadd.f32 0.0, %v1950
        %1952 = vmatmul.bf16.gmra.mxu0 %v1132
        %v1953 = vpop.f32.mrf.mxu0
        %v1954 = vadd.f32 0.0, %v1953
        %v1955 = vpop.f32.mrf.mxu0
        %v1956 = vadd.f32 0.0, %v1955
        %1957 = vmatmul.bf16.gmra.mxu0 %v1135
        %v1958 = vpop.f32.mrf.mxu0
        %v1959 = vadd.f32 0.0, %v1958
        %v1960 = vpop.f32.mrf.mxu0
        %v1961 = vadd.f32 0.0, %v1960
        %1962 = vmatmul.bf16.gmra.mxu0 %v1138
        %v1963 = vpop.f32.mrf.mxu0
        %v1964 = vadd.f32 0.0, %v1963
        %v1965 = vpop.f32.mrf.mxu0
        %v1966 = vadd.f32 0.0, %v1965
        %1967 = vmatmul.bf16.gmra.mxu0 %v1141
        %v1968 = vpop.f32.mrf.mxu0
        %v1969 = vadd.f32 0.0, %v1968
        %v1970 = vpop.f32.mrf.mxu0
        %v1971 = vadd.f32 0.0, %v1970
        %1972 = vdwg.mxu0
        %1973 = vmatpush.bf16.msra.mxu0 %v1589
        %1974 = vmatpush.bf16.msra.mxu0 %v1585
        %1975 = vmatpush.bf16.msra.mxu0 %v1581
        %1976 = vmatpush.bf16.msra.mxu0 %v1577
        %1977 = vmatpush.bf16.msra.mxu0 %v1573
        %1978 = vmatpush.bf16.msra.mxu0 %v1569
        %1979 = vmatpush.bf16.msra.mxu0 %v1565
        %1980 = vmatpush.bf16.msra.mxu0 %v1561
        %1981 = vmatmul.bf16.gmra.mxu0 %v1118
        %v1982 = vpop.f32.mrf.mxu0
        %v1983 = vadd.f32 %v1929, %v1982
        %v1984 = vpop.f32.mrf.mxu0
        %v1985 = vadd.f32 %v1931, %v1984
        %1986 = vmatmul.bf16.gmra.mxu0 %v1121
        %v1987 = vpop.f32.mrf.mxu0
        %v1988 = vadd.f32 %v1934, %v1987
        %v1989 = vpop.f32.mrf.mxu0
        %v1990 = vadd.f32 %v1936, %v1989
        %1991 = vmatmul.bf16.gmra.mxu0 %v1124
        %v1992 = vpop.f32.mrf.mxu0
        %v1993 = vadd.f32 %v1939, %v1992
        %v1994 = vpop.f32.mrf.mxu0
        %v1995 = vadd.f32 %v1941, %v1994
        %1996 = vmatmul.bf16.gmra.mxu0 %v1127
        %v1997 = vpop.f32.mrf.mxu0
        %v1998 = vadd.f32 %v1944, %v1997
        %v1999 = vpop.f32.mrf.mxu0
        %v2000 = vadd.f32 %v1946, %v1999
        %2001 = vmatmul.bf16.gmra.mxu0 %v1130
        %v2002 = vpop.f32.mrf.mxu0
        %v2003 = vadd.f32 %v1949, %v2002
        %v2004 = vpop.f32.mrf.mxu0
        %v2005 = vadd.f32 %v1951, %v2004
        %2006 = vmatmul.bf16.gmra.mxu0 %v1133
        %v2007 = vpop.f32.mrf.mxu0
        %v2008 = vadd.f32 %v1954, %v2007
        %v2009 = vpop.f32.mrf.mxu0
        %v2010 = vadd.f32 %v1956, %v2009
        %2011 = vmatmul.bf16.gmra.mxu0 %v1136
        %v2012 = vpop.f32.mrf.mxu0
        %v2013 = vadd.f32 %v1959, %v2012
        %v2014 = vpop.f32.mrf.mxu0
        %v2015 = vadd.f32 %v1961, %v2014
        %2016 = vmatmul.bf16.gmra.mxu0 %v1139
        %v2017 = vpop.f32.mrf.mxu0
        %v2018 = vadd.f32 %v1964, %v2017
        %v2019 = vpop.f32.mrf.mxu0
        %v2020 = vadd.f32 %v1966, %v2019
        %2021 = vmatmul.bf16.gmra.mxu0 %v1142
        %v2022 = vpop.f32.mrf.mxu0
        %v2023 = vadd.f32 %v1969, %v2022
        %v2024 = vpop.f32.mrf.mxu0
        %v2025 = vadd.f32 %v1971, %v2024
        %2026 = vdwg.mxu0
        %2027 = vmatpush.bf16.msra.mxu0 %v1749
        %2028 = vmatpush.bf16.msra.mxu0 %v1617
        %2029 = vmatpush.bf16.msra.mxu0 %v1613
        %2030 = vmatpush.bf16.msra.mxu0 %v1609
        %2031 = vmatpush.bf16.msra.mxu0 %v1605
        %2032 = vmatpush.bf16.msra.mxu0 %v1601
        %2033 = vmatpush.bf16.msra.mxu0 %v1597
        %2034 = vmatpush.bf16.msra.mxu0 %v1593
        %2035 = vmatmul.bf16.gmra.mxu0 %v1718
        %v2036 = vpop.f32.mrf.mxu0
        %v2037 = vadd.f32 %v1983, %v2036
        %v2038 = vpop.f32.mrf.mxu0
        %v2039 = vadd.f32 %v1985, %v2038
        %2040 = vmatmul.bf16.gmra.mxu0 %v1721
        %v2041 = vpop.f32.mrf.mxu0
        %v2042 = vadd.f32 %v1988, %v2041
        %v2043 = vpop.f32.mrf.mxu0
        %v2044 = vadd.f32 %v1990, %v2043
        %2045 = vmatmul.bf16.gmra.mxu0 %v1724
        %v2046 = vpop.f32.mrf.mxu0
        %v2047 = vadd.f32 %v1993, %v2046
        %v2048 = vpop.f32.mrf.mxu0
        %v2049 = vadd.f32 %v1995, %v2048
        %2050 = vmatmul.bf16.gmra.mxu0 %v1727
        %v2051 = vpop.f32.mrf.mxu0
        %v2052 = vadd.f32 %v1998, %v2051
        %v2053 = vpop.f32.mrf.mxu0
        %v2054 = vadd.f32 %v2000, %v2053
        %2055 = vmatmul.bf16.gmra.mxu0 %v1730
        %v2056 = vpop.f32.mrf.mxu0
        %v2057 = vadd.f32 %v2003, %v2056
        %v2058 = vpop.f32.mrf.mxu0
        %v2059 = vadd.f32 %v2005, %v2058
        %2060 = vmatmul.bf16.gmra.mxu0 %v1733
        %v2061 = vpop.f32.mrf.mxu0
        %v2062 = vadd.f32 %v2008, %v2061
        %v2063 = vpop.f32.mrf.mxu0
        %v2064 = vadd.f32 %v2010, %v2063
        %2065 = vmatmul.bf16.gmra.mxu0 %v1736
        %v2066 = vpop.f32.mrf.mxu0
        %v2067 = vadd.f32 %v2013, %v2066
        %v2068 = vpop.f32.mrf.mxu0
        %v2069 = vadd.f32 %v2015, %v2068
        %2070 = vmatmul.bf16.gmra.mxu0 %v1739
        %v2071 = vpop.f32.mrf.mxu0
        %v2072 = vadd.f32 %v2018, %v2071
        %v2073 = vpop.f32.mrf.mxu0
        %v2074 = vadd.f32 %v2020, %v2073
        %2075 = vmatmul.bf16.gmra.mxu0 %v1742
        %v2076 = vpop.f32.mrf.mxu0
        %v2077 = vadd.f32 %v2023, %v2076
        %v2078 = vpop.f32.mrf.mxu0
        %v2079 = vadd.f32 %v2025, %v2078
        %2080 = vdwg.mxu0
        %2081 = vmatpush.bf16.msra.mxu0 %v1558
        %2082 = vmatpush.bf16.msra.mxu0 %v1554
        %2083 = vmatpush.bf16.msra.mxu0 %v1550
        %2084 = vmatpush.bf16.msra.mxu0 %v1546
        %2085 = vmatpush.bf16.msra.mxu0 %v1542
        %2086 = vmatpush.bf16.msra.mxu0 %v1538
        %2087 = vmatpush.bf16.msra.mxu0 %v1534
        %2088 = vmatpush.bf16.msra.mxu0 %v1530
        %2089 = vmatmul.bf16.gmra.mxu0 %v1117
        %v2090 = vpop.f32.mrf.mxu0
        %v2091 = vadd.f32 0.0, %v2090
        %v2092 = vpop.f32.mrf.mxu0
        %v2093 = vadd.f32 0.0, %v2092
        %2094 = vmatmul.bf16.gmra.mxu0 %v1120
        %v2095 = vpop.f32.mrf.mxu0
        %v2096 = vadd.f32 0.0, %v2095
        %v2097 = vpop.f32.mrf.mxu0
        %v2098 = vadd.f32 0.0, %v2097
        %2099 = vmatmul.bf16.gmra.mxu0 %v1123
        %v2100 = vpop.f32.mrf.mxu0
        %v2101 = vadd.f32 0.0, %v2100
        %v2102 = vpop.f32.mrf.mxu0
        %v2103 = vadd.f32 0.0, %v2102
        %2104 = vmatmul.bf16.gmra.mxu0 %v1126
        %v2105 = vpop.f32.mrf.mxu0
        %v2106 = vadd.f32 0.0, %v2105
        %v2107 = vpop.f32.mrf.mxu0
        %v2108 = vadd.f32 0.0, %v2107
        %2109 = vmatmul.bf16.gmra.mxu0 %v1129
        %v2110 = vpop.f32.mrf.mxu0
        %v2111 = vadd.f32 0.0, %v2110
        %v2112 = vpop.f32.mrf.mxu0
        %v2113 = vadd.f32 0.0, %v2112
        %2114 = vmatmul.bf16.gmra.mxu0 %v1132
        %v2115 = vpop.f32.mrf.mxu0
        %v2116 = vadd.f32 0.0, %v2115
        %v2117 = vpop.f32.mrf.mxu0
        %v2118 = vadd.f32 0.0, %v2117
        %2119 = vmatmul.bf16.gmra.mxu0 %v1135
        %v2120 = vpop.f32.mrf.mxu0
        %v2121 = vadd.f32 0.0, %v2120
        %v2122 = vpop.f32.mrf.mxu0
        %v2123 = vadd.f32 0.0, %v2122
        %2124 = vmatmul.bf16.gmra.mxu0 %v1138
        %v2125 = vpop.f32.mrf.mxu0
        %v2126 = vadd.f32 0.0, %v2125
        %v2127 = vpop.f32.mrf.mxu0
        %v2128 = vadd.f32 0.0, %v2127
        %2129 = vmatmul.bf16.gmra.mxu0 %v1141
        %v2130 = vpop.f32.mrf.mxu0
        %v2131 = vadd.f32 0.0, %v2130
        %v2132 = vpop.f32.mrf.mxu0
        %v2133 = vadd.f32 0.0, %v2132
        %2134 = vdwg.mxu0
        %2135 = vmatpush.bf16.msra.mxu0 %v1590
        %2136 = vmatpush.bf16.msra.mxu0 %v1586
        %2137 = vmatpush.bf16.msra.mxu0 %v1582
        %2138 = vmatpush.bf16.msra.mxu0 %v1578
        %2139 = vmatpush.bf16.msra.mxu0 %v1574
        %2140 = vmatpush.bf16.msra.mxu0 %v1570
        %2141 = vmatpush.bf16.msra.mxu0 %v1566
        %2142 = vmatpush.bf16.msra.mxu0 %v1562
        %2143 = vmatmul.bf16.gmra.mxu0 %v1118
        %v2144 = vpop.f32.mrf.mxu0
        %v2145 = vadd.f32 %v2091, %v2144
        %v2146 = vpop.f32.mrf.mxu0
        %v2147 = vadd.f32 %v2093, %v2146
        %2148 = vmatmul.bf16.gmra.mxu0 %v1121
        %v2149 = vpop.f32.mrf.mxu0
        %v2150 = vadd.f32 %v2096, %v2149
        %v2151 = vpop.f32.mrf.mxu0
        %v2152 = vadd.f32 %v2098, %v2151
        %2153 = vmatmul.bf16.gmra.mxu0 %v1124
        %v2154 = vpop.f32.mrf.mxu0
        %v2155 = vadd.f32 %v2101, %v2154
        %v2156 = vpop.f32.mrf.mxu0
        %v2157 = vadd.f32 %v2103, %v2156
        %2158 = vmatmul.bf16.gmra.mxu0 %v1127
        %v2159 = vpop.f32.mrf.mxu0
        %v2160 = vadd.f32 %v2106, %v2159
        %v2161 = vpop.f32.mrf.mxu0
        %v2162 = vadd.f32 %v2108, %v2161
        %2163 = vmatmul.bf16.gmra.mxu0 %v1130
        %v2164 = vpop.f32.mrf.mxu0
        %v2165 = vadd.f32 %v2111, %v2164
        %v2166 = vpop.f32.mrf.mxu0
        %v2167 = vadd.f32 %v2113, %v2166
        %2168 = vmatmul.bf16.gmra.mxu0 %v1133
        %v2169 = vpop.f32.mrf.mxu0
        %v2170 = vadd.f32 %v2116, %v2169
        %v2171 = vpop.f32.mrf.mxu0
        %v2172 = vadd.f32 %v2118, %v2171
        %2173 = vmatmul.bf16.gmra.mxu0 %v1136
        %v2174 = vpop.f32.mrf.mxu0
        %v2175 = vadd.f32 %v2121, %v2174
        %v2176 = vpop.f32.mrf.mxu0
        %v2177 = vadd.f32 %v2123, %v2176
        %2178 = vmatmul.bf16.gmra.mxu0 %v1139
        %v2179 = vpop.f32.mrf.mxu0
        %v2180 = vadd.f32 %v2126, %v2179
        %v2181 = vpop.f32.mrf.mxu0
        %v2182 = vadd.f32 %v2128, %v2181
        %2183 = vmatmul.bf16.gmra.mxu0 %v1142
        %v2184 = vpop.f32.mrf.mxu0
        %v2185 = vadd.f32 %v2131, %v2184
        %v2186 = vpop.f32.mrf.mxu0
        %v2187 = vadd.f32 %v2133, %v2186
        %2188 = vdwg.mxu0
        %2189 = vmatpush.bf16.msra.mxu0 %v1752
        %2190 = vmatpush.bf16.msra.mxu0 %v1618
        %2191 = vmatpush.bf16.msra.mxu0 %v1614
        %2192 = vmatpush.bf16.msra.mxu0 %v1610
        %2193 = vmatpush.bf16.msra.mxu0 %v1606
        %2194 = vmatpush.bf16.msra.mxu0 %v1602
        %2195 = vmatpush.bf16.msra.mxu0 %v1598
        %2196 = vmatpush.bf16.msra.mxu0 %v1594
        %2197 = vmatmul.bf16.gmra.mxu0 %v1718
        %v2198 = vpop.f32.mrf.mxu0
        %v2199 = vadd.f32 %v2145, %v2198
        %v2200 = vpop.f32.mrf.mxu0
        %v2201 = vadd.f32 %v2147, %v2200
        %2202 = vmatmul.bf16.gmra.mxu0 %v1721
        %v2203 = vpop.f32.mrf.mxu0
        %v2204 = vadd.f32 %v2150, %v2203
        %v2205 = vpop.f32.mrf.mxu0
        %v2206 = vadd.f32 %v2152, %v2205
        %2207 = vmatmul.bf16.gmra.mxu0 %v1724
        %v2208 = vpop.f32.mrf.mxu0
        %v2209 = vadd.f32 %v2155, %v2208
        %v2210 = vpop.f32.mrf.mxu0
        %v2211 = vadd.f32 %v2157, %v2210
        %2212 = vmatmul.bf16.gmra.mxu0 %v1727
        %v2213 = vpop.f32.mrf.mxu0
        %v2214 = vadd.f32 %v2160, %v2213
        %v2215 = vpop.f32.mrf.mxu0
        %v2216 = vadd.f32 %v2162, %v2215
        %2217 = vmatmul.bf16.gmra.mxu0 %v1730
        %v2218 = vpop.f32.mrf.mxu0
        %v2219 = vadd.f32 %v2165, %v2218
        %v2220 = vpop.f32.mrf.mxu0
        %v2221 = vadd.f32 %v2167, %v2220
        %2222 = vmatmul.bf16.gmra.mxu0 %v1733
        %v2223 = vpop.f32.mrf.mxu0
        %v2224 = vadd.f32 %v2170, %v2223
        %v2225 = vpop.f32.mrf.mxu0
        %v2226 = vadd.f32 %v2172, %v2225
        %2227 = vmatmul.bf16.gmra.mxu0 %v1736
        %v2228 = vpop.f32.mrf.mxu0
        %v2229 = vadd.f32 %v2175, %v2228
        %v2230 = vpop.f32.mrf.mxu0
        %v2231 = vadd.f32 %v2177, %v2230
        %2232 = vmatmul.bf16.gmra.mxu0 %v1739
        %v2233 = vpop.f32.mrf.mxu0
        %v2234 = vadd.f32 %v2180, %v2233
        %v2235 = vpop.f32.mrf.mxu0
        %v2236 = vadd.f32 %v2182, %v2235
        %2237 = vmatmul.bf16.gmra.mxu0 %v1742
        %v2238 = vpop.f32.mrf.mxu0
        %v2239 = vadd.f32 %v2185, %v2238
        %v2240 = vpop.f32.mrf.mxu0
        %v2241 = vadd.f32 %v2187, %v2240
        %2242 = vdwg.mxu0
        %2243 = vmatpush.bf16.msra.mxu0 %v1559
        %2244 = vmatpush.bf16.msra.mxu0 %v1555
        %2245 = vmatpush.bf16.msra.mxu0 %v1551
        %2246 = vmatpush.bf16.msra.mxu0 %v1547
        %2247 = vmatpush.bf16.msra.mxu0 %v1543
        %2248 = vmatpush.bf16.msra.mxu0 %v1539
        %2249 = vmatpush.bf16.msra.mxu0 %v1535
        %2250 = vmatpush.bf16.msra.mxu0 %v1531
        %2251 = vmatmul.bf16.gmra.mxu0 %v1117
        %v2252 = vpop.f32.mrf.mxu0
        %v2253 = vadd.f32 0.0, %v2252
        %v2254 = vpop.f32.mrf.mxu0
        %v2255 = vadd.f32 0.0, %v2254
        %2256 = vmatmul.bf16.gmra.mxu0 %v1120
        %v2257 = vpop.f32.mrf.mxu0
        %v2258 = vadd.f32 0.0, %v2257
        %v2259 = vpop.f32.mrf.mxu0
        %v2260 = vadd.f32 0.0, %v2259
        %2261 = vmatmul.bf16.gmra.mxu0 %v1123
        %v2262 = vpop.f32.mrf.mxu0
        %v2263 = vadd.f32 0.0, %v2262
        %v2264 = vpop.f32.mrf.mxu0
        %v2265 = vadd.f32 0.0, %v2264
        %2266 = vmatmul.bf16.gmra.mxu0 %v1126
        %v2267 = vpop.f32.mrf.mxu0
        %v2268 = vadd.f32 0.0, %v2267
        %v2269 = vpop.f32.mrf.mxu0
        %v2270 = vadd.f32 0.0, %v2269
        %2271 = vmatmul.bf16.gmra.mxu0 %v1129
        %v2272 = vpop.f32.mrf.mxu0
        %v2273 = vadd.f32 0.0, %v2272
        %v2274 = vpop.f32.mrf.mxu0
        %v2275 = vadd.f32 0.0, %v2274
        %2276 = vmatmul.bf16.gmra.mxu0 %v1132
        %v2277 = vpop.f32.mrf.mxu0
        %v2278 = vadd.f32 0.0, %v2277
        %v2279 = vpop.f32.mrf.mxu0
        %v2280 = vadd.f32 0.0, %v2279
        %2281 = vmatmul.bf16.gmra.mxu0 %v1135
        %v2282 = vpop.f32.mrf.mxu0
        %v2283 = vadd.f32 0.0, %v2282
        %v2284 = vpop.f32.mrf.mxu0
        %v2285 = vadd.f32 0.0, %v2284
        %2286 = vmatmul.bf16.gmra.mxu0 %v1138
        %v2287 = vpop.f32.mrf.mxu0
        %v2288 = vadd.f32 0.0, %v2287
        %v2289 = vpop.f32.mrf.mxu0
        %v2290 = vadd.f32 0.0, %v2289
        %2291 = vmatmul.bf16.gmra.mxu0 %v1141
        %v2292 = vpop.f32.mrf.mxu0
        %v2293 = vadd.f32 0.0, %v2292
        %v2294 = vpop.f32.mrf.mxu0
        %v2295 = vadd.f32 0.0, %v2294
        %2296 = vdwg.mxu0
        %2297 = vmatpush.bf16.msra.mxu0 %v1591
        %2298 = vmatpush.bf16.msra.mxu0 %v1587
        %2299 = vmatpush.bf16.msra.mxu0 %v1583
        %2300 = vmatpush.bf16.msra.mxu0 %v1579
        %2301 = vmatpush.bf16.msra.mxu0 %v1575
        %2302 = vmatpush.bf16.msra.mxu0 %v1571
        %2303 = vmatpush.bf16.msra.mxu0 %v1567
        %2304 = vmatpush.bf16.msra.mxu0 %v1563
        %2305 = vmatmul.bf16.gmra.mxu0 %v1118
        %v2306 = vpop.f32.mrf.mxu0
        %v2307 = vadd.f32 %v2253, %v2306
        %v2308 = vpop.f32.mrf.mxu0
        %v2309 = vadd.f32 %v2255, %v2308
        %2310 = vmatmul.bf16.gmra.mxu0 %v1121
        %v2311 = vpop.f32.mrf.mxu0
        %v2312 = vadd.f32 %v2258, %v2311
        %v2313 = vpop.f32.mrf.mxu0
        %v2314 = vadd.f32 %v2260, %v2313
        %2315 = vmatmul.bf16.gmra.mxu0 %v1124
        %v2316 = vpop.f32.mrf.mxu0
        %v2317 = vadd.f32 %v2263, %v2316
        %v2318 = vpop.f32.mrf.mxu0
        %v2319 = vadd.f32 %v2265, %v2318
        %2320 = vmatmul.bf16.gmra.mxu0 %v1127
        %v2321 = vpop.f32.mrf.mxu0
        %v2322 = vadd.f32 %v2268, %v2321
        %v2323 = vpop.f32.mrf.mxu0
        %v2324 = vadd.f32 %v2270, %v2323
        %2325 = vmatmul.bf16.gmra.mxu0 %v1130
        %v2326 = vpop.f32.mrf.mxu0
        %v2327 = vadd.f32 %v2273, %v2326
        %v2328 = vpop.f32.mrf.mxu0
        %v2329 = vadd.f32 %v2275, %v2328
        %2330 = vmatmul.bf16.gmra.mxu0 %v1133
        %v2331 = vpop.f32.mrf.mxu0
        %v2332 = vadd.f32 %v2278, %v2331
        %v2333 = vpop.f32.mrf.mxu0
        %v2334 = vadd.f32 %v2280, %v2333
        %2335 = vmatmul.bf16.gmra.mxu0 %v1136
        %v2336 = vpop.f32.mrf.mxu0
        %v2337 = vadd.f32 %v2283, %v2336
        %v2338 = vpop.f32.mrf.mxu0
        %v2339 = vadd.f32 %v2285, %v2338
        %2340 = vmatmul.bf16.gmra.mxu0 %v1139
        %v2341 = vpop.f32.mrf.mxu0
        %v2342 = vadd.f32 %v2288, %v2341
        %v2343 = vpop.f32.mrf.mxu0
        %v2344 = vadd.f32 %v2290, %v2343
        %2345 = vmatmul.bf16.gmra.mxu0 %v1142
        %v2346 = vpop.f32.mrf.mxu0
        %v2347 = vadd.f32 %v2293, %v2346
        %v2348 = vpop.f32.mrf.mxu0
        %v2349 = vadd.f32 %v2295, %v2348
        %2350 = vdwg.mxu0
        %2351 = vmatpush.bf16.msra.mxu0 %v1755
        %2352 = vmatpush.bf16.msra.mxu0 %v1619
        %2353 = vmatpush.bf16.msra.mxu0 %v1615
        %2354 = vmatpush.bf16.msra.mxu0 %v1611
        %2355 = vmatpush.bf16.msra.mxu0 %v1607
        %2356 = vmatpush.bf16.msra.mxu0 %v1603
        %2357 = vmatpush.bf16.msra.mxu0 %v1599
        %2358 = vmatpush.bf16.msra.mxu0 %v1595
        %2359 = vmatmul.bf16.gmra.mxu0 %v1718
        %v2360 = vpop.f32.mrf.mxu0
        %v2361 = vadd.f32 %v2307, %v2360
        %v2362 = vpop.f32.mrf.mxu0
        %v2363 = vadd.f32 %v2309, %v2362
        %2364 = vmatmul.bf16.gmra.mxu0 %v1721
        %v2365 = vpop.f32.mrf.mxu0
        %v2366 = vadd.f32 %v2312, %v2365
        %v2367 = vpop.f32.mrf.mxu0
        %v2368 = vadd.f32 %v2314, %v2367
        %2369 = vmatmul.bf16.gmra.mxu0 %v1724
        %v2370 = vpop.f32.mrf.mxu0
        %v2371 = vadd.f32 %v2317, %v2370
        %v2372 = vpop.f32.mrf.mxu0
        %v2373 = vadd.f32 %v2319, %v2372
        %2374 = vmatmul.bf16.gmra.mxu0 %v1727
        %v2375 = vpop.f32.mrf.mxu0
        %v2376 = vadd.f32 %v2322, %v2375
        %v2377 = vpop.f32.mrf.mxu0
        %v2378 = vadd.f32 %v2324, %v2377
        %2379 = vmatmul.bf16.gmra.mxu0 %v1730
        %v2380 = vpop.f32.mrf.mxu0
        %v2381 = vadd.f32 %v2327, %v2380
        %v2382 = vpop.f32.mrf.mxu0
        %v2383 = vadd.f32 %v2329, %v2382
        %2384 = vmatmul.bf16.gmra.mxu0 %v1733
        %v2385 = vpop.f32.mrf.mxu0
        %v2386 = vadd.f32 %v2332, %v2385
        %v2387 = vpop.f32.mrf.mxu0
        %v2388 = vadd.f32 %v2334, %v2387
        %2389 = vmatmul.bf16.gmra.mxu0 %v1736
        %v2390 = vpop.f32.mrf.mxu0
        %v2391 = vadd.f32 %v2337, %v2390
        %v2392 = vpop.f32.mrf.mxu0
        %v2393 = vadd.f32 %v2339, %v2392
        %2394 = vmatmul.bf16.gmra.mxu0 %v1739
        %v2395 = vpop.f32.mrf.mxu0
        %v2396 = vadd.f32 %v2342, %v2395
        %v2397 = vpop.f32.mrf.mxu0
        %v2398 = vadd.f32 %v2344, %v2397
        %2399 = vmatmul.bf16.gmra.mxu0 %v1742
        %v2400 = vpop.f32.mrf.mxu0
        %v2401 = vadd.f32 %v2347, %v2400
        %v2402 = vpop.f32.mrf.mxu0
        %v2403 = vadd.f32 %v2349, %v2402
        %2404 = vdwg.mxu0
        %v2405 = vmax.f32 %v1875, %v2199
        %v2406 = vmax.f32 %v2037, %v2361
        %v2407 = vmax.f32 %v1877, %v2201
        %v2408 = vmax.f32 %v2039, %v2363
        %v2409 = vmax.f32 %v1880, %v2204
        %v2410 = vmax.f32 %v2042, %v2366
        %v2411 = vmax.f32 %v1882, %v2206
        %v2412 = vmax.f32 %v2044, %v2368
        %v2413 = vmax.f32 %v1885, %v2209
        %v2414 = vmax.f32 %v2047, %v2371
        %v2415 = vmax.f32 %v1887, %v2211
        %v2416 = vmax.f32 %v2049, %v2373
        %v2417 = vmax.f32 %v1890, %v2214
        %v2418 = vmax.f32 %v2052, %v2376
        %v2419 = vmax.f32 %v1892, %v2216
        %v2420 = vmax.f32 %v2054, %v2378
        %v2421 = vmax.f32 %v1895, %v2219
        %v2422 = vmax.f32 %v2057, %v2381
        %v2423 = vmax.f32 %v1897, %v2221
        %v2424 = vmax.f32 %v2059, %v2383
        %v2425 = vmax.f32 %v1900, %v2224
        %v2426 = vmax.f32 %v2062, %v2386
        %v2427 = vmax.f32 %v1902, %v2226
        %v2428 = vmax.f32 %v2064, %v2388
        %v2429 = vmax.f32 %v1905, %v2229
        %v2430 = vmax.f32 %v2067, %v2391
        %v2431 = vmax.f32 %v1907, %v2231
        %v2432 = vmax.f32 %v2069, %v2393
        %v2433 = vmax.f32 %v1910, %v2234
        %v2434 = vmax.f32 %v2072, %v2396
        %v2435 = vmax.f32 %v1912, %v2236
        %v2436 = vmax.f32 %v2074, %v2398
        %v2437 = vmax.f32 %v1915, %v2239
        %v2438 = vmax.f32 %v2077, %v2401
        %v2439 = vmax.f32 %v1917, %v2241
        %v2440 = vmax.f32 %v2079, %v2403
        %v2445 = vrot.slane %v2407, 4
        %v2446 = vrot.slane %v2409, 4
        %v2447 = vsel %vm987, %v2445, %v2446
        %v2448 = vrot.slane %v2408, 4
        %v2449 = vrot.slane %v2410, 4
        %v2450 = vsel %vm987, %v2448, %v2449
        %v2455 = vmax.f32 %v2405, %v2447
        %v2456 = vmax.f32 %v2406, %v2450
        %v2457 = vmax.f32 %v2407, %v2446
        %v2458 = vmax.f32 %v2408, %v2449
        %v2461 = vrot.slane %v2455, 1
        %v2462 = vrot.slane %v2456, 1
        %v2465 = vmax.f32 %v2455, %v2461
        %v2466 = vmax.f32 %v2456, %v2462
        %v2469 = vrot.slane %v2457, 1
        %v2470 = vrot.slane %v2458, 1
        %v2473 = vmax.f32 %v2457, %v2469
        %v2474 = vmax.f32 %v2458, %v2470
        %v2479 = vrot.slane %v2413, 4
        %v2480 = vrot.slane %v2415, 4
        %v2481 = vsel %vm987, %v2479, %v2480
        %v2482 = vrot.slane %v2414, 4
        %v2483 = vrot.slane %v2416, 4
        %v2484 = vsel %vm987, %v2482, %v2483
        %v2489 = vmax.f32 %v2411, %v2481
        %v2490 = vmax.f32 %v2412, %v2484
        %v2491 = vmax.f32 %v2413, %v2480
        %v2492 = vmax.f32 %v2414, %v2483
        %v2495 = vrot.slane %v2489, 1
        %v2496 = vrot.slane %v2490, 1
        %v2499 = vmax.f32 %v2489, %v2495
        %v2500 = vmax.f32 %v2490, %v2496
        %v2503 = vrot.slane %v2491, 1
        %v2504 = vrot.slane %v2492, 1
        %v2507 = vmax.f32 %v2491, %v2503
        %v2508 = vmax.f32 %v2492, %v2504
        %v2513 = vrot.slane %v2419, 4
        %v2514 = vrot.slane %v2421, 4
        %v2515 = vsel %vm987, %v2513, %v2514
        %v2516 = vrot.slane %v2420, 4
        %v2517 = vrot.slane %v2422, 4
        %v2518 = vsel %vm987, %v2516, %v2517
        %v2523 = vmax.f32 %v2417, %v2515
        %v2524 = vmax.f32 %v2418, %v2518
        %v2525 = vmax.f32 %v2419, %v2514
        %v2526 = vmax.f32 %v2420, %v2517
        %v2529 = vrot.slane %v2523, 1
        %v2530 = vrot.slane %v2524, 1
        %v2533 = vmax.f32 %v2523, %v2529
        %v2534 = vmax.f32 %v2524, %v2530
        %v2537 = vrot.slane %v2525, 1
        %v2538 = vrot.slane %v2526, 1
        %v2541 = vmax.f32 %v2525, %v2537
        %v2542 = vmax.f32 %v2526, %v2538
        %v2547 = vrot.slane %v2425, 4
        %v2548 = vrot.slane %v2427, 4
        %v2549 = vsel %vm987, %v2547, %v2548
        %v2550 = vrot.slane %v2426, 4
        %v2551 = vrot.slane %v2428, 4
        %v2552 = vsel %vm987, %v2550, %v2551
        %v2557 = vmax.f32 %v2423, %v2549
        %v2558 = vmax.f32 %v2424, %v2552
        %v2559 = vmax.f32 %v2425, %v2548
        %v2560 = vmax.f32 %v2426, %v2551
        %v2563 = vrot.slane %v2557, 1
        %v2564 = vrot.slane %v2558, 1
        %v2567 = vmax.f32 %v2557, %v2563
        %v2568 = vmax.f32 %v2558, %v2564
        %v2571 = vrot.slane %v2559, 1
        %v2572 = vrot.slane %v2560, 1
        %v2575 = vmax.f32 %v2559, %v2571
        %v2576 = vmax.f32 %v2560, %v2572
        %v2581 = vrot.slane %v2431, 4
        %v2582 = vrot.slane %v2433, 4
        %v2583 = vsel %vm987, %v2581, %v2582
        %v2584 = vrot.slane %v2432, 4
        %v2585 = vrot.slane %v2434, 4
        %v2586 = vsel %vm987, %v2584, %v2585
        %v2591 = vmax.f32 %v2429, %v2583
        %v2592 = vmax.f32 %v2430, %v2586
        %v2593 = vmax.f32 %v2431, %v2582
        %v2594 = vmax.f32 %v2432, %v2585
        %v2597 = vrot.slane %v2591, 1
        %v2598 = vrot.slane %v2592, 1
        %v2601 = vmax.f32 %v2591, %v2597
        %v2602 = vmax.f32 %v2592, %v2598
        %v2605 = vrot.slane %v2593, 1
        %v2606 = vrot.slane %v2594, 1
        %v2609 = vmax.f32 %v2593, %v2605
        %v2610 = vmax.f32 %v2594, %v2606
        %v2615 = vrot.slane %v2437, 4
        %v2616 = vrot.slane %v2439, 4
        %v2617 = vsel %vm987, %v2615, %v2616
        %v2618 = vrot.slane %v2438, 4
        %v2619 = vrot.slane %v2440, 4
        %v2620 = vsel %vm987, %v2618, %v2619
        %v2625 = vmax.f32 %v2435, %v2617
        %v2626 = vmax.f32 %v2436, %v2620
        %v2627 = vmax.f32 %v2437, %v2616
        %v2628 = vmax.f32 %v2438, %v2619
        %v2631 = vrot.slane %v2625, 1
        %v2632 = vrot.slane %v2626, 1
        %v2635 = vmax.f32 %v2625, %v2631
        %v2636 = vmax.f32 %v2626, %v2632
        %v2639 = vrot.slane %v2627, 1
        %v2640 = vrot.slane %v2628, 1
        %v2643 = vmax.f32 %v2627, %v2639
        %v2644 = vmax.f32 %v2628, %v2640
        %v2647 = vrot.slane %v2465, 1
        %v2648 = vrot.slane %v2466, 1
        %v2651 = vrot.slane %v2465, 2
        %v2652 = vrot.slane %v2466, 2
        %v2655 = vrot.slane %v2465, 3
        %v2656 = vrot.slane %v2466, 3
        %v2661 = vrot.slane %v2473, 4
        %v2662 = vrot.slane %v2474, 4
        %v2665 = vrot.slane %v2473, 5
        %v2666 = vrot.slane %v2474, 5
        %v2671 = vrot.slane %v2499, 2
        %v2672 = vrot.slane %v2500, 2
        %v2675 = vrot.slane %v2499, 3
        %v2676 = vrot.slane %v2500, 3
        %v2679 = vrot.slane %v2499, 4
        %v2680 = vrot.slane %v2500, 4
        %v2683 = vrot.slane %v2499, 5
        %v2684 = vrot.slane %v2500, 5
        %v2689 = vrot.slane %v2507, 6
        %v2690 = vrot.slane %v2508, 6
        %v2693 = vrot.slane %v2507, 7
        %v2694 = vrot.slane %v2508, 7
        %v2699 = vrot.slane %v2533, 4
        %v2700 = vrot.slane %v2534, 4
        %v2703 = vrot.slane %v2533, 5
        %v2704 = vrot.slane %v2534, 5
        %v2707 = vrot.slane %v2533, 6
        %v2708 = vrot.slane %v2534, 6
        %v2711 = vrot.slane %v2533, 7
        %v2712 = vrot.slane %v2534, 7
        %vm2715 = vcmask 1040384
        %v2716 = vsel %vm2715, %v2465, %v2647
        %v2717 = vsel %vm2715, %v2466, %v2648
        %vm2718 = vcmask 1041408
        %v2719 = vsel %vm2718, %v2716, %v2651
        %v2720 = vsel %vm2718, %v2717, %v2652
        %vm2721 = vcmask 1042432
        %v2722 = vsel %vm2721, %v2719, %v2655
        %v2723 = vsel %vm2721, %v2720, %v2656
        %v2724 = vsel %vm987, %v2722, %v2661
        %v2725 = vsel %vm987, %v2723, %v2662
        %v2726 = vsel %vm1744, %v2724, %v2665
        %v2727 = vsel %vm1744, %v2725, %v2666
        %vm2728 = vcmask 1045504
        %v2729 = vsel %vm2728, %v2726, %v2671
        %v2730 = vsel %vm2728, %v2727, %v2672
        %vm2731 = vcmask 1046528
        %v2732 = vsel %vm2731, %v2729, %v2675
        %v2733 = vsel %vm2731, %v2730, %v2676
        %v2734 = vsel %vm2715, %v2679, %v2683
        %v2735 = vsel %vm2715, %v2680, %v2684
        %v2736 = vsel %vm2718, %v2734, %v2689
        %v2737 = vsel %vm2718, %v2735, %v2690
        %v2738 = vsel %vm2721, %v2736, %v2693
        %v2739 = vsel %vm2721, %v2737, %v2694
        %v2740 = vsel %vm987, %v2738, %v2699
        %v2741 = vsel %vm987, %v2739, %v2700
        %v2742 = vsel %vm1744, %v2740, %v2703
        %v2743 = vsel %vm1744, %v2741, %v2704
        %v2744 = vsel %vm2728, %v2742, %v2707
        %v2745 = vsel %vm2728, %v2743, %v2708
        %v2746 = vsel %vm2731, %v2744, %v2711
        %v2747 = vsel %vm2731, %v2745, %v2712
        %v2750 = vrot.slane %v2541, 1
        %v2751 = vrot.slane %v2542, 1
        %v2756 = vrot.slane %v2567, 6
        %v2757 = vrot.slane %v2568, 6
        %v2760 = vrot.slane %v2567, 7
        %v2761 = vrot.slane %v2568, 7
        %v2764 = vrot.slane %v2567, 1
        %v2765 = vrot.slane %v2568, 1
        %v2770 = vrot.slane %v2575, 2
        %v2771 = vrot.slane %v2576, 2
        %v2774 = vrot.slane %v2575, 3
        %v2775 = vrot.slane %v2576, 3
        %v2780 = vrot.slane %v2601, 1
        %v2781 = vrot.slane %v2602, 1
        %v2784 = vrot.slane %v2601, 2
        %v2785 = vrot.slane %v2602, 2
        %v2788 = vrot.slane %v2601, 3
        %v2789 = vrot.slane %v2602, 3
        %v2794 = vrot.slane %v2609, 4
        %v2795 = vrot.slane %v2610, 4
        %v2798 = vrot.slane %v2609, 5
        %v2799 = vrot.slane %v2610, 5
        %v2804 = vrot.slane %v2635, 2
        %v2805 = vrot.slane %v2636, 2
        %v2808 = vrot.slane %v2635, 3
        %v2809 = vrot.slane %v2636, 3
        %v2812 = vsel %vm2715, %v2541, %v2750
        %v2813 = vsel %vm2715, %v2542, %v2751
        %v2814 = vsel %vm2718, %v2812, %v2756
        %v2815 = vsel %vm2718, %v2813, %v2757
        %v2816 = vsel %vm2721, %v2814, %v2760
        %v2817 = vsel %vm2721, %v2815, %v2761
        %v2818 = vsel %vm987, %v2816, %v2567
        %v2819 = vsel %vm987, %v2817, %v2568
        %v2820 = vsel %vm1744, %v2818, %v2764
        %v2821 = vsel %vm1744, %v2819, %v2765
        %v2822 = vsel %vm2728, %v2820, %v2770
        %v2823 = vsel %vm2728, %v2821, %v2771
        %v2824 = vsel %vm2731, %v2822, %v2774
        %v2825 = vsel %vm2731, %v2823, %v2775
        %v2826 = vsel %vm2715, %v2601, %v2780
        %v2827 = vsel %vm2715, %v2602, %v2781
        %v2828 = vsel %vm2718, %v2826, %v2784
        %v2829 = vsel %vm2718, %v2827, %v2785
        %v2830 = vsel %vm2721, %v2828, %v2788
        %v2831 = vsel %vm2721, %v2829, %v2789
        %v2832 = vsel %vm987, %v2830, %v2794
        %v2833 = vsel %vm987, %v2831, %v2795
        %v2834 = vsel %vm1744, %v2832, %v2798
        %v2835 = vsel %vm1744, %v2833, %v2799
        %v2836 = vsel %vm2728, %v2834, %v2804
        %v2837 = vsel %vm2728, %v2835, %v2805
        %v2838 = vsel %vm2731, %v2836, %v2808
        %v2839 = vsel %vm2731, %v2837, %v2809
        %v2840 = vrot.slane %v2635, 4
        %v2841 = vrot.slane %v2636, 4
        %v2844 = vrot.slane %v2635, 5
        %v2845 = vrot.slane %v2636, 5
        %v2850 = vrot.slane %v2643, 6
        %v2851 = vrot.slane %v2644, 6
        %v2854 = vrot.slane %v2643, 7
        %v2855 = vrot.slane %v2644, 7
        %v2858 = vsel %vm2715, %v2840, %v2844
        %v2859 = vsel %vm2715, %v2841, %v2845
        %v2860 = vsel %vm2718, %v2858, %v2850
        %v2861 = vsel %vm2718, %v2859, %v2851
        %v2862 = vsel %vm2721, %v2860, %v2854
        %v2863 = vsel %vm2721, %v2861, %v2855
        %v2865 = vperm.slane %v1116, 0
        %v2866 = vperm.slane %v1116, 1
        %v2869 = vadd.f32 %v2732, %v2865
        %v2870 = vadd.f32 %v2733, %v2866
        %v2871 = vadd.f32 %v2746, %v2865
        %v2872 = vadd.f32 %v2747, %v2866
        %v2873 = vadd.f32 %v2824, %v2865
        %v2874 = vadd.f32 %v2825, %v2866
        %v2875 = vadd.f32 %v2838, %v2865
        %v2876 = vadd.f32 %v2839, %v2866
        %v2877 = vadd.f32 %v2862, %v2865
        %v2878 = vadd.f32 %v2863, %v2866
        %vm2879 = vcmp.ge.f32.partialorder %v2869, 0.0
        %vm2880 = vcmp.ge.f32.partialorder %v2870, 0.0
        %vm2881 = vcmp.ge.f32.partialorder %v2871, 0.0
        %vm2882 = vcmp.ge.f32.partialorder %v2872, 0.0
        %vm2883 = vcmp.ge.f32.partialorder %v2873, 0.0
        %vm2884 = vcmp.ge.f32.partialorder %v2874, 0.0
        %vm2885 = vcmp.ge.f32.partialorder %v2875, 0.0
        %vm2886 = vcmp.ge.f32.partialorder %v2876, 0.0
        %vm2887 = vcmp.ge.f32.partialorder %v2877, 0.0
        %vm2888 = vcmp.ge.f32.partialorder %v2878, 0.0
        %v2889 = vmul.f32 %v2869, 0.01
        %v2890 = vmul.f32 %v2870, 0.01
        %v2891 = vmul.f32 %v2871, 0.01
        %v2892 = vmul.f32 %v2872, 0.01
        %v2893 = vmul.f32 %v2873, 0.01
        %v2894 = vmul.f32 %v2874, 0.01
        %v2895 = vmul.f32 %v2875, 0.01
        %v2896 = vmul.f32 %v2876, 0.01
        %v2897 = vmul.f32 %v2877, 0.01
        %v2898 = vmul.f32 %v2878, 0.01
        %v2899 = vsel %vm2879, %v2869, %v2889
        %v2900 = vsel %vm2880, %v2870, %v2890
        %v2901 = vsel %vm2881, %v2871, %v2891
        %v2902 = vsel %vm2882, %v2872, %v2892
        %v2903 = vsel %vm2883, %v2873, %v2893
        %v2904 = vsel %vm2884, %v2874, %v2894
        %v2905 = vsel %vm2885, %v2875, %v2895
        %v2906 = vsel %vm2886, %v2876, %v2896
        %v2907 = vsel %vm2887, %v2877, %v2897
        %v2908 = vsel %vm2888, %v2878, %v2898
        %v2911 = vrot.slane %v2899, 1
        %v2912 = vrot.slane %v2900, 1
        %v2915 = vrot.slane %v2899, 2
        %v2916 = vrot.slane %v2900, 2
        %v2921 = vrot.slane %v2899, 6
        %v2922 = vrot.slane %v2901, 6
        %v2923 = vsel %vm2718, %v2921, %v2922
        %v2924 = vrot.slane %v2900, 6
        %v2925 = vrot.slane %v2902, 6
        %v2926 = vsel %vm2718, %v2924, %v2925
        %v2929 = vrot.slane %v2899, 7
        %v2930 = vrot.slane %v2901, 7
        %v2931 = vsel %vm2715, %v2929, %v2930
        %v2932 = vrot.slane %v2900, 7
        %v2933 = vrot.slane %v2902, 7
        %v2934 = vsel %vm2715, %v2932, %v2933
        %v2937 = vrot.slane %v2901, 4
        %v2938 = vrot.slane %v2902, 4
        %v2943 = vrot.slane %v2901, 5
        %v2944 = vrot.slane %v2903, 5
        %v2945 = vsel %vm2721, %v2943, %v2944
        %v2946 = vrot.slane %v2902, 5
        %v2947 = vrot.slane %v2904, 5
        %v2948 = vsel %vm2721, %v2946, %v2947
        %v2951 = vrot.slane %v2903, 6
        %v2952 = vsel %vm2718, %v2922, %v2951
        %v2953 = vrot.slane %v2904, 6
        %v2954 = vsel %vm2718, %v2925, %v2953
        %v2957 = vrot.slane %v2901, 1
        %v2958 = vsel %vm2731, %v2911, %v2957
        %v2959 = vrot.slane %v2902, 1
        %v2960 = vsel %vm2731, %v2912, %v2959
        %v2961 = vrot.slane %v2901, 2
        %v2962 = vrot.slane %v2902, 2
        %v2963 = vrot.slane %v2903, 7
        %v2964 = vsel %vm2715, %v2930, %v2963
        %v2965 = vrot.slane %v2904, 7
        %v2966 = vsel %vm2715, %v2933, %v2965
        %v2967 = vrot.slane %v2903, 4
        %v2968 = vrot.slane %v2904, 4
        %v2969 = vrot.slane %v2903, 1
        %v2970 = vsel %vm2731, %v2957, %v2969
        %v2971 = vrot.slane %v2904, 1
        %v2972 = vsel %vm2731, %v2959, %v2971
        %v2973 = vrot.slane %v2903, 2
        %v2974 = vsel %vm2728, %v2961, %v2973
        %v2975 = vrot.slane %v2904, 2
        %v2976 = vsel %vm2728, %v2962, %v2975
        %v2979 = vrot.slane %v2905, 4
        %v2980 = vrot.slane %v2906, 4
        %v2981 = vrot.slane %v2905, 5
        %v2982 = vrot.slane %v2906, 5
        %v2983 = vrot.slane %v2905, 6
        %v2984 = vrot.slane %v2906, 6
        %v2985 = vrot.slane %v2905, 7
        %v2986 = vrot.slane %v2906, 7
        %v2989 = vrot.slane %v2907, 4
        %v2990 = vsel %vm987, %v2979, %v2989
        %v2991 = vrot.slane %v2908, 4
        %v2992 = vsel %vm987, %v2980, %v2991
        %v2993 = vrot.slane %v2907, 5
        %v2994 = vsel %vm2721, %v2981, %v2993
        %v2995 = vrot.slane %v2908, 5
        %v2996 = vsel %vm2721, %v2982, %v2995
        %v2997 = vrot.slane %v2907, 6
        %v2998 = vrot.slane %v2908, 6
        %v2999 = vsel %vm2728, %v2915, %v2961
        %v3000 = vsel %vm2728, %v2916, %v2962
        %v3001 = vrot.slane %v2958, 2
        %v3002 = vrot.slane %v2957, 2
        %v3003 = vsel %vm2728, %v3001, %v3002
        %v3004 = vrot.slane %v2960, 2
        %v3005 = vrot.slane %v2959, 2
        %v3006 = vsel %vm2728, %v3004, %v3005
        %v3007 = vrot.slane %v2961, 2
        %v3008 = vsel %vm2728, %v3007, %v3007
        %v3009 = vrot.slane %v2962, 2
        %v3010 = vsel %vm2728, %v3009, %v3009
        %v3011 = vrot.slane %v2922, 2
        %v3012 = vsel %vm2728, %v3011, %v3011
        %v3013 = vrot.slane %v2925, 2
        %v3014 = vsel %vm2728, %v3013, %v3013
        %v3015 = vrot.slane %v2930, 2
        %v3016 = vrot.slane %v2964, 2
        %v3017 = vsel %vm2728, %v3015, %v3016
        %v3018 = vrot.slane %v2933, 2
        %v3019 = vrot.slane %v2966, 2
        %v3020 = vsel %vm2728, %v3018, %v3019
        %v3021 = vrot.slane %v2967, 2
        %v3022 = vsel %vm2728, %v3021, %v3021
        %v3023 = vrot.slane %v2968, 2
        %v3024 = vsel %vm2728, %v3023, %v3023
        %v3025 = vrot.slane %v2944, 2
        %v3026 = vsel %vm2728, %v3025, %v3025
        %v3027 = vrot.slane %v2947, 2
        %v3028 = vsel %vm2728, %v3027, %v3027
        %v3029 = vrot.slane %v2951, 2
        %v3030 = vsel %vm2728, %v3029, %v3029
        %v3031 = vrot.slane %v2953, 2
        %v3032 = vsel %vm2728, %v3031, %v3031
        %v3051 = vrot.slane %v2970, 4
        %v3052 = vrot.slane %v2972, 4
        %v3053 = vrot.slane %v2974, 4
        %v3054 = vrot.slane %v2976, 4
        %v3055 = vrot.slane %v2951, 4
        %v3056 = vrot.slane %v2953, 4
        %v3057 = vrot.slane %v2963, 4
        %v3058 = vrot.slane %v2965, 4
        %v3059 = vrot.slane %v2979, 4
        %v3060 = vrot.slane %v2980, 4
        %v3061 = vrot.slane %v2981, 4
        %v3062 = vrot.slane %v2982, 4
        %v3063 = vrot.slane %v2983, 4
        %v3064 = vrot.slane %v2984, 4
        %v3081 = vrot.slane %v2969, 6
        %v3082 = vrot.slane %v2971, 6
        %v3083 = vrot.slane %v2973, 6
        %v3084 = vrot.slane %v2975, 6
        %v3085 = vrot.slane %v2983, 6
        %v3086 = vrot.slane %v2984, 6
        %v3087 = vrot.slane %v2985, 6
        %v3088 = vrot.slane %v2986, 6
        %v3089 = vrot.slane %v2990, 6
        %v3090 = vrot.slane %v2992, 6
        %v3091 = vrot.slane %v2994, 6
        %v3092 = vrot.slane %v2996, 6
        %v3093 = vrot.slane %v2997, 6
        %v3094 = vrot.slane %v2998, 6
        %v3113 = vsel %vm987, %v2899, %v2999
        %v3114 = vsel %vm987, %v2900, %v3000
        %v3115 = vsel %vm987, %v2911, %v3003
        %v3116 = vsel %vm987, %v2912, %v3006
        %v3117 = vsel %vm987, %v2915, %v3008
        %v3118 = vsel %vm987, %v2916, %v3010
        %v3119 = vsel %vm987, %v2923, %v3012
        %v3120 = vsel %vm987, %v2926, %v3014
        %v3121 = vsel %vm987, %v2931, %v3017
        %v3122 = vsel %vm987, %v2934, %v3020
        %v3123 = vsel %vm987, %v2901, %v2974
        %v3124 = vsel %vm987, %v2902, %v2976
        %v3125 = vsel %vm987, %v2937, %v3022
        %v3126 = vsel %vm987, %v2938, %v3024
        %v3127 = vsel %vm987, %v2945, %v3026
        %v3128 = vsel %vm987, %v2948, %v3028
        %v3129 = vsel %vm987, %v2952, %v3030
        %v3130 = vsel %vm987, %v2954, %v3032
        %v3131 = vsel %vm987, %v2937, %v2951
        %v3132 = vsel %vm987, %v2938, %v2953
        %v3133 = vsel %vm987, %v3051, %v3081
        %v3134 = vsel %vm987, %v3052, %v3082
        %v3135 = vsel %vm987, %v3053, %v3083
        %v3136 = vsel %vm987, %v3054, %v3084
        %v3137 = vsel %vm987, %v3055, %v3085
        %v3138 = vsel %vm987, %v3056, %v3086
        %v3139 = vsel %vm987, %v3057, %v3087
        %v3140 = vsel %vm987, %v3058, %v3088
        %v3141 = vsel %vm987, %v2967, %v2983
        %v3142 = vsel %vm987, %v2968, %v2984
        %v3143 = vsel %vm987, %v3059, %v3089
        %v3144 = vsel %vm987, %v3060, %v3090
        %v3145 = vsel %vm987, %v3061, %v3091
        %v3146 = vsel %vm987, %v3062, %v3092
        %v3147 = vsel %vm987, %v3063, %v3093
        %v3148 = vsel %vm987, %v3064, %v3094
        %v3149 = vld [vmem:[%s4] sm:$0x1]
        %v3150 = vpack.c.bf16 %v3131, %v3113
        %v3151 = vpack.c.bf16 %v3132, %v3114
        %v3152 = vpack.c.bf16 %v3133, %v3115
        %v3153 = vpack.c.bf16 %v3134, %v3116
        %v3154 = vpack.c.bf16 %v3135, %v3117
        %v3155 = vpack.c.bf16 %v3136, %v3118
        %v3156 = vpack.c.bf16 %v3137, %v3119
        %v3157 = vpack.c.bf16 %v3138, %v3120
        %v3158 = vpack.c.bf16 %v3139, %v3121
        %v3159 = vpack.c.bf16 %v3140, %v3122
        %v3160 = vpack.c.bf16 %v3141, %v3123
        %v3161 = vpack.c.bf16 %v3142, %v3124
        %v3162 = vpack.c.bf16 %v3143, %v3125
        %v3163 = vpack.c.bf16 %v3144, %v3126
        %v3164 = vpack.c.bf16 %v3145, %v3127
        %v3165 = vpack.c.bf16 %v3146, %v3128
        %v3166 = vpack.c.bf16 %v3147, %v3129
        %v3167 = vpack.c.bf16 %v3148, %v3130
        %v3168 = vld [vmem:[%s3] sm:$0xff]
        %v3169 = vld [vmem:[%s3 + $0x8] sm:$0xff]
        %v3170 = vld [vmem:[%s3 + $0x10] sm:$0xff]
        %v3171 = vld [vmem:[%s3 + $0x18] sm:$0xff]
        %v3172 = vld [vmem:[%s3 + $0x20] sm:$0xff]
        %v3173 = vld [vmem:[%s3 + $0x28] sm:$0xff]
        %v3174 = vld [vmem:[%s3 + $0x30] sm:$0xff]
        %v3175 = vld [vmem:[%s3 + $0x38] sm:$0xff]
        %v3176 = vld [vmem:[%s3 + $0x40] sm:$0xff]
        %v3177 = vld [vmem:[%s3 + $0x48] sm:$0xff]
        %v3178 = vld [vmem:[%s3 + $0x50] sm:$0xff]
        %v3179 = vld [vmem:[%s3 + $0x58] sm:$0xff]
        %v3180 = vld [vmem:[%s3 + $0x60] sm:$0xff]
        %v3181 = vld [vmem:[%s3 + $0x68] sm:$0xff]
        %v3182 = vld [vmem:[%s3 + $0x70] sm:$0xff]
        %v3183 = vld [vmem:[%s3 + $0x78] sm:$0xff]
        %v3184 = vld [vmem:[%s3 + $0x80] sm:$0xff]
        %v3185 = vld [vmem:[%s3 + $0x88] sm:$0xff]
        %v3186 = vld [vmem:[%s3 + $0x90] sm:$0xff]
        %v3187 = vld [vmem:[%s3 + $0x98] sm:$0xff]
        %v3188 = vld [vmem:[%s3 + $0xa0] sm:$0xff]
        %v3189 = vld [vmem:[%s3 + $0xa8] sm:$0xff]
        %v3190 = vld [vmem:[%s3 + $0xb0] sm:$0xff]
        %v3191 = vld [vmem:[%s3 + $0xb8] sm:$0xff]
        %v3192 = vld [vmem:[%s3 + $0xc0] sm:$0xff]
        %v3193 = vld [vmem:[%s3 + $0xc8] sm:$0xff]
        %v3194 = vld [vmem:[%s3 + $0xd0] sm:$0xff]
        %v3195 = vld [vmem:[%s3 + $0xd8] sm:$0xff]
        %v3196 = vld [vmem:[%s3 + $0xe0] sm:$0xff]
        %v3197 = vld [vmem:[%s3 + $0xe8] sm:$0xff]
        %v3198 = vld [vmem:[%s3 + $0xf0] sm:$0xff]
        %v3199 = vld [vmem:[%s3 + $0xf8] sm:$0xff]
        %v3200 = vld [vmem:[%s3 + $0x100] sm:$0xff]
        %v3201 = vld [vmem:[%s3 + $0x108] sm:$0xff]
        %v3202 = vld [vmem:[%s3 + $0x110] sm:$0xff]
        %v3203 = vld [vmem:[%s3 + $0x118] sm:$0xff]
        %v3204 = vld [vmem:[%s3 + $0x120] sm:$0xff]
        %v3205 = vld [vmem:[%s3 + $0x128] sm:$0xff]
        %v3206 = vld [vmem:[%s3 + $0x130] sm:$0xff]
        %v3207 = vld [vmem:[%s3 + $0x138] sm:$0xff]
        %v3208 = vld [vmem:[%s3 + $0x140] sm:$0xff]
        %v3209 = vld [vmem:[%s3 + $0x148] sm:$0xff]
        %v3210 = vld [vmem:[%s3 + $0x150] sm:$0xff]
        %v3211 = vld [vmem:[%s3 + $0x158] sm:$0xff]
        %v3212 = vld [vmem:[%s3 + $0x160] sm:$0xff]
        %v3213 = vld [vmem:[%s3 + $0x168] sm:$0xff]
        %v3214 = vld [vmem:[%s3 + $0x170] sm:$0xff]
        %v3215 = vld [vmem:[%s3 + $0x178] sm:$0xff]
        %v3216 = vld [vmem:[%s3 + $0x180] sm:$0xff]
        %v3217 = vld [vmem:[%s3 + $0x188] sm:$0xff]
        %v3218 = vld [vmem:[%s3 + $0x190] sm:$0xff]
        %v3219 = vld [vmem:[%s3 + $0x198] sm:$0xff]
        %v3220 = vld [vmem:[%s3 + $0x1a0] sm:$0xff]
        %v3221 = vld [vmem:[%s3 + $0x1a8] sm:$0xff]
        %v3222 = vld [vmem:[%s3 + $0x1b0] sm:$0xff]
        %v3223 = vld [vmem:[%s3 + $0x1b8] sm:$0xff]
        %v3224 = vld [vmem:[%s3 + $0x1c0] sm:$0xff]
        %v3225 = vld [vmem:[%s3 + $0x1c8] sm:$0xff]
        %v3226 = vld [vmem:[%s3 + $0x1d0] sm:$0xff]
        %v3227 = vld [vmem:[%s3 + $0x1d8] sm:$0xff]
        %v3228 = vld [vmem:[%s3 + $0x1e0] sm:$0xff]
        %v3229 = vld [vmem:[%s3 + $0x1e8] sm:$0xff]
        %v3230 = vld [vmem:[%s3 + $0x1f0] sm:$0xff]
        %v3231 = vld [vmem:[%s3 + $0x1f8] sm:$0xff]
        %v3232 = vld [vmem:[%s3 + $0x200] sm:$0xff]
        %v3233 = vld [vmem:[%s3 + $0x208] sm:$0xff]
        %v3234 = vld [vmem:[%s3 + $0x210] sm:$0xff]
        %v3235 = vld [vmem:[%s3 + $0x218] sm:$0xff]
        %v3236 = vld [vmem:[%s3 + $0x220] sm:$0xff]
        %v3237 = vld [vmem:[%s3 + $0x228] sm:$0xff]
        %v3238 = vld [vmem:[%s3 + $0x230] sm:$0xff]
        %v3239 = vld [vmem:[%s3 + $0x238] sm:$0xff]
        %v3240 = vld [vmem:[%s3 + $0x240] sm:$0xff]
        %v3241 = vld [vmem:[%s3 + $0x248] sm:$0xff]
        %v3242 = vld [vmem:[%s3 + $0x250] sm:$0xff]
        %v3243 = vld [vmem:[%s3 + $0x258] sm:$0xff]
        %v3244 = vld [vmem:[%s3 + $0x260] sm:$0xff]
        %v3245 = vld [vmem:[%s3 + $0x268] sm:$0xff]
        %v3246 = vld [vmem:[%s3 + $0x270] sm:$0xff]
        %v3247 = vld [vmem:[%s3 + $0x278] sm:$0xff]
        %v3248 = vld [vmem:[%s3 + $0x280] sm:$0xff]
        %v3249 = vld [vmem:[%s3 + $0x288] sm:$0xff]
        %v3250 = vld [vmem:[%s3 + $0x290] sm:$0xff]
        %v3251 = vld [vmem:[%s3 + $0x298] sm:$0xff]
        %v3252 = vld [vmem:[%s3 + $0x2a0] sm:$0xff]
        %v3253 = vld [vmem:[%s3 + $0x2a8] sm:$0xff]
        %v3254 = vld [vmem:[%s3 + $0x2b0] sm:$0xff]
        %v3255 = vld [vmem:[%s3 + $0x2b8] sm:$0xff]
        %v3256 = vld [vmem:[%s3 + $0x2c0] sm:$0xff]
        %v3257 = vld [vmem:[%s3 + $0x2c8] sm:$0xff]
        %v3258 = vld [vmem:[%s3 + $0x2d0] sm:$0xff]
        %v3259 = vld [vmem:[%s3 + $0x2d8] sm:$0xff]
        %v3260 = vld [vmem:[%s3 + $0x2e0] sm:$0xff]
        %v3261 = vld [vmem:[%s3 + $0x2e8] sm:$0xff]
        %v3262 = vld [vmem:[%s3 + $0x2f0] sm:$0xff]
        %v3263 = vld [vmem:[%s3 + $0x2f8] sm:$0xff]
        %v3264 = vld [vmem:[%s3 + $0x300] sm:$0xff]
        %v3265 = vld [vmem:[%s3 + $0x308] sm:$0xff]
        %v3266 = vld [vmem:[%s3 + $0x310] sm:$0xff]
        %v3267 = vld [vmem:[%s3 + $0x318] sm:$0xff]
        %v3268 = vld [vmem:[%s3 + $0x320] sm:$0xff]
        %v3269 = vld [vmem:[%s3 + $0x328] sm:$0xff]
        %v3270 = vld [vmem:[%s3 + $0x330] sm:$0xff]
        %v3271 = vld [vmem:[%s3 + $0x338] sm:$0xff]
        %v3272 = vld [vmem:[%s3 + $0x340] sm:$0xff]
        %v3273 = vld [vmem:[%s3 + $0x348] sm:$0xff]
        %v3274 = vld [vmem:[%s3 + $0x350] sm:$0xff]
        %v3275 = vld [vmem:[%s3 + $0x358] sm:$0xff]
        %v3276 = vld [vmem:[%s3 + $0x360] sm:$0xff]
        %v3277 = vld [vmem:[%s3 + $0x368] sm:$0xff]
        %v3278 = vld [vmem:[%s3 + $0x370] sm:$0xff]
        %v3279 = vld [vmem:[%s3 + $0x378] sm:$0xff]
        %v3280 = vld [vmem:[%s3 + $0x380] sm:$0xff]
        %v3281 = vld [vmem:[%s3 + $0x388] sm:$0xff]
        %v3282 = vld [vmem:[%s3 + $0x390] sm:$0xff]
        %v3283 = vld [vmem:[%s3 + $0x398] sm:$0xff]
        %v3284 = vld [vmem:[%s3 + $0x3a0] sm:$0xff]
        %v3285 = vld [vmem:[%s3 + $0x3a8] sm:$0xff]
        %v3286 = vld [vmem:[%s3 + $0x3b0] sm:$0xff]
        %v3287 = vld [vmem:[%s3 + $0x3b8] sm:$0xff]
        %v3288 = vld [vmem:[%s3 + $0x3c0] sm:$0xff]
        %v3289 = vld [vmem:[%s3 + $0x3c8] sm:$0xff]
        %v3290 = vld [vmem:[%s3 + $0x3d0] sm:$0xff]
        %v3291 = vld [vmem:[%s3 + $0x3d8] sm:$0xff]
        %v3292 = vld [vmem:[%s3 + $0x3e0] sm:$0xff]
        %v3293 = vld [vmem:[%s3 + $0x3e8] sm:$0xff]
        %v3294 = vld [vmem:[%s3 + $0x3f0] sm:$0xff]
        %v3295 = vld [vmem:[%s3 + $0x3f8] sm:$0xff]
        %v3296 = vld [vmem:[%s3 + $0x400] sm:$0xff]
        %v3297 = vld [vmem:[%s3 + $0x408] sm:$0xff]
        %v3298 = vld [vmem:[%s3 + $0x410] sm:$0xff]
        %v3299 = vld [vmem:[%s3 + $0x418] sm:$0xff]
        %v3300 = vld [vmem:[%s3 + $0x420] sm:$0xff]
        %v3301 = vld [vmem:[%s3 + $0x428] sm:$0xff]
        %v3302 = vld [vmem:[%s3 + $0x430] sm:$0xff]
        %v3303 = vld [vmem:[%s3 + $0x438] sm:$0xff]
        %v3304 = vld [vmem:[%s3 + $0x440] sm:$0xff]
        %v3305 = vld [vmem:[%s3 + $0x448] sm:$0xff]
        %v3306 = vld [vmem:[%s3 + $0x450] sm:$0xff]
        %v3307 = vld [vmem:[%s3 + $0x458] sm:$0xff]
        %v3308 = vld [vmem:[%s3 + $0x460] sm:$0xff]
        %v3309 = vld [vmem:[%s3 + $0x468] sm:$0xff]
        %v3310 = vld [vmem:[%s3 + $0x470] sm:$0xff]
        %v3311 = vld [vmem:[%s3 + $0x478] sm:$0xff]
        %v3312 = vld [vmem:[%s3 + $0x480] sm:$0xff]
        %v3313 = vld [vmem:[%s3 + $0x488] sm:$0xff]
        %v3314 = vld [vmem:[%s3 + $0x490] sm:$0xff]
        %v3315 = vld [vmem:[%s3 + $0x498] sm:$0xff]
        %v3316 = vld [vmem:[%s3 + $0x4a0] sm:$0xff]
        %v3317 = vld [vmem:[%s3 + $0x4a8] sm:$0xff]
        %v3318 = vld [vmem:[%s3 + $0x4b0] sm:$0xff]
        %v3319 = vld [vmem:[%s3 + $0x4b8] sm:$0xff]
        %v3320 = vld [vmem:[%s3 + $0x4c0] sm:$0xff]
        %v3321 = vld [vmem:[%s3 + $0x4c8] sm:$0xff]
        %v3322 = vld [vmem:[%s3 + $0x4d0] sm:$0xff]
        %v3323 = vld [vmem:[%s3 + $0x4d8] sm:$0xff]
        %v3324 = vld [vmem:[%s3 + $0x4e0] sm:$0xff]
        %v3325 = vld [vmem:[%s3 + $0x4e8] sm:$0xff]
        %v3326 = vld [vmem:[%s3 + $0x4f0] sm:$0xff]
        %v3327 = vld [vmem:[%s3 + $0x4f8] sm:$0xff]
        %v3328 = vld [vmem:[%s3 + $0x500] sm:$0xff]
        %v3329 = vld [vmem:[%s3 + $0x508] sm:$0xff]
        %v3330 = vld [vmem:[%s3 + $0x510] sm:$0xff]
        %v3331 = vld [vmem:[%s3 + $0x518] sm:$0xff]
        %v3332 = vld [vmem:[%s3 + $0x520] sm:$0xff]
        %v3333 = vld [vmem:[%s3 + $0x528] sm:$0xff]
        %v3334 = vld [vmem:[%s3 + $0x530] sm:$0xff]
        %v3335 = vld [vmem:[%s3 + $0x538] sm:$0xff]
        %v3336 = vld [vmem:[%s3 + $0x540] sm:$0xff]
        %v3337 = vld [vmem:[%s3 + $0x548] sm:$0xff]
        %v3338 = vld [vmem:[%s3 + $0x550] sm:$0xff]
        %v3339 = vld [vmem:[%s3 + $0x558] sm:$0xff]
        %v3340 = vld [vmem:[%s3 + $0x560] sm:$0xff]
        %v3341 = vld [vmem:[%s3 + $0x568] sm:$0xff]
        %v3342 = vld [vmem:[%s3 + $0x570] sm:$0xff]
        %v3343 = vld [vmem:[%s3 + $0x578] sm:$0xff]
        %v3344 = vld [vmem:[%s3 + $0x580] sm:$0xff]
        %v3345 = vld [vmem:[%s3 + $0x588] sm:$0xff]
        %v3346 = vld [vmem:[%s3 + $0x590] sm:$0xff]
        %v3347 = vld [vmem:[%s3 + $0x598] sm:$0xff]
        %v3348 = vld [vmem:[%s3 + $0x5a0] sm:$0xff]
        %v3349 = vld [vmem:[%s3 + $0x5a8] sm:$0xff]
        %v3350 = vld [vmem:[%s3 + $0x5b0] sm:$0xff]
        %v3351 = vld [vmem:[%s3 + $0x5b8] sm:$0xff]
        %v3352 = vld [vmem:[%s3 + $0x5c0] sm:$0xff]
        %v3353 = vld [vmem:[%s3 + $0x5c8] sm:$0xff]
        %v3354 = vld [vmem:[%s3 + $0x5d0] sm:$0xff]
        %v3355 = vld [vmem:[%s3 + $0x5d8] sm:$0xff]
        %v3356 = vld [vmem:[%s3 + $0x5e0] sm:$0xff]
        %v3357 = vld [vmem:[%s3 + $0x5e8] sm:$0xff]
        %v3358 = vld [vmem:[%s3 + $0x5f0] sm:$0xff]
        %v3359 = vld [vmem:[%s3 + $0x5f8] sm:$0xff]
        %v3360 = vld [vmem:[%s3 + $0x600] sm:$0xff]
        %v3361 = vld [vmem:[%s3 + $0x608] sm:$0xff]
        %v3362 = vld [vmem:[%s3 + $0x610] sm:$0xff]
        %v3363 = vld [vmem:[%s3 + $0x618] sm:$0xff]
        %v3364 = vld [vmem:[%s3 + $0x620] sm:$0xff]
        %v3365 = vld [vmem:[%s3 + $0x628] sm:$0xff]
        %v3366 = vld [vmem:[%s3 + $0x630] sm:$0xff]
        %v3367 = vld [vmem:[%s3 + $0x638] sm:$0xff]
        %v3368 = vld [vmem:[%s3 + $0x640] sm:$0xff]
        %v3369 = vld [vmem:[%s3 + $0x648] sm:$0xff]
        %v3370 = vld [vmem:[%s3 + $0x650] sm:$0xff]
        %v3371 = vld [vmem:[%s3 + $0x658] sm:$0xff]
        %v3372 = vld [vmem:[%s3 + $0x660] sm:$0xff]
        %v3373 = vld [vmem:[%s3 + $0x668] sm:$0xff]
        %v3374 = vld [vmem:[%s3 + $0x670] sm:$0xff]
        %v3375 = vld [vmem:[%s3 + $0x678] sm:$0xff]
        %v3376 = vld [vmem:[%s3 + $0x680] sm:$0xff]
        %v3377 = vld [vmem:[%s3 + $0x688] sm:$0xff]
        %v3378 = vld [vmem:[%s3 + $0x690] sm:$0xff]
        %v3379 = vld [vmem:[%s3 + $0x698] sm:$0xff]
        %v3380 = vld [vmem:[%s3 + $0x6a0] sm:$0xff]
        %v3381 = vld [vmem:[%s3 + $0x6a8] sm:$0xff]
        %v3382 = vld [vmem:[%s3 + $0x6b0] sm:$0xff]
        %v3383 = vld [vmem:[%s3 + $0x6b8] sm:$0xff]
        %v3384 = vld [vmem:[%s3 + $0x6c0] sm:$0xff]
        %v3385 = vld [vmem:[%s3 + $0x6c8] sm:$0xff]
        %v3386 = vld [vmem:[%s3 + $0x6d0] sm:$0xff]
        %v3387 = vld [vmem:[%s3 + $0x6d8] sm:$0xff]
        %v3388 = vld [vmem:[%s3 + $0x6e0] sm:$0xff]
        %v3389 = vld [vmem:[%s3 + $0x6e8] sm:$0xff]
        %v3390 = vld [vmem:[%s3 + $0x6f0] sm:$0xff]
        %v3391 = vld [vmem:[%s3 + $0x6f8] sm:$0xff]
        %v3392 = vld [vmem:[%s3 + $0x700] sm:$0xff]
        %v3393 = vld [vmem:[%s3 + $0x708] sm:$0xff]
        %v3394 = vld [vmem:[%s3 + $0x710] sm:$0xff]
        %v3395 = vld [vmem:[%s3 + $0x718] sm:$0xff]
        %v3396 = vld [vmem:[%s3 + $0x720] sm:$0xff]
        %v3397 = vld [vmem:[%s3 + $0x728] sm:$0xff]
        %v3398 = vld [vmem:[%s3 + $0x730] sm:$0xff]
        %v3399 = vld [vmem:[%s3 + $0x738] sm:$0xff]
        %v3400 = vld [vmem:[%s3 + $0x740] sm:$0xff]
        %v3401 = vld [vmem:[%s3 + $0x748] sm:$0xff]
        %v3402 = vld [vmem:[%s3 + $0x750] sm:$0xff]
        %v3403 = vld [vmem:[%s3 + $0x758] sm:$0xff]
        %v3404 = vld [vmem:[%s3 + $0x760] sm:$0xff]
        %v3405 = vld [vmem:[%s3 + $0x768] sm:$0xff]
        %v3406 = vld [vmem:[%s3 + $0x770] sm:$0xff]
        %v3407 = vld [vmem:[%s3 + $0x778] sm:$0xff]
        %v3408 = vld [vmem:[%s3 + $0x780] sm:$0xff]
        %v3409 = vld [vmem:[%s3 + $0x788] sm:$0xff]
        %v3410 = vld [vmem:[%s3 + $0x790] sm:$0xff]
        %v3411 = vld [vmem:[%s3 + $0x798] sm:$0xff]
        %v3412 = vld [vmem:[%s3 + $0x7a0] sm:$0xff]
        %v3413 = vld [vmem:[%s3 + $0x7a8] sm:$0xff]
        %v3414 = vld [vmem:[%s3 + $0x7b0] sm:$0xff]
        %v3415 = vld [vmem:[%s3 + $0x7b8] sm:$0xff]
        %v3416 = vld [vmem:[%s3 + $0x7c0] sm:$0xff]
        %v3417 = vld [vmem:[%s3 + $0x7c8] sm:$0xff]
        %v3418 = vld [vmem:[%s3 + $0x7d0] sm:$0xff]
        %v3419 = vld [vmem:[%s3 + $0x7d8] sm:$0xff]
        %v3420 = vld [vmem:[%s3 + $0x7e0] sm:$0xff]
        %v3421 = vld [vmem:[%s3 + $0x7e8] sm:$0xff]
        %v3422 = vld [vmem:[%s3 + $0x7f0] sm:$0xff]
        %v3423 = vld [vmem:[%s3 + $0x7f8] sm:$0xff]
        %v3424 = vld [vmem:[%s3 + $0x800] sm:$0xff]
        %v3425 = vld [vmem:[%s3 + $0x808] sm:$0xff]
        %v3426 = vld [vmem:[%s3 + $0x810] sm:$0xff]
        %v3427 = vld [vmem:[%s3 + $0x818] sm:$0xff]
        %v3428 = vld [vmem:[%s3 + $0x820] sm:$0xff]
        %v3429 = vld [vmem:[%s3 + $0x828] sm:$0xff]
        %v3430 = vld [vmem:[%s3 + $0x830] sm:$0xff]
        %v3431 = vld [vmem:[%s3 + $0x838] sm:$0xff]
        %v3432 = vld [vmem:[%s3 + $0x840] sm:$0xff]
        %v3433 = vld [vmem:[%s3 + $0x848] sm:$0xff]
        %v3434 = vld [vmem:[%s3 + $0x850] sm:$0xff]
        %v3435 = vld [vmem:[%s3 + $0x858] sm:$0xff]
        %v3436 = vld [vmem:[%s3 + $0x860] sm:$0xff]
        %v3437 = vld [vmem:[%s3 + $0x868] sm:$0xff]
        %v3438 = vld [vmem:[%s3 + $0x870] sm:$0xff]
        %v3439 = vld [vmem:[%s3 + $0x878] sm:$0xff]
        %v3440 = vld [vmem:[%s3 + $0x880] sm:$0xff]
        %v3441 = vld [vmem:[%s3 + $0x888] sm:$0xff]
        %v3442 = vld [vmem:[%s3 + $0x890] sm:$0xff]
        %v3443 = vld [vmem:[%s3 + $0x898] sm:$0xff]
        %v3444 = vld [vmem:[%s3 + $0x8a0] sm:$0xff]
        %v3445 = vld [vmem:[%s3 + $0x8a8] sm:$0xff]
        %v3446 = vld [vmem:[%s3 + $0x8b0] sm:$0xff]
        %v3447 = vld [vmem:[%s3 + $0x8b8] sm:$0xff]
        %v3448 = vld [vmem:[%s3 + $0x8c0] sm:$0xff]
        %v3449 = vld [vmem:[%s3 + $0x8c8] sm:$0xff]
        %v3450 = vld [vmem:[%s3 + $0x8d0] sm:$0xff]
        %v3451 = vld [vmem:[%s3 + $0x8d8] sm:$0xff]
        %v3452 = vld [vmem:[%s3 + $0x8e0] sm:$0xff]
        %v3453 = vld [vmem:[%s3 + $0x8e8] sm:$0xff]
        %v3454 = vld [vmem:[%s3 + $0x8f0] sm:$0xff]
        %v3455 = vld [vmem:[%s3 + $0x8f8] sm:$0xff]
        %v3744 = vunpack.c.l.b16 %v3168
        %v3745 = vunpack.c.h.b16 %v3168
        %v3746 = vunpack.c.l.b16 %v3169
        %v3747 = vunpack.c.h.b16 %v3169
        %v3748 = vunpack.c.l.b16 %v3170
        %v3749 = vunpack.c.h.b16 %v3170
        %v3750 = vunpack.c.l.b16 %v3171
        %v3751 = vunpack.c.h.b16 %v3171
        %v3752 = vunpack.c.l.b16 %v3172
        %v3753 = vunpack.c.h.b16 %v3172
        %v3754 = vunpack.c.l.b16 %v3173
        %v3755 = vunpack.c.h.b16 %v3173
        %v3756 = vunpack.c.l.b16 %v3174
        %v3757 = vunpack.c.h.b16 %v3174
        %v3758 = vunpack.c.l.b16 %v3175
        %v3759 = vunpack.c.h.b16 %v3175
        %v3760 = vunpack.c.l.b16 %v3176
        %v3761 = vunpack.c.h.b16 %v3176
        %v3762 = vunpack.c.l.b16 %v3177
        %v3763 = vunpack.c.h.b16 %v3177
        %v3764 = vunpack.c.l.b16 %v3178
        %v3765 = vunpack.c.h.b16 %v3178
        %v3766 = vunpack.c.l.b16 %v3179
        %v3767 = vunpack.c.h.b16 %v3179
        %v3768 = vunpack.c.l.b16 %v3180
        %v3769 = vunpack.c.h.b16 %v3180
        %v3770 = vunpack.c.l.b16 %v3181
        %v3771 = vunpack.c.h.b16 %v3181
        %v3772 = vunpack.c.l.b16 %v3182
        %v3773 = vunpack.c.h.b16 %v3182
        %v3774 = vunpack.c.l.b16 %v3183
        %v3775 = vunpack.c.h.b16 %v3183
        %v3776 = vunpack.c.l.b16 %v3184
        %v3777 = vunpack.c.h.b16 %v3184
        %v3778 = vunpack.c.l.b16 %v3185
        %v3779 = vunpack.c.h.b16 %v3185
        %v3780 = vunpack.c.l.b16 %v3186
        %v3781 = vunpack.c.h.b16 %v3186
        %v3782 = vunpack.c.l.b16 %v3187
        %v3783 = vunpack.c.h.b16 %v3187
        %v3784 = vunpack.c.l.b16 %v3188
        %v3785 = vunpack.c.h.b16 %v3188
        %v3786 = vunpack.c.l.b16 %v3189
        %v3787 = vunpack.c.h.b16 %v3189
        %v3788 = vunpack.c.l.b16 %v3190
        %v3789 = vunpack.c.h.b16 %v3190
        %v3790 = vunpack.c.l.b16 %v3191
        %v3791 = vunpack.c.h.b16 %v3191
        %v3792 = vunpack.c.l.b16 %v3192
        %v3793 = vunpack.c.h.b16 %v3192
        %v3794 = vunpack.c.l.b16 %v3193
        %v3795 = vunpack.c.h.b16 %v3193
        %v3796 = vunpack.c.l.b16 %v3194
        %v3797 = vunpack.c.h.b16 %v3194
        %v3798 = vunpack.c.l.b16 %v3195
        %v3799 = vunpack.c.h.b16 %v3195
        %v3800 = vunpack.c.l.b16 %v3196
        %v3801 = vunpack.c.h.b16 %v3196
        %v3802 = vunpack.c.l.b16 %v3197
        %v3803 = vunpack.c.h.b16 %v3197
        %v3804 = vunpack.c.l.b16 %v3198
        %v3805 = vunpack.c.h.b16 %v3198
        %v3806 = vunpack.c.l.b16 %v3199
        %v3807 = vunpack.c.h.b16 %v3199
        %v3808 = vunpack.c.l.b16 %v3200
        %v3809 = vunpack.c.h.b16 %v3200
        %v3810 = vunpack.c.l.b16 %v3201
        %v3811 = vunpack.c.h.b16 %v3201
        %v3812 = vunpack.c.l.b16 %v3202
        %v3813 = vunpack.c.h.b16 %v3202
        %v3814 = vunpack.c.l.b16 %v3203
        %v3815 = vunpack.c.h.b16 %v3203
        %v3816 = vunpack.c.l.b16 %v3204
        %v3817 = vunpack.c.h.b16 %v3204
        %v3818 = vunpack.c.l.b16 %v3205
        %v3819 = vunpack.c.h.b16 %v3205
        %v3820 = vunpack.c.l.b16 %v3206
        %v3821 = vunpack.c.h.b16 %v3206
        %v3822 = vunpack.c.l.b16 %v3207
        %v3823 = vunpack.c.h.b16 %v3207
        %v3824 = vunpack.c.l.b16 %v3208
        %v3825 = vunpack.c.h.b16 %v3208
        %v3826 = vunpack.c.l.b16 %v3209
        %v3827 = vunpack.c.h.b16 %v3209
        %v3828 = vunpack.c.l.b16 %v3210
        %v3829 = vunpack.c.h.b16 %v3210
        %v3830 = vunpack.c.l.b16 %v3211
        %v3831 = vunpack.c.h.b16 %v3211
        %v3832 = vunpack.c.l.b16 %v3212
        %v3833 = vunpack.c.h.b16 %v3212
        %v3834 = vunpack.c.l.b16 %v3213
        %v3835 = vunpack.c.h.b16 %v3213
        %v3836 = vunpack.c.l.b16 %v3214
        %v3837 = vunpack.c.h.b16 %v3214
        %v3838 = vunpack.c.l.b16 %v3215
        %v3839 = vunpack.c.h.b16 %v3215
        %v3840 = vunpack.c.l.b16 %v3216
        %v3841 = vunpack.c.h.b16 %v3216
        %v3842 = vunpack.c.l.b16 %v3217
        %v3843 = vunpack.c.h.b16 %v3217
        %v3844 = vunpack.c.l.b16 %v3218
        %v3845 = vunpack.c.h.b16 %v3218
        %v3846 = vunpack.c.l.b16 %v3219
        %v3847 = vunpack.c.h.b16 %v3219
        %v3848 = vunpack.c.l.b16 %v3220
        %v3849 = vunpack.c.h.b16 %v3220
        %v3850 = vunpack.c.l.b16 %v3221
        %v3851 = vunpack.c.h.b16 %v3221
        %v3852 = vunpack.c.l.b16 %v3222
        %v3853 = vunpack.c.h.b16 %v3222
        %v3854 = vunpack.c.l.b16 %v3223
        %v3855 = vunpack.c.h.b16 %v3223
        %v3856 = vunpack.c.l.b16 %v3224
        %v3857 = vunpack.c.h.b16 %v3224
        %v3858 = vunpack.c.l.b16 %v3225
        %v3859 = vunpack.c.h.b16 %v3225
        %v3860 = vunpack.c.l.b16 %v3226
        %v3861 = vunpack.c.h.b16 %v3226
        %v3862 = vunpack.c.l.b16 %v3227
        %v3863 = vunpack.c.h.b16 %v3227
        %v3864 = vunpack.c.l.b16 %v3228
        %v3865 = vunpack.c.h.b16 %v3228
        %v3866 = vunpack.c.l.b16 %v3229
        %v3867 = vunpack.c.h.b16 %v3229
        %v3868 = vunpack.c.l.b16 %v3230
        %v3869 = vunpack.c.h.b16 %v3230
        %v3870 = vunpack.c.l.b16 %v3231
        %v3871 = vunpack.c.h.b16 %v3231
        %v3872 = vunpack.c.l.b16 %v3232
        %v3873 = vunpack.c.h.b16 %v3232
        %v3874 = vunpack.c.l.b16 %v3233
        %v3875 = vunpack.c.h.b16 %v3233
        %v3876 = vunpack.c.l.b16 %v3234
        %v3877 = vunpack.c.h.b16 %v3234
        %v3878 = vunpack.c.l.b16 %v3235
        %v3879 = vunpack.c.h.b16 %v3235
        %v3880 = vunpack.c.l.b16 %v3236
        %v3881 = vunpack.c.h.b16 %v3236
        %v3882 = vunpack.c.l.b16 %v3237
        %v3883 = vunpack.c.h.b16 %v3237
        %v3884 = vunpack.c.l.b16 %v3238
        %v3885 = vunpack.c.h.b16 %v3238
        %v3886 = vunpack.c.l.b16 %v3239
        %v3887 = vunpack.c.h.b16 %v3239
        %v3888 = vunpack.c.l.b16 %v3240
        %v3889 = vunpack.c.h.b16 %v3240
        %v3890 = vunpack.c.l.b16 %v3241
        %v3891 = vunpack.c.h.b16 %v3241
        %v3892 = vunpack.c.l.b16 %v3242
        %v3893 = vunpack.c.h.b16 %v3242
        %v3894 = vunpack.c.l.b16 %v3243
        %v3895 = vunpack.c.h.b16 %v3243
        %v3896 = vunpack.c.l.b16 %v3244
        %v3897 = vunpack.c.h.b16 %v3244
        %v3898 = vunpack.c.l.b16 %v3245
        %v3899 = vunpack.c.h.b16 %v3245
        %v3900 = vunpack.c.l.b16 %v3246
        %v3901 = vunpack.c.h.b16 %v3246
        %v3902 = vunpack.c.l.b16 %v3247
        %v3903 = vunpack.c.h.b16 %v3247
        %v3904 = vunpack.c.l.b16 %v3248
        %v3905 = vunpack.c.h.b16 %v3248
        %v3906 = vunpack.c.l.b16 %v3249
        %v3907 = vunpack.c.h.b16 %v3249
        %v3908 = vunpack.c.l.b16 %v3250
        %v3909 = vunpack.c.h.b16 %v3250
        %v3910 = vunpack.c.l.b16 %v3251
        %v3911 = vunpack.c.h.b16 %v3251
        %v3912 = vunpack.c.l.b16 %v3252
        %v3913 = vunpack.c.h.b16 %v3252
        %v3914 = vunpack.c.l.b16 %v3253
        %v3915 = vunpack.c.h.b16 %v3253
        %v3916 = vunpack.c.l.b16 %v3254
        %v3917 = vunpack.c.h.b16 %v3254
        %v3918 = vunpack.c.l.b16 %v3255
        %v3919 = vunpack.c.h.b16 %v3255
        %v3920 = vunpack.c.l.b16 %v3256
        %v3921 = vunpack.c.h.b16 %v3256
        %v3922 = vunpack.c.l.b16 %v3257
        %v3923 = vunpack.c.h.b16 %v3257
        %v3924 = vunpack.c.l.b16 %v3258
        %v3925 = vunpack.c.h.b16 %v3258
        %v3926 = vunpack.c.l.b16 %v3259
        %v3927 = vunpack.c.h.b16 %v3259
        %v3928 = vunpack.c.l.b16 %v3260
        %v3929 = vunpack.c.h.b16 %v3260
        %v3930 = vunpack.c.l.b16 %v3261
        %v3931 = vunpack.c.h.b16 %v3261
        %v3932 = vunpack.c.l.b16 %v3262
        %v3933 = vunpack.c.h.b16 %v3262
        %v3934 = vunpack.c.l.b16 %v3263
        %v3935 = vunpack.c.h.b16 %v3263
        %v3936 = vunpack.c.l.b16 %v3264
        %v3937 = vunpack.c.h.b16 %v3264
        %v3938 = vunpack.c.l.b16 %v3265
        %v3939 = vunpack.c.h.b16 %v3265
        %v3940 = vunpack.c.l.b16 %v3266
        %v3941 = vunpack.c.h.b16 %v3266
        %v3942 = vunpack.c.l.b16 %v3267
        %v3943 = vunpack.c.h.b16 %v3267
        %v3944 = vunpack.c.l.b16 %v3268
        %v3945 = vunpack.c.h.b16 %v3268
        %v3946 = vunpack.c.l.b16 %v3269
        %v3947 = vunpack.c.h.b16 %v3269
        %v3948 = vunpack.c.l.b16 %v3270
        %v3949 = vunpack.c.h.b16 %v3270
        %v3950 = vunpack.c.l.b16 %v3271
        %v3951 = vunpack.c.h.b16 %v3271
        %v3952 = vunpack.c.l.b16 %v3272
        %v3953 = vunpack.c.h.b16 %v3272
        %v3954 = vunpack.c.l.b16 %v3273
        %v3955 = vunpack.c.h.b16 %v3273
        %v3956 = vunpack.c.l.b16 %v3274
        %v3957 = vunpack.c.h.b16 %v3274
        %v3958 = vunpack.c.l.b16 %v3275
        %v3959 = vunpack.c.h.b16 %v3275
        %v3960 = vunpack.c.l.b16 %v3276
        %v3961 = vunpack.c.h.b16 %v3276
        %v3962 = vunpack.c.l.b16 %v3277
        %v3963 = vunpack.c.h.b16 %v3277
        %v3964 = vunpack.c.l.b16 %v3278
        %v3965 = vunpack.c.h.b16 %v3278
        %v3966 = vunpack.c.l.b16 %v3279
        %v3967 = vunpack.c.h.b16 %v3279
        %v3968 = vunpack.c.l.b16 %v3280
        %v3969 = vunpack.c.h.b16 %v3280
        %v3970 = vunpack.c.l.b16 %v3281
        %v3971 = vunpack.c.h.b16 %v3281
        %v3972 = vunpack.c.l.b16 %v3282
        %v3973 = vunpack.c.h.b16 %v3282
        %v3974 = vunpack.c.l.b16 %v3283
        %v3975 = vunpack.c.h.b16 %v3283
        %v3976 = vunpack.c.l.b16 %v3284
        %v3977 = vunpack.c.h.b16 %v3284
        %v3978 = vunpack.c.l.b16 %v3285
        %v3979 = vunpack.c.h.b16 %v3285
        %v3980 = vunpack.c.l.b16 %v3286
        %v3981 = vunpack.c.h.b16 %v3286
        %v3982 = vunpack.c.l.b16 %v3287
        %v3983 = vunpack.c.h.b16 %v3287
        %v3984 = vunpack.c.l.b16 %v3288
        %v3985 = vunpack.c.h.b16 %v3288
        %v3986 = vunpack.c.l.b16 %v3289
        %v3987 = vunpack.c.h.b16 %v3289
        %v3988 = vunpack.c.l.b16 %v3290
        %v3989 = vunpack.c.h.b16 %v3290
        %v3990 = vunpack.c.l.b16 %v3291
        %v3991 = vunpack.c.h.b16 %v3291
        %v3992 = vunpack.c.l.b16 %v3292
        %v3993 = vunpack.c.h.b16 %v3292
        %v3994 = vunpack.c.l.b16 %v3293
        %v3995 = vunpack.c.h.b16 %v3293
        %v3996 = vunpack.c.l.b16 %v3294
        %v3997 = vunpack.c.h.b16 %v3294
        %v3998 = vunpack.c.l.b16 %v3295
        %v3999 = vunpack.c.h.b16 %v3295
        %v4000 = vunpack.c.l.b16 %v3296
        %v4001 = vunpack.c.h.b16 %v3296
        %v4002 = vunpack.c.l.b16 %v3297
        %v4003 = vunpack.c.h.b16 %v3297
        %v4004 = vunpack.c.l.b16 %v3298
        %v4005 = vunpack.c.h.b16 %v3298
        %v4006 = vunpack.c.l.b16 %v3299
        %v4007 = vunpack.c.h.b16 %v3299
        %v4008 = vunpack.c.l.b16 %v3300
        %v4009 = vunpack.c.h.b16 %v3300
        %v4010 = vunpack.c.l.b16 %v3301
        %v4011 = vunpack.c.h.b16 %v3301
        %v4012 = vunpack.c.l.b16 %v3302
        %v4013 = vunpack.c.h.b16 %v3302
        %v4014 = vunpack.c.l.b16 %v3303
        %v4015 = vunpack.c.h.b16 %v3303
        %v4016 = vunpack.c.l.b16 %v3304
        %v4017 = vunpack.c.h.b16 %v3304
        %v4018 = vunpack.c.l.b16 %v3305
        %v4019 = vunpack.c.h.b16 %v3305
        %v4020 = vunpack.c.l.b16 %v3306
        %v4021 = vunpack.c.h.b16 %v3306
        %v4022 = vunpack.c.l.b16 %v3307
        %v4023 = vunpack.c.h.b16 %v3307
        %v4024 = vunpack.c.l.b16 %v3308
        %v4025 = vunpack.c.h.b16 %v3308
        %v4026 = vunpack.c.l.b16 %v3309
        %v4027 = vunpack.c.h.b16 %v3309
        %v4028 = vunpack.c.l.b16 %v3310
        %v4029 = vunpack.c.h.b16 %v3310
        %v4030 = vunpack.c.l.b16 %v3311
        %v4031 = vunpack.c.h.b16 %v3311
        %v4032 = vunpack.c.l.b16 %v3312
        %v4033 = vunpack.c.h.b16 %v3312
        %v4034 = vunpack.c.l.b16 %v3313
        %v4035 = vunpack.c.h.b16 %v3313
        %v4036 = vunpack.c.l.b16 %v3314
        %v4037 = vunpack.c.h.b16 %v3314
        %v4038 = vunpack.c.l.b16 %v3315
        %v4039 = vunpack.c.h.b16 %v3315
        %v4040 = vunpack.c.l.b16 %v3316
        %v4041 = vunpack.c.h.b16 %v3316
        %v4042 = vunpack.c.l.b16 %v3317
        %v4043 = vunpack.c.h.b16 %v3317
        %v4044 = vunpack.c.l.b16 %v3318
        %v4045 = vunpack.c.h.b16 %v3318
        %v4046 = vunpack.c.l.b16 %v3319
        %v4047 = vunpack.c.h.b16 %v3319
        %v4048 = vunpack.c.l.b16 %v3320
        %v4049 = vunpack.c.h.b16 %v3320
        %v4050 = vunpack.c.l.b16 %v3321
        %v4051 = vunpack.c.h.b16 %v3321
        %v4052 = vunpack.c.l.b16 %v3322
        %v4053 = vunpack.c.h.b16 %v3322
        %v4054 = vunpack.c.l.b16 %v3323
        %v4055 = vunpack.c.h.b16 %v3323
        %v4056 = vunpack.c.l.b16 %v3324
        %v4057 = vunpack.c.h.b16 %v3324
        %v4058 = vunpack.c.l.b16 %v3325
        %v4059 = vunpack.c.h.b16 %v3325
        %v4060 = vunpack.c.l.b16 %v3326
        %v4061 = vunpack.c.h.b16 %v3326
        %v4062 = vunpack.c.l.b16 %v3327
        %v4063 = vunpack.c.h.b16 %v3327
        %v4064 = vunpack.c.l.b16 %v3328
        %v4065 = vunpack.c.h.b16 %v3328
        %v4066 = vunpack.c.l.b16 %v3329
        %v4067 = vunpack.c.h.b16 %v3329
        %v4068 = vunpack.c.l.b16 %v3330
        %v4069 = vunpack.c.h.b16 %v3330
        %v4070 = vunpack.c.l.b16 %v3331
        %v4071 = vunpack.c.h.b16 %v3331
        %v4072 = vunpack.c.l.b16 %v3332
        %v4073 = vunpack.c.h.b16 %v3332
        %v4074 = vunpack.c.l.b16 %v3333
        %v4075 = vunpack.c.h.b16 %v3333
        %v4076 = vunpack.c.l.b16 %v3334
        %v4077 = vunpack.c.h.b16 %v3334
        %v4078 = vunpack.c.l.b16 %v3335
        %v4079 = vunpack.c.h.b16 %v3335
        %v4080 = vunpack.c.l.b16 %v3336
        %v4081 = vunpack.c.h.b16 %v3336
        %v4082 = vunpack.c.l.b16 %v3337
        %v4083 = vunpack.c.h.b16 %v3337
        %v4084 = vunpack.c.l.b16 %v3338
        %v4085 = vunpack.c.h.b16 %v3338
        %v4086 = vunpack.c.l.b16 %v3339
        %v4087 = vunpack.c.h.b16 %v3339
        %v4088 = vunpack.c.l.b16 %v3340
        %v4089 = vunpack.c.h.b16 %v3340
        %v4090 = vunpack.c.l.b16 %v3341
        %v4091 = vunpack.c.h.b16 %v3341
        %v4092 = vunpack.c.l.b16 %v3342
        %v4093 = vunpack.c.h.b16 %v3342
        %v4094 = vunpack.c.l.b16 %v3343
        %v4095 = vunpack.c.h.b16 %v3343
        %v4096 = vunpack.c.l.b16 %v3344
        %v4097 = vunpack.c.h.b16 %v3344
        %v4098 = vunpack.c.l.b16 %v3345
        %v4099 = vunpack.c.h.b16 %v3345
        %v4100 = vunpack.c.l.b16 %v3346
        %v4101 = vunpack.c.h.b16 %v3346
        %v4102 = vunpack.c.l.b16 %v3347
        %v4103 = vunpack.c.h.b16 %v3347
        %v4104 = vunpack.c.l.b16 %v3348
        %v4105 = vunpack.c.h.b16 %v3348
        %v4106 = vunpack.c.l.b16 %v3349
        %v4107 = vunpack.c.h.b16 %v3349
        %v4108 = vunpack.c.l.b16 %v3350
        %v4109 = vunpack.c.h.b16 %v3350
        %v4110 = vunpack.c.l.b16 %v3351
        %v4111 = vunpack.c.h.b16 %v3351
        %v4112 = vunpack.c.l.b16 %v3352
        %v4113 = vunpack.c.h.b16 %v3352
        %v4114 = vunpack.c.l.b16 %v3353
        %v4115 = vunpack.c.h.b16 %v3353
        %v4116 = vunpack.c.l.b16 %v3354
        %v4117 = vunpack.c.h.b16 %v3354
        %v4118 = vunpack.c.l.b16 %v3355
        %v4119 = vunpack.c.h.b16 %v3355
        %v4120 = vunpack.c.l.b16 %v3356
        %v4121 = vunpack.c.h.b16 %v3356
        %v4122 = vunpack.c.l.b16 %v3357
        %v4123 = vunpack.c.h.b16 %v3357
        %v4124 = vunpack.c.l.b16 %v3358
        %v4125 = vunpack.c.h.b16 %v3358
        %v4126 = vunpack.c.l.b16 %v3359
        %v4127 = vunpack.c.h.b16 %v3359
        %v4128 = vunpack.c.l.b16 %v3360
        %v4129 = vunpack.c.h.b16 %v3360
        %v4130 = vunpack.c.l.b16 %v3361
        %v4131 = vunpack.c.h.b16 %v3361
        %v4132 = vunpack.c.l.b16 %v3362
        %v4133 = vunpack.c.h.b16 %v3362
        %v4134 = vunpack.c.l.b16 %v3363
        %v4135 = vunpack.c.h.b16 %v3363
        %v4136 = vunpack.c.l.b16 %v3364
        %v4137 = vunpack.c.h.b16 %v3364
        %v4138 = vunpack.c.l.b16 %v3365
        %v4139 = vunpack.c.h.b16 %v3365
        %v4140 = vunpack.c.l.b16 %v3366
        %v4141 = vunpack.c.h.b16 %v3366
        %v4142 = vunpack.c.l.b16 %v3367
        %v4143 = vunpack.c.h.b16 %v3367
        %v4144 = vunpack.c.l.b16 %v3368
        %v4145 = vunpack.c.h.b16 %v3368
        %v4146 = vunpack.c.l.b16 %v3369
        %v4147 = vunpack.c.h.b16 %v3369
        %v4148 = vunpack.c.l.b16 %v3370
        %v4149 = vunpack.c.h.b16 %v3370
        %v4150 = vunpack.c.l.b16 %v3371
        %v4151 = vunpack.c.h.b16 %v3371
        %v4152 = vunpack.c.l.b16 %v3372
        %v4153 = vunpack.c.h.b16 %v3372
        %v4154 = vunpack.c.l.b16 %v3373
        %v4155 = vunpack.c.h.b16 %v3373
        %v4156 = vunpack.c.l.b16 %v3374
        %v4157 = vunpack.c.h.b16 %v3374
        %v4158 = vunpack.c.l.b16 %v3375
        %v4159 = vunpack.c.h.b16 %v3375
        %v4160 = vunpack.c.l.b16 %v3376
        %v4161 = vunpack.c.h.b16 %v3376
        %v4162 = vunpack.c.l.b16 %v3377
        %v4163 = vunpack.c.h.b16 %v3377
        %v4164 = vunpack.c.l.b16 %v3378
        %v4165 = vunpack.c.h.b16 %v3378
        %v4166 = vunpack.c.l.b16 %v3379
        %v4167 = vunpack.c.h.b16 %v3379
        %v4168 = vunpack.c.l.b16 %v3380
        %v4169 = vunpack.c.h.b16 %v3380
        %v4170 = vunpack.c.l.b16 %v3381
        %v4171 = vunpack.c.h.b16 %v3381
        %v4172 = vunpack.c.l.b16 %v3382
        %v4173 = vunpack.c.h.b16 %v3382
        %v4174 = vunpack.c.l.b16 %v3383
        %v4175 = vunpack.c.h.b16 %v3383
        %v4176 = vunpack.c.l.b16 %v3384
        %v4177 = vunpack.c.h.b16 %v3384
        %v4178 = vunpack.c.l.b16 %v3385
        %v4179 = vunpack.c.h.b16 %v3385
        %v4180 = vunpack.c.l.b16 %v3386
        %v4181 = vunpack.c.h.b16 %v3386
        %v4182 = vunpack.c.l.b16 %v3387
        %v4183 = vunpack.c.h.b16 %v3387
        %v4184 = vunpack.c.l.b16 %v3388
        %v4185 = vunpack.c.h.b16 %v3388
        %v4186 = vunpack.c.l.b16 %v3389
        %v4187 = vunpack.c.h.b16 %v3389
        %v4188 = vunpack.c.l.b16 %v3390
        %v4189 = vunpack.c.h.b16 %v3390
        %v4190 = vunpack.c.l.b16 %v3391
        %v4191 = vunpack.c.h.b16 %v3391
        %v4192 = vunpack.c.l.b16 %v3392
        %v4193 = vunpack.c.h.b16 %v3392
        %v4194 = vunpack.c.l.b16 %v3393
        %v4195 = vunpack.c.h.b16 %v3393
        %v4196 = vunpack.c.l.b16 %v3394
        %v4197 = vunpack.c.h.b16 %v3394
        %v4198 = vunpack.c.l.b16 %v3395
        %v4199 = vunpack.c.h.b16 %v3395
        %v4200 = vunpack.c.l.b16 %v3396
        %v4201 = vunpack.c.h.b16 %v3396
        %v4202 = vunpack.c.l.b16 %v3397
        %v4203 = vunpack.c.h.b16 %v3397
        %v4204 = vunpack.c.l.b16 %v3398
        %v4205 = vunpack.c.h.b16 %v3398
        %v4206 = vunpack.c.l.b16 %v3399
        %v4207 = vunpack.c.h.b16 %v3399
        %v4208 = vunpack.c.l.b16 %v3400
        %v4209 = vunpack.c.h.b16 %v3400
        %v4210 = vunpack.c.l.b16 %v3401
        %v4211 = vunpack.c.h.b16 %v3401
        %v4212 = vunpack.c.l.b16 %v3402
        %v4213 = vunpack.c.h.b16 %v3402
        %v4214 = vunpack.c.l.b16 %v3403
        %v4215 = vunpack.c.h.b16 %v3403
        %v4216 = vunpack.c.l.b16 %v3404
        %v4217 = vunpack.c.h.b16 %v3404
        %v4218 = vunpack.c.l.b16 %v3405
        %v4219 = vunpack.c.h.b16 %v3405
        %v4220 = vunpack.c.l.b16 %v3406
        %v4221 = vunpack.c.h.b16 %v3406
        %v4222 = vunpack.c.l.b16 %v3407
        %v4223 = vunpack.c.h.b16 %v3407
        %v4224 = vunpack.c.l.b16 %v3408
        %v4225 = vunpack.c.h.b16 %v3408
        %v4226 = vunpack.c.l.b16 %v3409
        %v4227 = vunpack.c.h.b16 %v3409
        %v4228 = vunpack.c.l.b16 %v3410
        %v4229 = vunpack.c.h.b16 %v3410
        %v4230 = vunpack.c.l.b16 %v3411
        %v4231 = vunpack.c.h.b16 %v3411
        %v4232 = vunpack.c.l.b16 %v3412
        %v4233 = vunpack.c.h.b16 %v3412
        %v4234 = vunpack.c.l.b16 %v3413
        %v4235 = vunpack.c.h.b16 %v3413
        %v4236 = vunpack.c.l.b16 %v3414
        %v4237 = vunpack.c.h.b16 %v3414
        %v4238 = vunpack.c.l.b16 %v3415
        %v4239 = vunpack.c.h.b16 %v3415
        %v4240 = vunpack.c.l.b16 %v3416
        %v4241 = vunpack.c.h.b16 %v3416
        %v4242 = vunpack.c.l.b16 %v3417
        %v4243 = vunpack.c.h.b16 %v3417
        %v4244 = vunpack.c.l.b16 %v3418
        %v4245 = vunpack.c.h.b16 %v3418
        %v4246 = vunpack.c.l.b16 %v3419
        %v4247 = vunpack.c.h.b16 %v3419
        %v4248 = vunpack.c.l.b16 %v3420
        %v4249 = vunpack.c.h.b16 %v3420
        %v4250 = vunpack.c.l.b16 %v3421
        %v4251 = vunpack.c.h.b16 %v3421
        %v4252 = vunpack.c.l.b16 %v3422
        %v4253 = vunpack.c.h.b16 %v3422
        %v4254 = vunpack.c.l.b16 %v3423
        %v4255 = vunpack.c.h.b16 %v3423
        %v4256 = vunpack.c.l.b16 %v3424
        %v4257 = vunpack.c.h.b16 %v3424
        %v4258 = vunpack.c.l.b16 %v3425
        %v4259 = vunpack.c.h.b16 %v3425
        %v4260 = vunpack.c.l.b16 %v3426
        %v4261 = vunpack.c.h.b16 %v3426
        %v4262 = vunpack.c.l.b16 %v3427
        %v4263 = vunpack.c.h.b16 %v3427
        %v4264 = vunpack.c.l.b16 %v3428
        %v4265 = vunpack.c.h.b16 %v3428
        %v4266 = vunpack.c.l.b16 %v3429
        %v4267 = vunpack.c.h.b16 %v3429
        %v4268 = vunpack.c.l.b16 %v3430
        %v4269 = vunpack.c.h.b16 %v3430
        %v4270 = vunpack.c.l.b16 %v3431
        %v4271 = vunpack.c.h.b16 %v3431
        %v4272 = vunpack.c.l.b16 %v3432
        %v4273 = vunpack.c.h.b16 %v3432
        %v4274 = vunpack.c.l.b16 %v3433
        %v4275 = vunpack.c.h.b16 %v3433
        %v4276 = vunpack.c.l.b16 %v3434
        %v4277 = vunpack.c.h.b16 %v3434
        %v4278 = vunpack.c.l.b16 %v3435
        %v4279 = vunpack.c.h.b16 %v3435
        %v4280 = vunpack.c.l.b16 %v3436
        %v4281 = vunpack.c.h.b16 %v3436
        %v4282 = vunpack.c.l.b16 %v3437
        %v4283 = vunpack.c.h.b16 %v3437
        %v4284 = vunpack.c.l.b16 %v3438
        %v4285 = vunpack.c.h.b16 %v3438
        %v4286 = vunpack.c.l.b16 %v3439
        %v4287 = vunpack.c.h.b16 %v3439
        %v4288 = vunpack.c.l.b16 %v3440
        %v4289 = vunpack.c.h.b16 %v3440
        %v4290 = vunpack.c.l.b16 %v3441
        %v4291 = vunpack.c.h.b16 %v3441
        %v4292 = vunpack.c.l.b16 %v3442
        %v4293 = vunpack.c.h.b16 %v3442
        %v4294 = vunpack.c.l.b16 %v3443
        %v4295 = vunpack.c.h.b16 %v3443
        %v4296 = vunpack.c.l.b16 %v3444
        %v4297 = vunpack.c.h.b16 %v3444
        %v4298 = vunpack.c.l.b16 %v3445
        %v4299 = vunpack.c.h.b16 %v3445
        %v4300 = vunpack.c.l.b16 %v3446
        %v4301 = vunpack.c.h.b16 %v3446
        %v4302 = vunpack.c.l.b16 %v3447
        %v4303 = vunpack.c.h.b16 %v3447
        %v4304 = vunpack.c.l.b16 %v3448
        %v4305 = vunpack.c.h.b16 %v3448
        %v4306 = vunpack.c.l.b16 %v3449
        %v4307 = vunpack.c.h.b16 %v3449
        %v4308 = vunpack.c.l.b16 %v3450
        %v4309 = vunpack.c.h.b16 %v3450
        %v4310 = vunpack.c.l.b16 %v3451
        %v4311 = vunpack.c.h.b16 %v3451
        %v4312 = vunpack.c.l.b16 %v3452
        %v4313 = vunpack.c.h.b16 %v3452
        %v4314 = vunpack.c.l.b16 %v3453
        %v4315 = vunpack.c.h.b16 %v3453
        %v4316 = vunpack.c.l.b16 %v3454
        %v4317 = vunpack.c.h.b16 %v3454
        %v4318 = vunpack.c.l.b16 %v3455
        %v4319 = vunpack.c.h.b16 %v3455
        %v4320 = vpack.c.b16 %v3746, %v3744
        %v4321 = vpack.c.b16 %v3747, %v3745
        %v4322 = vpack.c.b16 %v3750, %v3748
        %v4323 = vpack.c.b16 %v3751, %v3749
        %v4324 = vpack.c.b16 %v3754, %v3752
        %v4325 = vpack.c.b16 %v3755, %v3753
        %v4326 = vpack.c.b16 %v3758, %v3756
        %v4327 = vpack.c.b16 %v3759, %v3757
        %v4328 = vpack.c.b16 %v3762, %v3760
        %v4329 = vpack.c.b16 %v3763, %v3761
        %v4330 = vpack.c.b16 %v3766, %v3764
        %v4331 = vpack.c.b16 %v3767, %v3765
        %v4332 = vpack.c.b16 %v3770, %v3768
        %v4333 = vpack.c.b16 %v3771, %v3769
        %v4334 = vpack.c.b16 %v3774, %v3772
        %v4335 = vpack.c.b16 %v3775, %v3773
        %v4336 = vpack.c.b16 %v3778, %v3776
        %v4337 = vpack.c.b16 %v3779, %v3777
        %v4338 = vpack.c.b16 %v3782, %v3780
        %v4339 = vpack.c.b16 %v3783, %v3781
        %v4340 = vpack.c.b16 %v3786, %v3784
        %v4341 = vpack.c.b16 %v3787, %v3785
        %v4342 = vpack.c.b16 %v3790, %v3788
        %v4343 = vpack.c.b16 %v3791, %v3789
        %v4344 = vpack.c.b16 %v3794, %v3792
        %v4345 = vpack.c.b16 %v3795, %v3793
        %v4346 = vpack.c.b16 %v3798, %v3796
        %v4347 = vpack.c.b16 %v3799, %v3797
        %v4348 = vpack.c.b16 %v3802, %v3800
        %v4349 = vpack.c.b16 %v3803, %v3801
        %v4350 = vpack.c.b16 %v3806, %v3804
        %v4351 = vpack.c.b16 %v3807, %v3805
        %v4352 = vpack.c.b16 %v3810, %v3808
        %v4353 = vpack.c.b16 %v3811, %v3809
        %v4354 = vpack.c.b16 %v3814, %v3812
        %v4355 = vpack.c.b16 %v3815, %v3813
        %v4356 = vpack.c.b16 %v3818, %v3816
        %v4357 = vpack.c.b16 %v3819, %v3817
        %v4358 = vpack.c.b16 %v3822, %v3820
        %v4359 = vpack.c.b16 %v3823, %v3821
        %v4360 = vpack.c.b16 %v3826, %v3824
        %v4361 = vpack.c.b16 %v3827, %v3825
        %v4362 = vpack.c.b16 %v3830, %v3828
        %v4363 = vpack.c.b16 %v3831, %v3829
        %v4364 = vpack.c.b16 %v3834, %v3832
        %v4365 = vpack.c.b16 %v3835, %v3833
        %v4366 = vpack.c.b16 %v3838, %v3836
        %v4367 = vpack.c.b16 %v3839, %v3837
        %v4368 = vpack.c.b16 %v3842, %v3840
        %v4369 = vpack.c.b16 %v3843, %v3841
        %v4370 = vpack.c.b16 %v3846, %v3844
        %v4371 = vpack.c.b16 %v3847, %v3845
        %v4372 = vpack.c.b16 %v3850, %v3848
        %v4373 = vpack.c.b16 %v3851, %v3849
        %v4374 = vpack.c.b16 %v3854, %v3852
        %v4375 = vpack.c.b16 %v3855, %v3853
        %v4376 = vpack.c.b16 %v3858, %v3856
        %v4377 = vpack.c.b16 %v3859, %v3857
        %v4378 = vpack.c.b16 %v3862, %v3860
        %v4379 = vpack.c.b16 %v3863, %v3861
        %v4380 = vpack.c.b16 %v3866, %v3864
        %v4381 = vpack.c.b16 %v3867, %v3865
        %v4382 = vpack.c.b16 %v3870, %v3868
        %v4383 = vpack.c.b16 %v3871, %v3869
        %v4384 = vpack.c.b16 %v3874, %v3872
        %v4385 = vpack.c.b16 %v3875, %v3873
        %v4386 = vpack.c.b16 %v3878, %v3876
        %v4387 = vpack.c.b16 %v3879, %v3877
        %v4388 = vpack.c.b16 %v3882, %v3880
        %v4389 = vpack.c.b16 %v3883, %v3881
        %v4390 = vpack.c.b16 %v3886, %v3884
        %v4391 = vpack.c.b16 %v3887, %v3885
        %v4392 = vpack.c.b16 %v3890, %v3888
        %v4393 = vpack.c.b16 %v3891, %v3889
        %v4394 = vpack.c.b16 %v3894, %v3892
        %v4395 = vpack.c.b16 %v3895, %v3893
        %v4396 = vpack.c.b16 %v3898, %v3896
        %v4397 = vpack.c.b16 %v3899, %v3897
        %v4398 = vpack.c.b16 %v3902, %v3900
        %v4399 = vpack.c.b16 %v3903, %v3901
        %v4400 = vpack.c.b16 %v3906, %v3904
        %v4401 = vpack.c.b16 %v3907, %v3905
        %v4402 = vpack.c.b16 %v3910, %v3908
        %v4403 = vpack.c.b16 %v3911, %v3909
        %v4404 = vpack.c.b16 %v3914, %v3912
        %v4405 = vpack.c.b16 %v3915, %v3913
        %v4406 = vpack.c.b16 %v3918, %v3916
        %v4407 = vpack.c.b16 %v3919, %v3917
        %v4408 = vpack.c.b16 %v3922, %v3920
        %v4409 = vpack.c.b16 %v3923, %v3921
        %v4410 = vpack.c.b16 %v3926, %v3924
        %v4411 = vpack.c.b16 %v3927, %v3925
        %v4412 = vpack.c.b16 %v3930, %v3928
        %v4413 = vpack.c.b16 %v3931, %v3929
        %v4414 = vpack.c.b16 %v3934, %v3932
        %v4415 = vpack.c.b16 %v3935, %v3933
        %v4416 = vpack.c.b16 %v3938, %v3936
        %v4417 = vpack.c.b16 %v3939, %v3937
        %v4418 = vpack.c.b16 %v3942, %v3940
        %v4419 = vpack.c.b16 %v3943, %v3941
        %v4420 = vpack.c.b16 %v3946, %v3944
        %v4421 = vpack.c.b16 %v3947, %v3945
        %v4422 = vpack.c.b16 %v3950, %v3948
        %v4423 = vpack.c.b16 %v3951, %v3949
        %v4424 = vpack.c.b16 %v3954, %v3952
        %v4425 = vpack.c.b16 %v3955, %v3953
        %v4426 = vpack.c.b16 %v3958, %v3956
        %v4427 = vpack.c.b16 %v3959, %v3957
        %v4428 = vpack.c.b16 %v3962, %v3960
        %v4429 = vpack.c.b16 %v3963, %v3961
        %v4430 = vpack.c.b16 %v3966, %v3964
        %v4431 = vpack.c.b16 %v3967, %v3965
        %v4432 = vpack.c.b16 %v3970, %v3968
        %v4433 = vpack.c.b16 %v3971, %v3969
        %v4434 = vpack.c.b16 %v3974, %v3972
        %v4435 = vpack.c.b16 %v3975, %v3973
        %v4436 = vpack.c.b16 %v3978, %v3976
        %v4437 = vpack.c.b16 %v3979, %v3977
        %v4438 = vpack.c.b16 %v3982, %v3980
        %v4439 = vpack.c.b16 %v3983, %v3981
        %v4440 = vpack.c.b16 %v3986, %v3984
        %v4441 = vpack.c.b16 %v3987, %v3985
        %v4442 = vpack.c.b16 %v3990, %v3988
        %v4443 = vpack.c.b16 %v3991, %v3989
        %v4444 = vpack.c.b16 %v3994, %v3992
        %v4445 = vpack.c.b16 %v3995, %v3993
        %v4446 = vpack.c.b16 %v3998, %v3996
        %v4447 = vpack.c.b16 %v3999, %v3997
        %v4448 = vpack.c.b16 %v4002, %v4000
        %v4449 = vpack.c.b16 %v4003, %v4001
        %v4450 = vpack.c.b16 %v4006, %v4004
        %v4451 = vpack.c.b16 %v4007, %v4005
        %v4452 = vpack.c.b16 %v4010, %v4008
        %v4453 = vpack.c.b16 %v4011, %v4009
        %v4454 = vpack.c.b16 %v4014, %v4012
        %v4455 = vpack.c.b16 %v4015, %v4013
        %v4456 = vpack.c.b16 %v4018, %v4016
        %v4457 = vpack.c.b16 %v4019, %v4017
        %v4458 = vpack.c.b16 %v4022, %v4020
        %v4459 = vpack.c.b16 %v4023, %v4021
        %v4460 = vpack.c.b16 %v4026, %v4024
        %v4461 = vpack.c.b16 %v4027, %v4025
        %v4462 = vpack.c.b16 %v4030, %v4028
        %v4463 = vpack.c.b16 %v4031, %v4029
        %v4464 = vpack.c.b16 %v4034, %v4032
        %v4465 = vpack.c.b16 %v4035, %v4033
        %v4466 = vpack.c.b16 %v4038, %v4036
        %v4467 = vpack.c.b16 %v4039, %v4037
        %v4468 = vpack.c.b16 %v4042, %v4040
        %v4469 = vpack.c.b16 %v4043, %v4041
        %v4470 = vpack.c.b16 %v4046, %v4044
        %v4471 = vpack.c.b16 %v4047, %v4045
        %v4472 = vpack.c.b16 %v4050, %v4048
        %v4473 = vpack.c.b16 %v4051, %v4049
        %v4474 = vpack.c.b16 %v4054, %v4052
        %v4475 = vpack.c.b16 %v4055, %v4053
        %v4476 = vpack.c.b16 %v4058, %v4056
        %v4477 = vpack.c.b16 %v4059, %v4057
        %v4478 = vpack.c.b16 %v4062, %v4060
        %v4479 = vpack.c.b16 %v4063, %v4061
        %v4480 = vpack.c.b16 %v4066, %v4064
        %v4481 = vpack.c.b16 %v4067, %v4065
        %v4482 = vpack.c.b16 %v4070, %v4068
        %v4483 = vpack.c.b16 %v4071, %v4069
        %v4484 = vpack.c.b16 %v4074, %v4072
        %v4485 = vpack.c.b16 %v4075, %v4073
        %v4486 = vpack.c.b16 %v4078, %v4076
        %v4487 = vpack.c.b16 %v4079, %v4077
        %v4488 = vpack.c.b16 %v4082, %v4080
        %v4489 = vpack.c.b16 %v4083, %v4081
        %v4490 = vpack.c.b16 %v4086, %v4084
        %v4491 = vpack.c.b16 %v4087, %v4085
        %v4492 = vpack.c.b16 %v4090, %v4088
        %v4493 = vpack.c.b16 %v4091, %v4089
        %v4494 = vpack.c.b16 %v4094, %v4092
        %v4495 = vpack.c.b16 %v4095, %v4093
        %v4496 = vpack.c.b16 %v4098, %v4096
        %v4497 = vpack.c.b16 %v4099, %v4097
        %v4498 = vpack.c.b16 %v4102, %v4100
        %v4499 = vpack.c.b16 %v4103, %v4101
        %v4500 = vpack.c.b16 %v4106, %v4104
        %v4501 = vpack.c.b16 %v4107, %v4105
        %v4502 = vpack.c.b16 %v4110, %v4108
        %v4503 = vpack.c.b16 %v4111, %v4109
        %v4504 = vpack.c.b16 %v4114, %v4112
        %v4505 = vpack.c.b16 %v4115, %v4113
        %v4506 = vpack.c.b16 %v4118, %v4116
        %v4507 = vpack.c.b16 %v4119, %v4117
        %v4508 = vpack.c.b16 %v4122, %v4120
        %v4509 = vpack.c.b16 %v4123, %v4121
        %v4510 = vpack.c.b16 %v4126, %v4124
        %v4511 = vpack.c.b16 %v4127, %v4125
        %v4512 = vpack.c.b16 %v4130, %v4128
        %v4513 = vpack.c.b16 %v4131, %v4129
        %v4514 = vpack.c.b16 %v4134, %v4132
        %v4515 = vpack.c.b16 %v4135, %v4133
        %v4516 = vpack.c.b16 %v4138, %v4136
        %v4517 = vpack.c.b16 %v4139, %v4137
        %v4518 = vpack.c.b16 %v4142, %v4140
        %v4519 = vpack.c.b16 %v4143, %v4141
        %v4520 = vpack.c.b16 %v4146, %v4144
        %v4521 = vpack.c.b16 %v4147, %v4145
        %v4522 = vpack.c.b16 %v4150, %v4148
        %v4523 = vpack.c.b16 %v4151, %v4149
        %v4524 = vpack.c.b16 %v4154, %v4152
        %v4525 = vpack.c.b16 %v4155, %v4153
        %v4526 = vpack.c.b16 %v4158, %v4156
        %v4527 = vpack.c.b16 %v4159, %v4157
        %v4528 = vpack.c.b16 %v4162, %v4160
        %v4529 = vpack.c.b16 %v4163, %v4161
        %v4530 = vpack.c.b16 %v4166, %v4164
        %v4531 = vpack.c.b16 %v4167, %v4165
        %v4532 = vpack.c.b16 %v4170, %v4168
        %v4533 = vpack.c.b16 %v4171, %v4169
        %v4534 = vpack.c.b16 %v4174, %v4172
        %v4535 = vpack.c.b16 %v4175, %v4173
        %v4536 = vpack.c.b16 %v4178, %v4176
        %v4537 = vpack.c.b16 %v4179, %v4177
        %v4538 = vpack.c.b16 %v4182, %v4180
        %v4539 = vpack.c.b16 %v4183, %v4181
        %v4540 = vpack.c.b16 %v4186, %v4184
        %v4541 = vpack.c.b16 %v4187, %v4185
        %v4542 = vpack.c.b16 %v4190, %v4188
        %v4543 = vpack.c.b16 %v4191, %v4189
        %v4544 = vpack.c.b16 %v4194, %v4192
        %v4545 = vpack.c.b16 %v4195, %v4193
        %v4546 = vpack.c.b16 %v4198, %v4196
        %v4547 = vpack.c.b16 %v4199, %v4197
        %v4548 = vpack.c.b16 %v4202, %v4200
        %v4549 = vpack.c.b16 %v4203, %v4201
        %v4550 = vpack.c.b16 %v4206, %v4204
        %v4551 = vpack.c.b16 %v4207, %v4205
        %v4552 = vpack.c.b16 %v4210, %v4208
        %v4553 = vpack.c.b16 %v4211, %v4209
        %v4554 = vpack.c.b16 %v4214, %v4212
        %v4555 = vpack.c.b16 %v4215, %v4213
        %v4556 = vpack.c.b16 %v4218, %v4216
        %v4557 = vpack.c.b16 %v4219, %v4217
        %v4558 = vpack.c.b16 %v4222, %v4220
        %v4559 = vpack.c.b16 %v4223, %v4221
        %v4560 = vpack.c.b16 %v4226, %v4224
        %v4561 = vpack.c.b16 %v4227, %v4225
        %v4562 = vpack.c.b16 %v4230, %v4228
        %v4563 = vpack.c.b16 %v4231, %v4229
        %v4564 = vpack.c.b16 %v4234, %v4232
        %v4565 = vpack.c.b16 %v4235, %v4233
        %v4566 = vpack.c.b16 %v4238, %v4236
        %v4567 = vpack.c.b16 %v4239, %v4237
        %v4568 = vpack.c.b16 %v4242, %v4240
        %v4569 = vpack.c.b16 %v4243, %v4241
        %v4570 = vpack.c.b16 %v4246, %v4244
        %v4571 = vpack.c.b16 %v4247, %v4245
        %v4572 = vpack.c.b16 %v4250, %v4248
        %v4573 = vpack.c.b16 %v4251, %v4249
        %v4574 = vpack.c.b16 %v4254, %v4252
        %v4575 = vpack.c.b16 %v4255, %v4253
        %v4576 = vpack.c.b16 %v4258, %v4256
        %v4577 = vpack.c.b16 %v4259, %v4257
        %v4578 = vpack.c.b16 %v4262, %v4260
        %v4579 = vpack.c.b16 %v4263, %v4261
        %v4580 = vpack.c.b16 %v4266, %v4264
        %v4581 = vpack.c.b16 %v4267, %v4265
        %v4582 = vpack.c.b16 %v4270, %v4268
        %v4583 = vpack.c.b16 %v4271, %v4269
        %v4584 = vpack.c.b16 %v4274, %v4272
        %v4585 = vpack.c.b16 %v4275, %v4273
        %v4586 = vpack.c.b16 %v4278, %v4276
        %v4587 = vpack.c.b16 %v4279, %v4277
        %v4588 = vpack.c.b16 %v4282, %v4280
        %v4589 = vpack.c.b16 %v4283, %v4281
        %v4590 = vpack.c.b16 %v4286, %v4284
        %v4591 = vpack.c.b16 %v4287, %v4285
        %v4592 = vpack.c.b16 %v4290, %v4288
        %v4593 = vpack.c.b16 %v4291, %v4289
        %v4594 = vpack.c.b16 %v4294, %v4292
        %v4595 = vpack.c.b16 %v4295, %v4293
        %v4596 = vpack.c.b16 %v4298, %v4296
        %v4597 = vpack.c.b16 %v4299, %v4297
        %v4598 = vpack.c.b16 %v4302, %v4300
        %v4599 = vpack.c.b16 %v4303, %v4301
        %v4600 = vpack.c.b16 %v4306, %v4304
        %v4601 = vpack.c.b16 %v4307, %v4305
        %v4602 = vpack.c.b16 %v4310, %v4308
        %v4603 = vpack.c.b16 %v4311, %v4309
        %v4604 = vpack.c.b16 %v4314, %v4312
        %v4605 = vpack.c.b16 %v4315, %v4313
        %v4606 = vpack.c.b16 %v4318, %v4316
        %v4607 = vpack.c.b16 %v4319, %v4317
        %4896 = vmatpush.bf16.msra.mxu0 %v4334
        %4897 = vmatpush.bf16.msra.mxu0 %v4332
        %4898 = vmatpush.bf16.msra.mxu0 %v4330
        %4899 = vmatpush.bf16.msra.mxu0 %v4328
        %4900 = vmatpush.bf16.msra.mxu0 %v4326
        %4901 = vmatpush.bf16.msra.mxu0 %v4324
        %4902 = vmatpush.bf16.msra.mxu0 %v4322
        %4903 = vmatpush.bf16.msra.mxu0 %v4320
        %4904 = vmatmul.bf16.gmra.mxu0 %v3150
        %v4905 = vpop.f32.mrf.mxu0
        %v4906 = vadd.f32 0.0, %v4905
        %v4907 = vpop.f32.mrf.mxu0
        %v4908 = vadd.f32 0.0, %v4907
        %4909 = vdwg.mxu0
        %4910 = vmatpush.bf16.msra.mxu0 %v4350
        %4911 = vmatpush.bf16.msra.mxu0 %v4348
        %4912 = vmatpush.bf16.msra.mxu0 %v4346
        %4913 = vmatpush.bf16.msra.mxu0 %v4344
        %4914 = vmatpush.bf16.msra.mxu0 %v4342
        %4915 = vmatpush.bf16.msra.mxu0 %v4340
        %4916 = vmatpush.bf16.msra.mxu0 %v4338
        %4917 = vmatpush.bf16.msra.mxu0 %v4336
        %4918 = vmatmul.bf16.gmra.mxu0 %v3151
        %v4919 = vpop.f32.mrf.mxu0
        %v4920 = vadd.f32 %v4906, %v4919
        %v4921 = vpop.f32.mrf.mxu0
        %v4922 = vadd.f32 %v4908, %v4921
        %4923 = vdwg.mxu0
        %4924 = vmatpush.bf16.msra.mxu0 %v4366
        %4925 = vmatpush.bf16.msra.mxu0 %v4364
        %4926 = vmatpush.bf16.msra.mxu0 %v4362
        %4927 = vmatpush.bf16.msra.mxu0 %v4360
        %4928 = vmatpush.bf16.msra.mxu0 %v4358
        %4929 = vmatpush.bf16.msra.mxu0 %v4356
        %4930 = vmatpush.bf16.msra.mxu0 %v4354
        %4931 = vmatpush.bf16.msra.mxu0 %v4352
        %4932 = vmatmul.bf16.gmra.mxu0 %v3152
        %v4933 = vpop.f32.mrf.mxu0
        %v4934 = vadd.f32 %v4920, %v4933
        %v4935 = vpop.f32.mrf.mxu0
        %v4936 = vadd.f32 %v4922, %v4935
        %4937 = vdwg.mxu0
        %4938 = vmatpush.bf16.msra.mxu0 %v4382
        %4939 = vmatpush.bf16.msra.mxu0 %v4380
        %4940 = vmatpush.bf16.msra.mxu0 %v4378
        %4941 = vmatpush.bf16.msra.mxu0 %v4376
        %4942 = vmatpush.bf16.msra.mxu0 %v4374
        %4943 = vmatpush.bf16.msra.mxu0 %v4372
        %4944 = vmatpush.bf16.msra.mxu0 %v4370
        %4945 = vmatpush.bf16.msra.mxu0 %v4368
        %4946 = vmatmul.bf16.gmra.mxu0 %v3153
        %v4947 = vpop.f32.mrf.mxu0
        %v4948 = vadd.f32 %v4934, %v4947
        %v4949 = vpop.f32.mrf.mxu0
        %v4950 = vadd.f32 %v4936, %v4949
        %4951 = vdwg.mxu0
        %4952 = vmatpush.bf16.msra.mxu0 %v4398
        %4953 = vmatpush.bf16.msra.mxu0 %v4396
        %4954 = vmatpush.bf16.msra.mxu0 %v4394
        %4955 = vmatpush.bf16.msra.mxu0 %v4392
        %4956 = vmatpush.bf16.msra.mxu0 %v4390
        %4957 = vmatpush.bf16.msra.mxu0 %v4388
        %4958 = vmatpush.bf16.msra.mxu0 %v4386
        %4959 = vmatpush.bf16.msra.mxu0 %v4384
        %4960 = vmatmul.bf16.gmra.mxu0 %v3154
        %v4961 = vpop.f32.mrf.mxu0
        %v4962 = vadd.f32 %v4948, %v4961
        %v4963 = vpop.f32.mrf.mxu0
        %v4964 = vadd.f32 %v4950, %v4963
        %4965 = vdwg.mxu0
        %4966 = vmatpush.bf16.msra.mxu0 %v4414
        %4967 = vmatpush.bf16.msra.mxu0 %v4412
        %4968 = vmatpush.bf16.msra.mxu0 %v4410
        %4969 = vmatpush.bf16.msra.mxu0 %v4408
        %4970 = vmatpush.bf16.msra.mxu0 %v4406
        %4971 = vmatpush.bf16.msra.mxu0 %v4404
        %4972 = vmatpush.bf16.msra.mxu0 %v4402
        %4973 = vmatpush.bf16.msra.mxu0 %v4400
        %4974 = vmatmul.bf16.gmra.mxu0 %v3155
        %v4975 = vpop.f32.mrf.mxu0
        %v4976 = vadd.f32 %v4962, %v4975
        %v4977 = vpop.f32.mrf.mxu0
        %v4978 = vadd.f32 %v4964, %v4977
        %4979 = vdwg.mxu0
        %4980 = vmatpush.bf16.msra.mxu0 %v4430
        %4981 = vmatpush.bf16.msra.mxu0 %v4428
        %4982 = vmatpush.bf16.msra.mxu0 %v4426
        %4983 = vmatpush.bf16.msra.mxu0 %v4424
        %4984 = vmatpush.bf16.msra.mxu0 %v4422
        %4985 = vmatpush.bf16.msra.mxu0 %v4420
        %4986 = vmatpush.bf16.msra.mxu0 %v4418
        %4987 = vmatpush.bf16.msra.mxu0 %v4416
        %4988 = vmatmul.bf16.gmra.mxu0 %v3156
        %v4989 = vpop.f32.mrf.mxu0
        %v4990 = vadd.f32 %v4976, %v4989
        %v4991 = vpop.f32.mrf.mxu0
        %v4992 = vadd.f32 %v4978, %v4991
        %4993 = vdwg.mxu0
        %4994 = vmatpush.bf16.msra.mxu0 %v4446
        %4995 = vmatpush.bf16.msra.mxu0 %v4444
        %4996 = vmatpush.bf16.msra.mxu0 %v4442
        %4997 = vmatpush.bf16.msra.mxu0 %v4440
        %4998 = vmatpush.bf16.msra.mxu0 %v4438
        %4999 = vmatpush.bf16.msra.mxu0 %v4436
        %5000 = vmatpush.bf16.msra.mxu0 %v4434
        %5001 = vmatpush.bf16.msra.mxu0 %v4432
        %5002 = vmatmul.bf16.gmra.mxu0 %v3157
        %v5003 = vpop.f32.mrf.mxu0
        %v5004 = vadd.f32 %v4990, %v5003
        %v5005 = vpop.f32.mrf.mxu0
        %v5006 = vadd.f32 %v4992, %v5005
        %5007 = vdwg.mxu0
        %5008 = vmatpush.bf16.msra.mxu0 %v4462
        %5009 = vmatpush.bf16.msra.mxu0 %v4460
        %5010 = vmatpush.bf16.msra.mxu0 %v4458
        %5011 = vmatpush.bf16.msra.mxu0 %v4456
        %5012 = vmatpush.bf16.msra.mxu0 %v4454
        %5013 = vmatpush.bf16.msra.mxu0 %v4452
        %5014 = vmatpush.bf16.msra.mxu0 %v4450
        %5015 = vmatpush.bf16.msra.mxu0 %v4448
        %5016 = vmatmul.bf16.gmra.mxu0 %v3158
        %v5017 = vpop.f32.mrf.mxu0
        %v5018 = vadd.f32 %v5004, %v5017
        %v5019 = vpop.f32.mrf.mxu0
        %v5020 = vadd.f32 %v5006, %v5019
        %5021 = vdwg.mxu0
        %5022 = vmatpush.bf16.msra.mxu0 %v4478
        %5023 = vmatpush.bf16.msra.mxu0 %v4476
        %5024 = vmatpush.bf16.msra.mxu0 %v4474
        %5025 = vmatpush.bf16.msra.mxu0 %v4472
        %5026 = vmatpush.bf16.msra.mxu0 %v4470
        %5027 = vmatpush.bf16.msra.mxu0 %v4468
        %5028 = vmatpush.bf16.msra.mxu0 %v4466
        %5029 = vmatpush.bf16.msra.mxu0 %v4464
        %5030 = vmatmul.bf16.gmra.mxu0 %v3159
        %v5031 = vpop.f32.mrf.mxu0
        %v5032 = vadd.f32 %v5018, %v5031
        %v5033 = vpop.f32.mrf.mxu0
        %v5034 = vadd.f32 %v5020, %v5033
        %5035 = vdwg.mxu0
        %5036 = vmatpush.bf16.msra.mxu0 %v4494
        %5037 = vmatpush.bf16.msra.mxu0 %v4492
        %5038 = vmatpush.bf16.msra.mxu0 %v4490
        %5039 = vmatpush.bf16.msra.mxu0 %v4488
        %5040 = vmatpush.bf16.msra.mxu0 %v4486
        %5041 = vmatpush.bf16.msra.mxu0 %v4484
        %5042 = vmatpush.bf16.msra.mxu0 %v4482
        %5043 = vmatpush.bf16.msra.mxu0 %v4480
        %5044 = vmatmul.bf16.gmra.mxu0 %v3160
        %v5045 = vpop.f32.mrf.mxu0
        %v5046 = vadd.f32 %v5032, %v5045
        %v5047 = vpop.f32.mrf.mxu0
        %v5048 = vadd.f32 %v5034, %v5047
        %5049 = vdwg.mxu0
        %5050 = vmatpush.bf16.msra.mxu0 %v4510
        %5051 = vmatpush.bf16.msra.mxu0 %v4508
        %5052 = vmatpush.bf16.msra.mxu0 %v4506
        %5053 = vmatpush.bf16.msra.mxu0 %v4504
        %5054 = vmatpush.bf16.msra.mxu0 %v4502
        %5055 = vmatpush.bf16.msra.mxu0 %v4500
        %5056 = vmatpush.bf16.msra.mxu0 %v4498
        %5057 = vmatpush.bf16.msra.mxu0 %v4496
        %5058 = vmatmul.bf16.gmra.mxu0 %v3161
        %v5059 = vpop.f32.mrf.mxu0
        %v5060 = vadd.f32 %v5046, %v5059
        %v5061 = vpop.f32.mrf.mxu0
        %v5062 = vadd.f32 %v5048, %v5061
        %5063 = vdwg.mxu0
        %5064 = vmatpush.bf16.msra.mxu0 %v4526
        %5065 = vmatpush.bf16.msra.mxu0 %v4524
        %5066 = vmatpush.bf16.msra.mxu0 %v4522
        %5067 = vmatpush.bf16.msra.mxu0 %v4520
        %5068 = vmatpush.bf16.msra.mxu0 %v4518
        %5069 = vmatpush.bf16.msra.mxu0 %v4516
        %5070 = vmatpush.bf16.msra.mxu0 %v4514
        %5071 = vmatpush.bf16.msra.mxu0 %v4512
        %5072 = vmatmul.bf16.gmra.mxu0 %v3162
        %v5073 = vpop.f32.mrf.mxu0
        %v5074 = vadd.f32 %v5060, %v5073
        %v5075 = vpop.f32.mrf.mxu0
        %v5076 = vadd.f32 %v5062, %v5075
        %5077 = vdwg.mxu0
        %5078 = vmatpush.bf16.msra.mxu0 %v4542
        %5079 = vmatpush.bf16.msra.mxu0 %v4540
        %5080 = vmatpush.bf16.msra.mxu0 %v4538
        %5081 = vmatpush.bf16.msra.mxu0 %v4536
        %5082 = vmatpush.bf16.msra.mxu0 %v4534
        %5083 = vmatpush.bf16.msra.mxu0 %v4532
        %5084 = vmatpush.bf16.msra.mxu0 %v4530
        %5085 = vmatpush.bf16.msra.mxu0 %v4528
        %5086 = vmatmul.bf16.gmra.mxu0 %v3163
        %v5087 = vpop.f32.mrf.mxu0
        %v5088 = vadd.f32 %v5074, %v5087
        %v5089 = vpop.f32.mrf.mxu0
        %v5090 = vadd.f32 %v5076, %v5089
        %5091 = vdwg.mxu0
        %5092 = vmatpush.bf16.msra.mxu0 %v4558
        %5093 = vmatpush.bf16.msra.mxu0 %v4556
        %5094 = vmatpush.bf16.msra.mxu0 %v4554
        %5095 = vmatpush.bf16.msra.mxu0 %v4552
        %5096 = vmatpush.bf16.msra.mxu0 %v4550
        %5097 = vmatpush.bf16.msra.mxu0 %v4548
        %5098 = vmatpush.bf16.msra.mxu0 %v4546
        %5099 = vmatpush.bf16.msra.mxu0 %v4544
        %5100 = vmatmul.bf16.gmra.mxu0 %v3164
        %v5101 = vpop.f32.mrf.mxu0
        %v5102 = vadd.f32 %v5088, %v5101
        %v5103 = vpop.f32.mrf.mxu0
        %v5104 = vadd.f32 %v5090, %v5103
        %5105 = vdwg.mxu0
        %5106 = vmatpush.bf16.msra.mxu0 %v4574
        %5107 = vmatpush.bf16.msra.mxu0 %v4572
        %5108 = vmatpush.bf16.msra.mxu0 %v4570
        %5109 = vmatpush.bf16.msra.mxu0 %v4568
        %5110 = vmatpush.bf16.msra.mxu0 %v4566
        %5111 = vmatpush.bf16.msra.mxu0 %v4564
        %5112 = vmatpush.bf16.msra.mxu0 %v4562
        %5113 = vmatpush.bf16.msra.mxu0 %v4560
        %5114 = vmatmul.bf16.gmra.mxu0 %v3165
        %v5115 = vpop.f32.mrf.mxu0
        %v5116 = vadd.f32 %v5102, %v5115
        %v5117 = vpop.f32.mrf.mxu0
        %v5118 = vadd.f32 %v5104, %v5117
        %5119 = vdwg.mxu0
        %5120 = vmatpush.bf16.msra.mxu0 %v4590
        %5121 = vmatpush.bf16.msra.mxu0 %v4588
        %5122 = vmatpush.bf16.msra.mxu0 %v4586
        %5123 = vmatpush.bf16.msra.mxu0 %v4584
        %5124 = vmatpush.bf16.msra.mxu0 %v4582
        %5125 = vmatpush.bf16.msra.mxu0 %v4580
        %5126 = vmatpush.bf16.msra.mxu0 %v4578
        %5127 = vmatpush.bf16.msra.mxu0 %v4576
        %5128 = vmatmul.bf16.gmra.mxu0 %v3166
        %v5129 = vpop.f32.mrf.mxu0
        %v5130 = vadd.f32 %v5116, %v5129
        %v5131 = vpop.f32.mrf.mxu0
        %v5132 = vadd.f32 %v5118, %v5131
        %5133 = vdwg.mxu0
        %5134 = vmatpush.bf16.msra.mxu0 %v4606
        %5135 = vmatpush.bf16.msra.mxu0 %v4604
        %5136 = vmatpush.bf16.msra.mxu0 %v4602
        %5137 = vmatpush.bf16.msra.mxu0 %v4600
        %5138 = vmatpush.bf16.msra.mxu0 %v4598
        %5139 = vmatpush.bf16.msra.mxu0 %v4596
        %5140 = vmatpush.bf16.msra.mxu0 %v4594
        %5141 = vmatpush.bf16.msra.mxu0 %v4592
        %5142 = vmatmul.bf16.gmra.mxu0 %v3167
        %v5143 = vpop.f32.mrf.mxu0
        %v5144 = vadd.f32 %v5130, %v5143
        %v5145 = vpop.f32.mrf.mxu0
        %v5146 = vadd.f32 %v5132, %v5145
        %5147 = vdwg.mxu0
        %5148 = vmatpush.bf16.msra.mxu0 %v4335
        %5149 = vmatpush.bf16.msra.mxu0 %v4333
        %5150 = vmatpush.bf16.msra.mxu0 %v4331
        %5151 = vmatpush.bf16.msra.mxu0 %v4329
        %5152 = vmatpush.bf16.msra.mxu0 %v4327
        %5153 = vmatpush.bf16.msra.mxu0 %v4325
        %5154 = vmatpush.bf16.msra.mxu0 %v4323
        %5155 = vmatpush.bf16.msra.mxu0 %v4321
        %5156 = vmatmul.bf16.gmra.mxu0 %v3150
        %v5157 = vpop.f32.mrf.mxu0
        %v5158 = vadd.f32 0.0, %v5157
        %v5159 = vpop.f32.mrf.mxu0
        %v5160 = vadd.f32 0.0, %v5159
        %5161 = vdwg.mxu0
        %5162 = vmatpush.bf16.msra.mxu0 %v4351
        %5163 = vmatpush.bf16.msra.mxu0 %v4349
        %5164 = vmatpush.bf16.msra.mxu0 %v4347
        %5165 = vmatpush.bf16.msra.mxu0 %v4345
        %5166 = vmatpush.bf16.msra.mxu0 %v4343
        %5167 = vmatpush.bf16.msra.mxu0 %v4341
        %5168 = vmatpush.bf16.msra.mxu0 %v4339
        %5169 = vmatpush.bf16.msra.mxu0 %v4337
        %5170 = vmatmul.bf16.gmra.mxu0 %v3151
        %v5171 = vpop.f32.mrf.mxu0
        %v5172 = vadd.f32 %v5158, %v5171
        %v5173 = vpop.f32.mrf.mxu0
        %v5174 = vadd.f32 %v5160, %v5173
        %5175 = vdwg.mxu0
        %5176 = vmatpush.bf16.msra.mxu0 %v4367
        %5177 = vmatpush.bf16.msra.mxu0 %v4365
        %5178 = vmatpush.bf16.msra.mxu0 %v4363
        %5179 = vmatpush.bf16.msra.mxu0 %v4361
        %5180 = vmatpush.bf16.msra.mxu0 %v4359
        %5181 = vmatpush.bf16.msra.mxu0 %v4357
        %5182 = vmatpush.bf16.msra.mxu0 %v4355
        %5183 = vmatpush.bf16.msra.mxu0 %v4353
        %5184 = vmatmul.bf16.gmra.mxu0 %v3152
        %v5185 = vpop.f32.mrf.mxu0
        %v5186 = vadd.f32 %v5172, %v5185
        %v5187 = vpop.f32.mrf.mxu0
        %v5188 = vadd.f32 %v5174, %v5187
        %5189 = vdwg.mxu0
        %5190 = vmatpush.bf16.msra.mxu0 %v4383
        %5191 = vmatpush.bf16.msra.mxu0 %v4381
        %5192 = vmatpush.bf16.msra.mxu0 %v4379
        %5193 = vmatpush.bf16.msra.mxu0 %v4377
        %5194 = vmatpush.bf16.msra.mxu0 %v4375
        %5195 = vmatpush.bf16.msra.mxu0 %v4373
        %5196 = vmatpush.bf16.msra.mxu0 %v4371
        %5197 = vmatpush.bf16.msra.mxu0 %v4369
        %5198 = vmatmul.bf16.gmra.mxu0 %v3153
        %v5199 = vpop.f32.mrf.mxu0
        %v5200 = vadd.f32 %v5186, %v5199
        %v5201 = vpop.f32.mrf.mxu0
        %v5202 = vadd.f32 %v5188, %v5201
        %5203 = vdwg.mxu0
        %5204 = vmatpush.bf16.msra.mxu0 %v4399
        %5205 = vmatpush.bf16.msra.mxu0 %v4397
        %5206 = vmatpush.bf16.msra.mxu0 %v4395
        %5207 = vmatpush.bf16.msra.mxu0 %v4393
        %5208 = vmatpush.bf16.msra.mxu0 %v4391
        %5209 = vmatpush.bf16.msra.mxu0 %v4389
        %5210 = vmatpush.bf16.msra.mxu0 %v4387
        %5211 = vmatpush.bf16.msra.mxu0 %v4385
        %5212 = vmatmul.bf16.gmra.mxu0 %v3154
        %v5213 = vpop.f32.mrf.mxu0
        %v5214 = vadd.f32 %v5200, %v5213
        %v5215 = vpop.f32.mrf.mxu0
        %v5216 = vadd.f32 %v5202, %v5215
        %5217 = vdwg.mxu0
        %5218 = vmatpush.bf16.msra.mxu0 %v4415
        %5219 = vmatpush.bf16.msra.mxu0 %v4413
        %5220 = vmatpush.bf16.msra.mxu0 %v4411
        %5221 = vmatpush.bf16.msra.mxu0 %v4409
        %5222 = vmatpush.bf16.msra.mxu0 %v4407
        %5223 = vmatpush.bf16.msra.mxu0 %v4405
        %5224 = vmatpush.bf16.msra.mxu0 %v4403
        %5225 = vmatpush.bf16.msra.mxu0 %v4401
        %5226 = vmatmul.bf16.gmra.mxu0 %v3155
        %v5227 = vpop.f32.mrf.mxu0
        %v5228 = vadd.f32 %v5214, %v5227
        %v5229 = vpop.f32.mrf.mxu0
        %v5230 = vadd.f32 %v5216, %v5229
        %5231 = vdwg.mxu0
        %5232 = vmatpush.bf16.msra.mxu0 %v4431
        %5233 = vmatpush.bf16.msra.mxu0 %v4429
        %5234 = vmatpush.bf16.msra.mxu0 %v4427
        %5235 = vmatpush.bf16.msra.mxu0 %v4425
        %5236 = vmatpush.bf16.msra.mxu0 %v4423
        %5237 = vmatpush.bf16.msra.mxu0 %v4421
        %5238 = vmatpush.bf16.msra.mxu0 %v4419
        %5239 = vmatpush.bf16.msra.mxu0 %v4417
        %5240 = vmatmul.bf16.gmra.mxu0 %v3156
        %v5241 = vpop.f32.mrf.mxu0
        %v5242 = vadd.f32 %v5228, %v5241
        %v5243 = vpop.f32.mrf.mxu0
        %v5244 = vadd.f32 %v5230, %v5243
        %5245 = vdwg.mxu0
        %5246 = vmatpush.bf16.msra.mxu0 %v4447
        %5247 = vmatpush.bf16.msra.mxu0 %v4445
        %5248 = vmatpush.bf16.msra.mxu0 %v4443
        %5249 = vmatpush.bf16.msra.mxu0 %v4441
        %5250 = vmatpush.bf16.msra.mxu0 %v4439
        %5251 = vmatpush.bf16.msra.mxu0 %v4437
        %5252 = vmatpush.bf16.msra.mxu0 %v4435
        %5253 = vmatpush.bf16.msra.mxu0 %v4433
        %5254 = vmatmul.bf16.gmra.mxu0 %v3157
        %v5255 = vpop.f32.mrf.mxu0
        %v5256 = vadd.f32 %v5242, %v5255
        %v5257 = vpop.f32.mrf.mxu0
        %v5258 = vadd.f32 %v5244, %v5257
        %5259 = vdwg.mxu0
        %5260 = vmatpush.bf16.msra.mxu0 %v4463
        %5261 = vmatpush.bf16.msra.mxu0 %v4461
        %5262 = vmatpush.bf16.msra.mxu0 %v4459
        %5263 = vmatpush.bf16.msra.mxu0 %v4457
        %5264 = vmatpush.bf16.msra.mxu0 %v4455
        %5265 = vmatpush.bf16.msra.mxu0 %v4453
        %5266 = vmatpush.bf16.msra.mxu0 %v4451
        %5267 = vmatpush.bf16.msra.mxu0 %v4449
        %5268 = vmatmul.bf16.gmra.mxu0 %v3158
        %v5269 = vpop.f32.mrf.mxu0
        %v5270 = vadd.f32 %v5256, %v5269
        %v5271 = vpop.f32.mrf.mxu0
        %v5272 = vadd.f32 %v5258, %v5271
        %5273 = vdwg.mxu0
        %5274 = vmatpush.bf16.msra.mxu0 %v4479
        %5275 = vmatpush.bf16.msra.mxu0 %v4477
        %5276 = vmatpush.bf16.msra.mxu0 %v4475
        %5277 = vmatpush.bf16.msra.mxu0 %v4473
        %5278 = vmatpush.bf16.msra.mxu0 %v4471
        %5279 = vmatpush.bf16.msra.mxu0 %v4469
        %5280 = vmatpush.bf16.msra.mxu0 %v4467
        %5281 = vmatpush.bf16.msra.mxu0 %v4465
        %5282 = vmatmul.bf16.gmra.mxu0 %v3159
        %v5283 = vpop.f32.mrf.mxu0
        %v5284 = vadd.f32 %v5270, %v5283
        %v5285 = vpop.f32.mrf.mxu0
        %v5286 = vadd.f32 %v5272, %v5285
        %5287 = vdwg.mxu0
        %5288 = vmatpush.bf16.msra.mxu0 %v4495
        %5289 = vmatpush.bf16.msra.mxu0 %v4493
        %5290 = vmatpush.bf16.msra.mxu0 %v4491
        %5291 = vmatpush.bf16.msra.mxu0 %v4489
        %5292 = vmatpush.bf16.msra.mxu0 %v4487
        %5293 = vmatpush.bf16.msra.mxu0 %v4485
        %5294 = vmatpush.bf16.msra.mxu0 %v4483
        %5295 = vmatpush.bf16.msra.mxu0 %v4481
        %5296 = vmatmul.bf16.gmra.mxu0 %v3160
        %v5297 = vpop.f32.mrf.mxu0
        %v5298 = vadd.f32 %v5284, %v5297
        %v5299 = vpop.f32.mrf.mxu0
        %v5300 = vadd.f32 %v5286, %v5299
        %5301 = vdwg.mxu0
        %5302 = vmatpush.bf16.msra.mxu0 %v4511
        %5303 = vmatpush.bf16.msra.mxu0 %v4509
        %5304 = vmatpush.bf16.msra.mxu0 %v4507
        %5305 = vmatpush.bf16.msra.mxu0 %v4505
        %5306 = vmatpush.bf16.msra.mxu0 %v4503
        %5307 = vmatpush.bf16.msra.mxu0 %v4501
        %5308 = vmatpush.bf16.msra.mxu0 %v4499
        %5309 = vmatpush.bf16.msra.mxu0 %v4497
        %5310 = vmatmul.bf16.gmra.mxu0 %v3161
        %v5311 = vpop.f32.mrf.mxu0
        %v5312 = vadd.f32 %v5298, %v5311
        %v5313 = vpop.f32.mrf.mxu0
        %v5314 = vadd.f32 %v5300, %v5313
        %5315 = vdwg.mxu0
        %5316 = vmatpush.bf16.msra.mxu0 %v4527
        %5317 = vmatpush.bf16.msra.mxu0 %v4525
        %5318 = vmatpush.bf16.msra.mxu0 %v4523
        %5319 = vmatpush.bf16.msra.mxu0 %v4521
        %5320 = vmatpush.bf16.msra.mxu0 %v4519
        %5321 = vmatpush.bf16.msra.mxu0 %v4517
        %5322 = vmatpush.bf16.msra.mxu0 %v4515
        %5323 = vmatpush.bf16.msra.mxu0 %v4513
        %5324 = vmatmul.bf16.gmra.mxu0 %v3162
        %v5325 = vpop.f32.mrf.mxu0
        %v5326 = vadd.f32 %v5312, %v5325
        %v5327 = vpop.f32.mrf.mxu0
        %v5328 = vadd.f32 %v5314, %v5327
        %5329 = vdwg.mxu0
        %5330 = vmatpush.bf16.msra.mxu0 %v4543
        %5331 = vmatpush.bf16.msra.mxu0 %v4541
        %5332 = vmatpush.bf16.msra.mxu0 %v4539
        %5333 = vmatpush.bf16.msra.mxu0 %v4537
        %5334 = vmatpush.bf16.msra.mxu0 %v4535
        %5335 = vmatpush.bf16.msra.mxu0 %v4533
        %5336 = vmatpush.bf16.msra.mxu0 %v4531
        %5337 = vmatpush.bf16.msra.mxu0 %v4529
        %5338 = vmatmul.bf16.gmra.mxu0 %v3163
        %v5339 = vpop.f32.mrf.mxu0
        %v5340 = vadd.f32 %v5326, %v5339
        %v5341 = vpop.f32.mrf.mxu0
        %v5342 = vadd.f32 %v5328, %v5341
        %5343 = vdwg.mxu0
        %5344 = vmatpush.bf16.msra.mxu0 %v4559
        %5345 = vmatpush.bf16.msra.mxu0 %v4557
        %5346 = vmatpush.bf16.msra.mxu0 %v4555
        %5347 = vmatpush.bf16.msra.mxu0 %v4553
        %5348 = vmatpush.bf16.msra.mxu0 %v4551
        %5349 = vmatpush.bf16.msra.mxu0 %v4549
        %5350 = vmatpush.bf16.msra.mxu0 %v4547
        %5351 = vmatpush.bf16.msra.mxu0 %v4545
        %5352 = vmatmul.bf16.gmra.mxu0 %v3164
        %v5353 = vpop.f32.mrf.mxu0
        %v5354 = vadd.f32 %v5340, %v5353
        %v5355 = vpop.f32.mrf.mxu0
        %v5356 = vadd.f32 %v5342, %v5355
        %5357 = vdwg.mxu0
        %5358 = vmatpush.bf16.msra.mxu0 %v4575
        %5359 = vmatpush.bf16.msra.mxu0 %v4573
        %5360 = vmatpush.bf16.msra.mxu0 %v4571
        %5361 = vmatpush.bf16.msra.mxu0 %v4569
        %5362 = vmatpush.bf16.msra.mxu0 %v4567
        %5363 = vmatpush.bf16.msra.mxu0 %v4565
        %5364 = vmatpush.bf16.msra.mxu0 %v4563
        %5365 = vmatpush.bf16.msra.mxu0 %v4561
        %5366 = vmatmul.bf16.gmra.mxu0 %v3165
        %v5367 = vpop.f32.mrf.mxu0
        %v5368 = vadd.f32 %v5354, %v5367
        %v5369 = vpop.f32.mrf.mxu0
        %v5370 = vadd.f32 %v5356, %v5369
        %5371 = vdwg.mxu0
        %5372 = vmatpush.bf16.msra.mxu0 %v4591
        %5373 = vmatpush.bf16.msra.mxu0 %v4589
        %5374 = vmatpush.bf16.msra.mxu0 %v4587
        %5375 = vmatpush.bf16.msra.mxu0 %v4585
        %5376 = vmatpush.bf16.msra.mxu0 %v4583
        %5377 = vmatpush.bf16.msra.mxu0 %v4581
        %5378 = vmatpush.bf16.msra.mxu0 %v4579
        %5379 = vmatpush.bf16.msra.mxu0 %v4577
        %5380 = vmatmul.bf16.gmra.mxu0 %v3166
        %v5381 = vpop.f32.mrf.mxu0
        %v5382 = vadd.f32 %v5368, %v5381
        %v5383 = vpop.f32.mrf.mxu0
        %v5384 = vadd.f32 %v5370, %v5383
        %5385 = vdwg.mxu0
        %5386 = vmatpush.bf16.msra.mxu0 %v4607
        %5387 = vmatpush.bf16.msra.mxu0 %v4605
        %5388 = vmatpush.bf16.msra.mxu0 %v4603
        %5389 = vmatpush.bf16.msra.mxu0 %v4601
        %5390 = vmatpush.bf16.msra.mxu0 %v4599
        %5391 = vmatpush.bf16.msra.mxu0 %v4597
        %5392 = vmatpush.bf16.msra.mxu0 %v4595
        %5393 = vmatpush.bf16.msra.mxu0 %v4593
        %5394 = vmatmul.bf16.gmra.mxu0 %v3167
        %v5395 = vpop.f32.mrf.mxu0
        %v5396 = vadd.f32 %v5382, %v5395
        %v5397 = vpop.f32.mrf.mxu0
        %v5398 = vadd.f32 %v5384, %v5397
        %5399 = vdwg.mxu0
        %v5400 = vmax.f32 %v5144, %v5396
        %v5401 = vmax.f32 %v5146, %v5398
        %v5403 = vrot.slane %v5400, 4
        %v5405 = vmax.f32 %v5400, %v5403
        %v5407 = vrot.slane %v5405, 1
        %v5409 = vmax.f32 %v5405, %v5407
        %v5411 = vrot.slane %v5401, 4
        %v5413 = vmax.f32 %v5401, %v5411
        %v5415 = vrot.slane %v5413, 1
        %v5417 = vmax.f32 %v5413, %v5415
        %v5419 = vrot.slane %v5409, 1
        %v5422 = vrot.slane %v5417, 6
        %v5424 = vrot.slane %v5417, 7
        %v5426 = vsel %vm2715, %v5409, %v5419
        %v5427 = vsel %vm2718, %v5426, %v5422
        %v5428 = vsel %vm2721, %v5427, %v5424
        %v5430 = vperm.slane %v3149, 0
        %v5432 = vadd.f32 %v5428, %v5430
        %vm5433 = vcmp.ge.f32.partialorder %v5432, 0.0
        %v5434 = vmul.f32 %v5432, 0.01
        %v5435 = vsel %vm5433, %v5432, %v5434
        %v5436 = vld [vmem:[%s6] sm:$0x1]
        %v5437 = vpack.c.bf16 %v5435, %v5435
        %v5438 = vld [vmem:[%s5] sm:$0xf]
        %v5439 = vld [vmem:[%s5 + $0x4] sm:$0xf]
        %v5440 = vld [vmem:[%s5 + $0x8] sm:$0xf]
        %v5441 = vld [vmem:[%s5 + $0xc] sm:$0xf]
        %v5442 = vld [vmem:[%s5 + $0x10] sm:$0xf]
        %v5443 = vld [vmem:[%s5 + $0x14] sm:$0xf]
        %v5444 = vld [vmem:[%s5 + $0x18] sm:$0xf]
        %v5445 = vld [vmem:[%s5 + $0x1c] sm:$0xf]
        %v5446 = vld [vmem:[%s5 + $0x20] sm:$0xf]
        %v5447 = vld [vmem:[%s5 + $0x24] sm:$0xf]
        %v5448 = vld [vmem:[%s5 + $0x28] sm:$0xf]
        %v5449 = vld [vmem:[%s5 + $0x2c] sm:$0xf]
        %v5450 = vld [vmem:[%s5 + $0x30] sm:$0xf]
        %v5451 = vld [vmem:[%s5 + $0x34] sm:$0xf]
        %v5452 = vld [vmem:[%s5 + $0x38] sm:$0xf]
        %v5453 = vld [vmem:[%s5 + $0x3c] sm:$0xf]
        %v5470 = vunpack.c.l.b16 %v5438
        %v5471 = vunpack.c.l.b16 %v5439
        %v5472 = vunpack.c.l.b16 %v5440
        %v5473 = vunpack.c.l.b16 %v5441
        %v5474 = vunpack.c.l.b16 %v5442
        %v5475 = vunpack.c.l.b16 %v5443
        %v5476 = vunpack.c.l.b16 %v5444
        %v5477 = vunpack.c.l.b16 %v5445
        %v5478 = vunpack.c.l.b16 %v5446
        %v5479 = vunpack.c.l.b16 %v5447
        %v5480 = vunpack.c.l.b16 %v5448
        %v5481 = vunpack.c.l.b16 %v5449
        %v5482 = vunpack.c.l.b16 %v5450
        %v5483 = vunpack.c.l.b16 %v5451
        %v5484 = vunpack.c.l.b16 %v5452
        %v5485 = vunpack.c.l.b16 %v5453
        %v5486 = vpack.c.b16 %v5471, %v5470
        %v5487 = vpack.c.b16 %v5473, %v5472
        %v5488 = vpack.c.b16 %v5475, %v5474
        %v5489 = vpack.c.b16 %v5477, %v5476
        %v5490 = vpack.c.b16 %v5479, %v5478
        %v5491 = vpack.c.b16 %v5481, %v5480
        %v5492 = vpack.c.b16 %v5483, %v5482
        %v5493 = vpack.c.b16 %v5485, %v5484
        %5502 = vmatpush.bf16.msra.mxu0 %v5493
        %5503 = vmatpush.bf16.msra.mxu0 %v5492
        %5504 = vmatpush.bf16.msra.mxu0 %v5491
        %5505 = vmatpush.bf16.msra.mxu0 %v5490
        %5506 = vmatpush.bf16.msra.mxu0 %v5489
        %5507 = vmatpush.bf16.msra.mxu0 %v5488
        %5508 = vmatpush.bf16.msra.mxu0 %v5487
        %5509 = vmatpush.bf16.msra.mxu0 %v5486
        %5510 = vmatmul.bf16.gmra.mxu0 %v5437
        %v5511 = vpop.f32.mrf.mxu0
        %v5512 = vadd.f32 0.0, %v5511
        %v5513 = vpop.f32.mrf.mxu0
        %5514 = vdwg.mxu0
        %v5515 = vadd.f32 %v5436, %v5512
        %s5516 = scalar_lea.vmem %s5, 64
        %v5517 = vld [vmem:[%s5516] sm:$0xf]
        %v5518 = vld [vmem:[%s5516 + $0x4] sm:$0xf]
        %v5519 = vld [vmem:[%s5516 + $0x8] sm:$0xf]
        %v5520 = vld [vmem:[%s5516 + $0xc] sm:$0xf]
        %v5521 = vld [vmem:[%s5516 + $0x10] sm:$0xf]
        %v5522 = vld [vmem:[%s5516 + $0x14] sm:$0xf]
        %v5523 = vld [vmem:[%s5516 + $0x18] sm:$0xf]
        %v5524 = vld [vmem:[%s5516 + $0x1c] sm:$0xf]
        %v5525 = vld [vmem:[%s5516 + $0x20] sm:$0xf]
        %v5526 = vld [vmem:[%s5516 + $0x24] sm:$0xf]
        %v5527 = vld [vmem:[%s5516 + $0x28] sm:$0xf]
        %v5528 = vld [vmem:[%s5516 + $0x2c] sm:$0xf]
        %v5529 = vld [vmem:[%s5516 + $0x30] sm:$0xf]
        %v5530 = vld [vmem:[%s5516 + $0x34] sm:$0xf]
        %v5531 = vld [vmem:[%s5516 + $0x38] sm:$0xf]
        %v5532 = vld [vmem:[%s5516 + $0x3c] sm:$0xf]
        %v5534 = vshrl.u32 %v5437, 16
        %v5553 = vunpack.c.l.b16 %v5517
        %v5554 = vunpack.c.l.b16 %v5518
        %v5555 = vunpack.c.l.b16 %v5519
        %v5556 = vunpack.c.l.b16 %v5520
        %v5557 = vunpack.c.l.b16 %v5521
        %v5558 = vunpack.c.l.b16 %v5522
        %v5559 = vunpack.c.l.b16 %v5523
        %v5560 = vunpack.c.l.b16 %v5524
        %v5561 = vunpack.c.l.b16 %v5525
        %v5562 = vunpack.c.l.b16 %v5526
        %v5563 = vunpack.c.l.b16 %v5527
        %v5564 = vunpack.c.l.b16 %v5528
        %v5565 = vunpack.c.l.b16 %v5529
        %v5566 = vunpack.c.l.b16 %v5530
        %v5567 = vunpack.c.l.b16 %v5531
        %v5568 = vunpack.c.l.b16 %v5532
        %v5569 = vpack.c.b16 %v5554, %v5553
        %v5570 = vpack.c.b16 %v5556, %v5555
        %v5571 = vpack.c.b16 %v5558, %v5557
        %v5572 = vpack.c.b16 %v5560, %v5559
        %v5573 = vpack.c.b16 %v5562, %v5561
        %v5574 = vpack.c.b16 %v5564, %v5563
        %v5575 = vpack.c.b16 %v5566, %v5565
        %v5576 = vpack.c.b16 %v5568, %v5567
        %5585 = vmatpush.bf16.msra.mxu0 %v5576
        %5586 = vmatpush.bf16.msra.mxu0 %v5575
        %5587 = vmatpush.bf16.msra.mxu0 %v5574
        %5588 = vmatpush.bf16.msra.mxu0 %v5573
        %5589 = vmatpush.bf16.msra.mxu0 %v5572
        %5590 = vmatpush.bf16.msra.mxu0 %v5571
        %5591 = vmatpush.bf16.msra.mxu0 %v5570
        %5592 = vmatpush.bf16.msra.mxu0 %v5569
        %5593 = vmatmul.bf16.gmra.mxu0 %v5534
        %v5594 = vpop.f32.mrf.mxu0
        %v5595 = vadd.f32 0.0, %v5594
        %v5596 = vpop.f32.mrf.mxu0
        %5597 = vdwg.mxu0
        %v5598 = vadd.f32 %v5515, %v5595
        %s5599 = scalar_lea.vmem %s5, 128
        %v5600 = vld [vmem:[%s5599] sm:$0xf]
        %v5601 = vld [vmem:[%s5599 + $0x4] sm:$0xf]
        %v5602 = vld [vmem:[%s5599 + $0x8] sm:$0xf]
        %v5603 = vld [vmem:[%s5599 + $0xc] sm:$0xf]
        %v5604 = vld [vmem:[%s5599 + $0x10] sm:$0xf]
        %v5605 = vld [vmem:[%s5599 + $0x14] sm:$0xf]
        %v5606 = vld [vmem:[%s5599 + $0x18] sm:$0xf]
        %v5607 = vld [vmem:[%s5599 + $0x1c] sm:$0xf]
        %v5608 = vld [vmem:[%s5599 + $0x20] sm:$0xf]
        %v5609 = vld [vmem:[%s5599 + $0x24] sm:$0xf]
        %v5610 = vld [vmem:[%s5599 + $0x28] sm:$0xf]
        %v5611 = vld [vmem:[%s5599 + $0x2c] sm:$0xf]
        %v5612 = vld [vmem:[%s5599 + $0x30] sm:$0xf]
        %v5613 = vld [vmem:[%s5599 + $0x34] sm:$0xf]
        %v5614 = vld [vmem:[%s5599 + $0x38] sm:$0xf]
        %v5615 = vld [vmem:[%s5599 + $0x3c] sm:$0xf]
        %v5617 = vrot.slane %v5437, 1
        %v5635 = vunpack.c.l.b16 %v5600
        %v5636 = vunpack.c.l.b16 %v5601
        %v5637 = vunpack.c.l.b16 %v5602
        %v5638 = vunpack.c.l.b16 %v5603
        %v5639 = vunpack.c.l.b16 %v5604
        %v5640 = vunpack.c.l.b16 %v5605
        %v5641 = vunpack.c.l.b16 %v5606
        %v5642 = vunpack.c.l.b16 %v5607
        %v5643 = vunpack.c.l.b16 %v5608
        %v5644 = vunpack.c.l.b16 %v5609
        %v5645 = vunpack.c.l.b16 %v5610
        %v5646 = vunpack.c.l.b16 %v5611
        %v5647 = vunpack.c.l.b16 %v5612
        %v5648 = vunpack.c.l.b16 %v5613
        %v5649 = vunpack.c.l.b16 %v5614
        %v5650 = vunpack.c.l.b16 %v5615
        %v5651 = vpack.c.b16 %v5636, %v5635
        %v5652 = vpack.c.b16 %v5638, %v5637
        %v5653 = vpack.c.b16 %v5640, %v5639
        %v5654 = vpack.c.b16 %v5642, %v5641
        %v5655 = vpack.c.b16 %v5644, %v5643
        %v5656 = vpack.c.b16 %v5646, %v5645
        %v5657 = vpack.c.b16 %v5648, %v5647
        %v5658 = vpack.c.b16 %v5650, %v5649
        %5667 = vmatpush.bf16.msra.mxu0 %v5658
        %5668 = vmatpush.bf16.msra.mxu0 %v5657
        %5669 = vmatpush.bf16.msra.mxu0 %v5656
        %5670 = vmatpush.bf16.msra.mxu0 %v5655
        %5671 = vmatpush.bf16.msra.mxu0 %v5654
        %5672 = vmatpush.bf16.msra.mxu0 %v5653
        %5673 = vmatpush.bf16.msra.mxu0 %v5652
        %5674 = vmatpush.bf16.msra.mxu0 %v5651
        %5675 = vmatmul.bf16.gmra.mxu0 %v5617
        %v5676 = vpop.f32.mrf.mxu0
        %v5677 = vadd.f32 0.0, %v5676
        %v5678 = vpop.f32.mrf.mxu0
        %5679 = vdwg.mxu0
        %v5680 = vadd.f32 %v5598, %v5677
        %s5681 = scalar_lea.vmem %s5, 192
        %v5682 = vld [vmem:[%s5681] sm:$0xf]
        %v5683 = vld [vmem:[%s5681 + $0x4] sm:$0xf]
        %v5684 = vld [vmem:[%s5681 + $0x8] sm:$0xf]
        %v5685 = vld [vmem:[%s5681 + $0xc] sm:$0xf]
        %v5686 = vld [vmem:[%s5681 + $0x10] sm:$0xf]
        %v5687 = vld [vmem:[%s5681 + $0x14] sm:$0xf]
        %v5688 = vld [vmem:[%s5681 + $0x18] sm:$0xf]
        %v5689 = vld [vmem:[%s5681 + $0x1c] sm:$0xf]
        %v5690 = vld [vmem:[%s5681 + $0x20] sm:$0xf]
        %v5691 = vld [vmem:[%s5681 + $0x24] sm:$0xf]
        %v5692 = vld [vmem:[%s5681 + $0x28] sm:$0xf]
        %v5693 = vld [vmem:[%s5681 + $0x2c] sm:$0xf]
        %v5694 = vld [vmem:[%s5681 + $0x30] sm:$0xf]
        %v5695 = vld [vmem:[%s5681 + $0x34] sm:$0xf]
        %v5696 = vld [vmem:[%s5681 + $0x38] sm:$0xf]
        %v5697 = vld [vmem:[%s5681 + $0x3c] sm:$0xf]
        %v5698 = vrot.slane %v5534, 1
        %v5716 = vunpack.c.l.b16 %v5682
        %v5717 = vunpack.c.l.b16 %v5683
        %v5718 = vunpack.c.l.b16 %v5684
        %v5719 = vunpack.c.l.b16 %v5685
        %v5720 = vunpack.c.l.b16 %v5686
        %v5721 = vunpack.c.l.b16 %v5687
        %v5722 = vunpack.c.l.b16 %v5688
        %v5723 = vunpack.c.l.b16 %v5689
        %v5724 = vunpack.c.l.b16 %v5690
        %v5725 = vunpack.c.l.b16 %v5691
        %v5726 = vunpack.c.l.b16 %v5692
        %v5727 = vunpack.c.l.b16 %v5693
        %v5728 = vunpack.c.l.b16 %v5694
        %v5729 = vunpack.c.l.b16 %v5695
        %v5730 = vunpack.c.l.b16 %v5696
        %v5731 = vunpack.c.l.b16 %v5697
        %v5732 = vpack.c.b16 %v5717, %v5716
        %v5733 = vpack.c.b16 %v5719, %v5718
        %v5734 = vpack.c.b16 %v5721, %v5720
        %v5735 = vpack.c.b16 %v5723, %v5722
        %v5736 = vpack.c.b16 %v5725, %v5724
        %v5737 = vpack.c.b16 %v5727, %v5726
        %v5738 = vpack.c.b16 %v5729, %v5728
        %v5739 = vpack.c.b16 %v5731, %v5730
        %5748 = vmatpush.bf16.msra.mxu0 %v5739
        %5749 = vmatpush.bf16.msra.mxu0 %v5738
        %5750 = vmatpush.bf16.msra.mxu0 %v5737
        %5751 = vmatpush.bf16.msra.mxu0 %v5736
        %5752 = vmatpush.bf16.msra.mxu0 %v5735
        %5753 = vmatpush.bf16.msra.mxu0 %v5734
        %5754 = vmatpush.bf16.msra.mxu0 %v5733
        %5755 = vmatpush.bf16.msra.mxu0 %v5732
        %5756 = vmatmul.bf16.gmra.mxu0 %v5698
        %v5757 = vpop.f32.mrf.mxu0
        %v5758 = vadd.f32 0.0, %v5757
        %v5759 = vpop.f32.mrf.mxu0
        %5760 = vdwg.mxu0
        %v5761 = vadd.f32 %v5680, %v5758
        %vm5762 = vcmp.ge.f32.partialorder %v5761, 0.0
        %v5763 = vmul.f32 %v5761, 0.01
        %v5764 = vsel %vm5762, %v5761, %v5763
        %v5765 = vld [vmem:[%s7] sm:$0x1]
        %v5766 = vmul.f32 %v5764, %v5765
        %v5767 = vld [vmem:[%s8] sm:$0x1]
        %v5768 = vadd.f32 %v5766, %v5767
        %v5769 = vpack.c.bf16 %v5768, %v5768
        %v5770 = vld [vmem:[%s9] sm:$0xf]
        %v5771 = vld [vmem:[%s9 + $0x4] sm:$0xf]
        %v5772 = vld [vmem:[%s9 + $0x8] sm:$0xf]
        %v5773 = vld [vmem:[%s9 + $0xc] sm:$0xf]
        %v5774 = vld [vmem:[%s9 + $0x10] sm:$0xf]
        %v5775 = vld [vmem:[%s9 + $0x14] sm:$0xf]
        %v5776 = vld [vmem:[%s9 + $0x18] sm:$0xf]
        %v5777 = vld [vmem:[%s9 + $0x1c] sm:$0xf]
        %v5778 = vld [vmem:[%s9 + $0x20] sm:$0xf]
        %v5779 = vld [vmem:[%s9 + $0x24] sm:$0xf]
        %v5780 = vld [vmem:[%s9 + $0x28] sm:$0xf]
        %v5781 = vld [vmem:[%s9 + $0x2c] sm:$0xf]
        %v5782 = vld [vmem:[%s9 + $0x30] sm:$0xf]
        %v5783 = vld [vmem:[%s9 + $0x34] sm:$0xf]
        %v5784 = vld [vmem:[%s9 + $0x38] sm:$0xf]
        %v5785 = vld [vmem:[%s9 + $0x3c] sm:$0xf]
        %v5786 = vld [vmem:[%s10] sm:$0x1]
        %v5803 = vunpack.c.l.b16 %v5770
        %v5804 = vunpack.c.l.b16 %v5771
        %v5805 = vunpack.c.l.b16 %v5772
        %v5806 = vunpack.c.l.b16 %v5773
        %v5807 = vunpack.c.l.b16 %v5774
        %v5808 = vunpack.c.l.b16 %v5775
        %v5809 = vunpack.c.l.b16 %v5776
        %v5810 = vunpack.c.l.b16 %v5777
        %v5811 = vunpack.c.l.b16 %v5778
        %v5812 = vunpack.c.l.b16 %v5779
        %v5813 = vunpack.c.l.b16 %v5780
        %v5814 = vunpack.c.l.b16 %v5781
        %v5815 = vunpack.c.l.b16 %v5782
        %v5816 = vunpack.c.l.b16 %v5783
        %v5817 = vunpack.c.l.b16 %v5784
        %v5818 = vunpack.c.l.b16 %v5785
        %v5819 = vpack.c.b16 %v5804, %v5803
        %v5820 = vpack.c.b16 %v5806, %v5805
        %v5821 = vpack.c.b16 %v5808, %v5807
        %v5822 = vpack.c.b16 %v5810, %v5809
        %v5823 = vpack.c.b16 %v5812, %v5811
        %v5824 = vpack.c.b16 %v5814, %v5813
        %v5825 = vpack.c.b16 %v5816, %v5815
        %v5826 = vpack.c.b16 %v5818, %v5817
        %5835 = vmatpush.bf16.msra.mxu0 %v5826
        %5836 = vmatpush.bf16.msra.mxu0 %v5825
        %5837 = vmatpush.bf16.msra.mxu0 %v5824
        %5838 = vmatpush.bf16.msra.mxu0 %v5823
        %5839 = vmatpush.bf16.msra.mxu0 %v5822
        %5840 = vmatpush.bf16.msra.mxu0 %v5821
        %5841 = vmatpush.bf16.msra.mxu0 %v5820
        %5842 = vmatpush.bf16.msra.mxu0 %v5819
        %5843 = vmatmul.bf16.gmra.mxu0 %v5769
        %v5844 = vpop.f32.mrf.mxu0
        %v5845 = vadd.f32 %v5786, %v5844
        %v5846 = vpop.f32.mrf.mxu0
        %5847 = vdwg.mxu0
        %5848 = vst [vmem:[%s378] sm:$0x1] %v5845
        %s5849 = sand.u32 %s269, 1
        %s5850 = scalar_lea.sflag [#allocation3], %s5849
        %s5851 = sand.u32 %s269, 1
        %s5852 = scalar_lea.vmem [#allocation2], %s5851
        // Predicated region
        $region65: #{cnn_forward.1} parent=63 // pred_check
          %p5853 = pneg %p279
        $region66: #{cnn_forward.1} parent=63 // pred_check_branch
          %5855 = sbr.rel (%p5853) target = $region68
        $region67: #{cnn_forward.1} parent=63 // pred_region
          %5857 = vsyncadd %s5850, 0
          %s5858 = scalar_lea.hbm %s11, %s25
          %s5860 = sshll.u32 %s5852, 4
          %s5861 = int_to_ptr.vmem [resolvable:$true] %s5860
          %s5862 = sshll.u32 %s5858, 4
          %s5863 = int_to_ptr.hbm [resolvable:$true] %s5862
          %5865 = dma.vmem_to_hbm [thread:$0]  %s5861, 16, %s5863, %s5850
        $region68: #{cnn_forward.1} parent=63 // pred_fallthru
          _
      $region64: #{cnn_forward.1} parent=5 // pred_fallthru
        _
      %p5866 = scmp.le.s32.totalorder 2, %s20
      // Predicated region
      $region69: #{cnn_forward.1} parent=5 // pred_check
        %p5867 = pneg %p5866
      $region70: #{cnn_forward.1} parent=5 // pred_check_branch
        %5869 = sbr.rel (%p5867) target = $region72
      $region71: #{cnn_forward.1} parent=5 // pred_region
        %s5870 = ssub.s32 %s20, 2
        // Predicated region
        $region73: #{cnn_forward.1} parent=71 // pred_check
          %p5871 = pneg %p285
        $region74: #{cnn_forward.1} parent=71 // pred_check_branch
          %5873 = sbr.rel (%p5871) target = $region76
        $region75: #{cnn_forward.1} parent=71 // pred_region
          %s5874 = sand.u32 %s270, 1
          %s5875 = scalar_lea.sflag [#allocation3], %s5874
          %s5876 = sand.u32 %s270, 1
          %s5877 = scalar_lea.vmem [#allocation2], %s5876
          %5879 = dma.done %s5875, 16
        $region76: #{cnn_forward.1} parent=71 // pred_fallthru
          _
      $region72: #{cnn_forward.1} parent=5 // pred_fallthru
        _
    $region6: #{cnn_forward.1} parent=1 // loop_footer
      %s24 = sadd.s32 1, %s20
    $region7: #{cnn_forward.1} parent=1 // loop_footer_branch
      %19 = sbr.rel target = $region3
    $region8: #{cnn_forward.1} parent=1 // loop_exit
      _
    %5880 = vsyncpa [#allocation3], 1
    %s5881 = scalar_lea.sflag [#allocation3], 1
    %5882 = vsyncpa %s5881, 1

</llo_original>
